<compile_context>
chip_gen: v5e
topology: v5e:2x2
jax: 0.10.0
libtpu: 0.0.40
codegen_flags: <defaults>
</compile_context>

<pallas_src>
import numpy as np
import jax
import jax.numpy as jnp
from jax.experimental import pallas as pl
from jax.experimental.pallas import tpu as pltpu


# ---------------------------------------------------------------------------
# Fused forward kernel: one grid step == one block of B samples.
#   xh_ref : (2, 1, 12*B, 24) bf16   height-parity split of the 1-padded input
#                                    rows = i*B + b, xh[r, ., i*B+b, uw] = xpad[b, 2i+r, uw]
#   m1_ref : (5, 24, 320)  bf16      conv1 banded weights, lanes_out = wout*16 + co
#   m2_ref : (5, 304, 256) bf16      conv2 banded weights, lanes_in = w1idx*16 + cin
#   wfc_ref: (896, 128)    bf16      fc weights on the pooled/garbage-interleaved lanes
# ---------------------------------------------------------------------------
def _mycnn_kernel(xh_ref, m1_ref, b1_ref, m2_ref, b2_ref, wfc_ref, bfc_ref,
                  out_ref):
    f32 = jnp.float32
    bf16 = jnp.bfloat16
    B = out_ref.shape[0]

    # ---- conv1 (+ height half of maxpool1 via the parity split) ------------
    def conv1_parity(a):
        acc = jnp.zeros((10 * B, 320), f32)
        for dh in range(5):
            hh = a + dh                      # padded input row = 2*ph + hh
            r, q = hh % 2, hh // 2
            lhs = xh_ref[r, 0, q * B:(q + 10) * B, :]          # (10B, 24) bf16
            acc = acc + jnp.dot(lhs, m1_ref[dh],
                                preferred_element_type=f32)     # (10B, 320)
        return acc

    y1 = jnp.maximum(conv1_parity(0), conv1_parity(1))           # pool height
    y1 = jnp.maximum(y1 + b1_ref[...], 0.0)                      # bias + ReLU
    # width half of maxpool1: lanes are (wout*16 + c); max(wout, wout+1).
    # Valid pooled data sits at even-wout lane groups; odd groups are garbage
    # that the next layer's banded weights simply multiply by zero.
    a1 = jnp.maximum(y1[:, :304], y1[:, 16:])                    # (10B, 304)

    # conv2's height padding: zero rows above/below (rows ordered (hp, b)).
    zrow = jnp.zeros((B, 304), f32)
    a2in = jnp.concatenate([zrow, a1, zrow], axis=0)             # (12B, 304)

    # ---- conv2 + bias + ReLU: 5 accumulated banded GEMMs, K=304 -------------
    acc2 = jnp.zeros((8 * B, 256), f32)
    for dh in range(5):
        rows = a2in[dh * B:(dh + 8) * B, :].astype(bf16)         # (8B, 304)
        acc2 = acc2 + jnp.dot(rows, m2_ref[dh],
                              preferred_element_type=f32)
    y2 = jnp.maximum(acc2 + b2_ref[...], 0.0)                    # (8B, 256)

    # ---- maxpool2 (width via 32-lane shift, height via row-pair max) --------
    y2w = jnp.maximum(y2[:, :224], y2[:, 32:])                   # (8B, 224)
    slabs = []
    for p2h in range(4):
        top = y2w[(2 * p2h) * B:(2 * p2h + 1) * B, :]
        bot = y2w[(2 * p2h + 1) * B:(2 * p2h + 2) * B, :]
        slabs.append(jnp.maximum(top, bot))                      # (B, 224)

    # ---- fc: one K=896 GEMM on the lane-concatenated pooled slabs -----------
    feat = jnp.concatenate(slabs, axis=-1).astype(bf16)          # (B, 896)
    out_ref[...] = (jnp.dot(feat, wfc_ref[...],
                            preferred_element_type=f32) + bfc_ref[...])


# ---------------------------------------------------------------------------
# Host-side input prep: 1-pad, height-parity split, (i, b)-interleave so the
# kernel's slices are plain contiguous 2-D row windows.  No data inflation.
# ---------------------------------------------------------------------------
def _prep_input(x_nchw, n_pad, block_b):
    x = x_nchw[:, 0, :, :].astype(jnp.float32)                   # (N, 22, 22)
    n = x.shape[0]
    if n_pad > n:
        x = jnp.pad(x, ((0, n_pad - n), (0, 0), (0, 0)))
    xp = jnp.pad(x, ((0, 0), (1, 1), (1, 1)))                    # (Np, 24, 24)
    g = n_pad // block_b
    xh = xp.reshape(g, block_b, 12, 2, 24).transpose(3, 0, 2, 1, 4)
    xh = xh.reshape(2, g, 12 * block_b, 24)                      # rows = i*B + b
    return xh.astype(jnp.bfloat16)


def forward(x_nchw, params, *, block_b=8):
    n = x_nchw.shape[0]
    n_pad = max(block_b, ((n + block_b - 1) // block_b) * block_b)
    gsteps = n_pad // block_b
    xh = _prep_input(x_nchw, n_pad, block_b)

    macs = gsteps * (2 * 5 * (10 * block_b) * 24 * 320
                     + 5 * (8 * block_b) * 304 * 256
                     + block_b * 896 * 128)
    bytes_accessed = int(xh.size * 2 + n_pad * 128 * 4
                         + (params["m1"].size + params["m2"].size
                            + params["wfc"].size) * 2
                         + (params["b1"].size + params["b2"].size
                            + params["bfc"].size) * 4)

    out = pl.pallas_call(
        _mycnn_kernel,
        out_shape=jax.ShapeDtypeStruct((n_pad, 128), jnp.float32),
        grid=(gsteps,),
        in_specs=[
            pl.BlockSpec((2, 1, 12 * block_b, 24), lambda g: (0, g, 0, 0)),
            pl.BlockSpec((5, 24, 320), lambda g: (0, 0, 0)),     # m1
            pl.BlockSpec((1, 320), lambda g: (0, 0)),            # b1 (tiled)
            pl.BlockSpec((5, 304, 256), lambda g: (0, 0, 0)),    # m2
            pl.BlockSpec((1, 256), lambda g: (0, 0)),            # b2 (tiled)
            pl.BlockSpec((896, 128), lambda g: (0, 0)),          # wfc (padded)
            pl.BlockSpec((1, 128), lambda g: (0, 0)),            # bfc (padded)
        ],
        out_specs=pl.BlockSpec((block_b, 128), lambda g: (g, 0)),
        compiler_params=pltpu.CompilerParams(
            dimension_semantics=("parallel",)),
        cost_estimate=pl.CostEstimate(flops=2 * macs, transcendentals=0,
                                      bytes_accessed=bytes_accessed),
    )(xh, params["m1"], params["b1"], params["m2"], params["b2"],
      params["wfc"], params["bfc"])
    return out[:n, :10]


# ---------------------------------------------------------------------------
# Host-side parameter re-layout: PyTorch tensors -> banded (Toeplitz) GEMM
# weights that keep (width, channel) together on the lane dimension.
# ---------------------------------------------------------------------------
def make_params(w1_t, b1, w2_t, b2, wfc_t, bfc):
    w1 = np.asarray(w1_t, np.float32)        # (16, 1, 5, 5)   OIHW
    w2 = np.asarray(w2_t, np.float32)        # (32, 16, 5, 5)  OIHW
    wf = np.asarray(wfc_t, np.float32)       # (10, 512), idx = c*16 + ph*4 + pw

    # conv1: lanes_out = wout*16 + co, K lanes = padded input width uw (24)
    m1 = np.zeros((5, 24, 20 * 16), np.float32)
    for dh in range(5):
        for wout in range(20):
            for dw in range(5):
                m1[dh, wout + dw, wout * 16:(wout + 1) * 16] = w1[:, 0, dh, dw]

    # conv2: K lanes = w1idx*16 + cin (only even w1idx = pooled width is live),
    #        lanes_out = wout2*32 + cout.  Width padding handled by the band.
    m2 = np.zeros((5, 19 * 16, 8 * 32), np.float32)
    for dh in range(5):
        for wout2 in range(8):
            for dw in range(5):
                pw1 = wout2 + dw - 1
                if 0 <= pw1 <= 9:
                    m2[dh, 2 * pw1 * 16:2 * pw1 * 16 + 16,
                       wout2 * 32:(wout2 + 1) * 32] = w2[:, :, dh, dw].T

    # fc: feat lanes = p2h*224 + w2idx*32 + cout (even w2idx = pooled width);
    #     zero rows for the garbage (odd) lanes; out channels padded 10 -> 128.
    wfc = np.zeros((4 * 224, 128), np.float32)
    for p2h in range(4):
        for pw2 in range(4):
            for c in range(32):
                row = p2h * 224 + 2 * pw2 * 32 + c
                wfc[row, :10] = wf[:, c * 16 + p2h * 4 + pw2]

    bfc_p = np.zeros((1, 128), np.float32)
    bfc_p[0, :10] = np.asarray(bfc, np.float32)

    return dict(
        m1=jnp.asarray(m1, jnp.bfloat16),
        b1=jnp.asarray(np.tile(np.asarray(b1, np.float32), 20)[None, :]),
        m2=jnp.asarray(m2, jnp.bfloat16),
        b2=jnp.asarray(np.tile(np.asarray(b2, np.float32), 8)[None, :]),
        wfc=jnp.asarray(wfc, jnp.bfloat16),
        bfc=jnp.asarray(bfc_p),
    )


# ---------------------------------------------------------------------------
# Pure-JAX (XLA) reference with PyTorch-shaped weights, for validation.
# ---------------------------------------------------------------------------
def reference(x, w1_t, b1, w2_t, b2, wfc_t, bfc):
    def conv(v, w, b):
        y = jax.lax.conv_general_dilated(
            v, w, window_strides=(1, 1), padding=[(1, 1), (1, 1)],
            dimension_numbers=("NCHW", "OIHW", "NCHW"))
        return y + b.reshape(1, -1, 1, 1)

    def pool(v):
        return jax.lax.reduce_window(
            v, -jnp.inf, jax.lax.max, (1, 1, 2, 2), (1, 1, 2, 2), "VALID")

    y = pool(jnp.maximum(conv(x, w1_t, b1), 0.0))
    y = pool(jnp.maximum(conv(y, w2_t, b2), 0.0))
    y = y.reshape(y.shape[0], -1)
    return jnp.dot(y, wfc_t.T) + bfc


if __name__ == "__main__":
    key = jax.random.PRNGKey(0)
    kx, k1, k2, k3, k4, k5, k6 = jax.random.split(key, 7)

    # input: batch=16, 1 channel, 22x22 spatial (required so fc sees 32*4*4)
    N = 16
    x = jax.random.normal(kx, (N, 1, 22, 22), dtype=jnp.float32)

    # deterministic PyTorch-shaped parameters
    w1_t = jax.random.normal(k1, (16, 1, 5, 5), dtype=jnp.float32) * 0.1
    b1 = jax.random.normal(k2, (16,), dtype=jnp.float32) * 0.1
    w2_t = jax.random.normal(k3, (32, 16, 5, 5), dtype=jnp.float32) * 0.05
    b2 = jax.random.normal(k4, (32,), dtype=jnp.float32) * 0.1
    wfc_t = jax.random.normal(k5, (10, 32 * 4 * 4), dtype=jnp.float32) * 0.05
    bfc = jax.random.normal(k6, (10,), dtype=jnp.float32) * 0.1

    params = make_params(w1_t, b1, w2_t, b2, wfc_t, bfc)

    out = jax.jit(forward)(x, params)
    out = jax.block_until_ready(out)
    assert out.shape == (N, 10), out.shape

    ref = reference(x, w1_t, b1, w2_t, b2, wfc_t, bfc)
    err = float(jnp.max(jnp.abs(out - ref)))
    # tolerance reflects bf16 weights/activations + default-precision (bf16
    # pass) MXU matmuls in both the kernel and the reference.
    assert jnp.allclose(out, ref, atol=5e-2, rtol=5e-2), err

    print("KERNEL_OK")
</pallas_src>

<mosaic_0001>
module attributes {stable_mosaic.version = 11 : i64} {
  func.func @_mycnn_kernel(%arg0: i32, %arg1: memref<2x1x96x24xbf16, #tpu.memory_space<vmem>>, %arg2: memref<5x24x320xbf16, #tpu.memory_space<vmem>>, %arg3: memref<1x320xf32, #tpu.memory_space<vmem>>, %arg4: memref<5x304x256xbf16, #tpu.memory_space<vmem>>, %arg5: memref<1x256xf32, #tpu.memory_space<vmem>>, %arg6: memref<896x128xbf16, #tpu.memory_space<vmem>>, %arg7: memref<1x128xf32, #tpu.memory_space<vmem>>, %arg8: memref<8x128xf32, #tpu.memory_space<vmem>>) attributes {dimension_semantics = [#tpu.dimension_semantics<parallel>], iteration_bounds = array<i64: 2>, scalar_prefetch = 0 : i64, scratch_operands = 0 : i64, tpu.core_type = #tpu.core_type<tc>, window_params = [{transform_indices = @transform_0, window_bounds = array<i64: 2, 1, 96, 24>}, {pipeline_mode = #tpu.pipeline_mode<synchronous>, transform_indices = @transform_1, window_bounds = array<i64: 5, 24, 320>}, {pipeline_mode = #tpu.pipeline_mode<synchronous>, transform_indices = @transform_2, window_bounds = array<i64: 1, 320>}, {pipeline_mode = #tpu.pipeline_mode<synchronous>, transform_indices = @transform_3, window_bounds = array<i64: 5, 304, 256>}, {pipeline_mode = #tpu.pipeline_mode<synchronous>, transform_indices = @transform_4, window_bounds = array<i64: 1, 256>}, {pipeline_mode = #tpu.pipeline_mode<synchronous>, transform_indices = @transform_5, window_bounds = array<i64: 896, 128>}, {pipeline_mode = #tpu.pipeline_mode<synchronous>, transform_indices = @transform_6, window_bounds = array<i64: 1, 128>}, {transform_indices = @transform_7, window_bounds = array<i64: 8, 128>}]} {
    %cst = arith.constant 0.000000e+00 : f32
    %0 = vector.broadcast %cst : f32 to vector<80x320xf32>
    %c0 = arith.constant 0 : index
    %c0_0 = arith.constant 0 : index
    %c0_1 = arith.constant 0 : index
    %c0_2 = arith.constant 0 : index
    %1 = vector.load %arg1[%c0, %c0_0, %c0_1, %c0_2] : memref<2x1x96x24xbf16, #tpu.memory_space<vmem>>, vector<1x1x80x24xbf16>
    %2 = vector.shape_cast %1 : vector<1x1x80x24xbf16> to vector<80x24xbf16>
    %c0_3 = arith.constant 0 : index
    %c0_4 = arith.constant 0 : index
    %c0_5 = arith.constant 0 : index
    %3 = vector.load %arg2[%c0_3, %c0_4, %c0_5] : memref<5x24x320xbf16, #tpu.memory_space<vmem>>, vector<1x24x320xbf16>
    %4 = vector.shape_cast %3 : vector<1x24x320xbf16> to vector<24x320xbf16>
    %cst_6 = arith.constant dense<0.000000e+00> : vector<80x320xf32>
    %5 = tpu.matmul %2, %4, %cst_6 {dimension_numbers = #tpu.dot_dimension_numbers<[1], [0], [0], [1], [0, 0, 1, 1], [], []>} : vector<80x24xbf16>, vector<24x320xbf16>, vector<80x320xf32> -> vector<80x320xf32>
    %6 = arith.addf %0, %5 : vector<80x320xf32>
    %c1 = arith.constant 1 : index
    %c0_7 = arith.constant 0 : index
    %c0_8 = arith.constant 0 : index
    %c0_9 = arith.constant 0 : index
    %7 = vector.load %arg1[%c1, %c0_7, %c0_8, %c0_9] : memref<2x1x96x24xbf16, #tpu.memory_space<vmem>>, vector<1x1x80x24xbf16>
    %8 = vector.shape_cast %7 : vector<1x1x80x24xbf16> to vector<80x24xbf16>
    %c1_10 = arith.constant 1 : index
    %c0_11 = arith.constant 0 : index
    %c0_12 = arith.constant 0 : index
    %9 = vector.load %arg2[%c1_10, %c0_11, %c0_12] : memref<5x24x320xbf16, #tpu.memory_space<vmem>>, vector<1x24x320xbf16>
    %10 = vector.shape_cast %9 : vector<1x24x320xbf16> to vector<24x320xbf16>
    %cst_13 = arith.constant dense<0.000000e+00> : vector<80x320xf32>
    %11 = tpu.matmul %8, %10, %cst_13 {dimension_numbers = #tpu.dot_dimension_numbers<[1], [0], [0], [1], [0, 0, 1, 1], [], []>} : vector<80x24xbf16>, vector<24x320xbf16>, vector<80x320xf32> -> vector<80x320xf32>
    %12 = arith.addf %6, %11 : vector<80x320xf32>
    %c0_14 = arith.constant 0 : index
    %c0_15 = arith.constant 0 : index
    %c8 = arith.constant 8 : index
    %c0_16 = arith.constant 0 : index
    %13 = vector.load %arg1[%c0_14, %c0_15, %c8, %c0_16] : memref<2x1x96x24xbf16, #tpu.memory_space<vmem>>, vector<1x1x80x24xbf16>
    %14 = vector.shape_cast %13 : vector<1x1x80x24xbf16> to vector<80x24xbf16>
    %c2 = arith.constant 2 : index
    %c0_17 = arith.constant 0 : index
    %c0_18 = arith.constant 0 : index
    %15 = vector.load %arg2[%c2, %c0_17, %c0_18] : memref<5x24x320xbf16, #tpu.memory_space<vmem>>, vector<1x24x320xbf16>
    %16 = vector.shape_cast %15 : vector<1x24x320xbf16> to vector<24x320xbf16>
    %cst_19 = arith.constant dense<0.000000e+00> : vector<80x320xf32>
    %17 = tpu.matmul %14, %16, %cst_19 {dimension_numbers = #tpu.dot_dimension_numbers<[1], [0], [0], [1], [0, 0, 1, 1], [], []>} : vector<80x24xbf16>, vector<24x320xbf16>, vector<80x320xf32> -> vector<80x320xf32>
    %18 = arith.addf %12, %17 : vector<80x320xf32>
    %c1_20 = arith.constant 1 : index
    %c0_21 = arith.constant 0 : index
    %c8_22 = arith.constant 8 : index
    %c0_23 = arith.constant 0 : index
    %19 = vector.load %arg1[%c1_20, %c0_21, %c8_22, %c0_23] : memref<2x1x96x24xbf16, #tpu.memory_space<vmem>>, vector<1x1x80x24xbf16>
    %20 = vector.shape_cast %19 : vector<1x1x80x24xbf16> to vector<80x24xbf16>
    %c3 = arith.constant 3 : index
    %c0_24 = arith.constant 0 : index
    %c0_25 = arith.constant 0 : index
    %21 = vector.load %arg2[%c3, %c0_24, %c0_25] : memref<5x24x320xbf16, #tpu.memory_space<vmem>>, vector<1x24x320xbf16>
    %22 = vector.shape_cast %21 : vector<1x24x320xbf16> to vector<24x320xbf16>
    %cst_26 = arith.constant dense<0.000000e+00> : vector<80x320xf32>
    %23 = tpu.matmul %20, %22, %cst_26 {dimension_numbers = #tpu.dot_dimension_numbers<[1], [0], [0], [1], [0, 0, 1, 1], [], []>} : vector<80x24xbf16>, vector<24x320xbf16>, vector<80x320xf32> -> vector<80x320xf32>
    %24 = arith.addf %18, %23 : vector<80x320xf32>
    %c0_27 = arith.constant 0 : index
    %c0_28 = arith.constant 0 : index
    %c16 = arith.constant 16 : index
    %c0_29 = arith.constant 0 : index
    %25 = vector.load %arg1[%c0_27, %c0_28, %c16, %c0_29] : memref<2x1x96x24xbf16, #tpu.memory_space<vmem>>, vector<1x1x80x24xbf16>
    %26 = vector.shape_cast %25 : vector<1x1x80x24xbf16> to vector<80x24xbf16>
    %c4 = arith.constant 4 : index
    %c0_30 = arith.constant 0 : index
    %c0_31 = arith.constant 0 : index
    %27 = vector.load %arg2[%c4, %c0_30, %c0_31] : memref<5x24x320xbf16, #tpu.memory_space<vmem>>, vector<1x24x320xbf16>
    %28 = vector.shape_cast %27 : vector<1x24x320xbf16> to vector<24x320xbf16>
    %cst_32 = arith.constant dense<0.000000e+00> : vector<80x320xf32>
    %29 = tpu.matmul %26, %28, %cst_32 {dimension_numbers = #tpu.dot_dimension_numbers<[1], [0], [0], [1], [0, 0, 1, 1], [], []>} : vector<80x24xbf16>, vector<24x320xbf16>, vector<80x320xf32> -> vector<80x320xf32>
    %30 = arith.addf %24, %29 : vector<80x320xf32>
    %cst_33 = arith.constant 0.000000e+00 : f32
    %31 = vector.broadcast %cst_33 : f32 to vector<80x320xf32>
    %c1_34 = arith.constant 1 : index
    %c0_35 = arith.constant 0 : index
    %c0_36 = arith.constant 0 : index
    %c0_37 = arith.constant 0 : index
    %32 = vector.load %arg1[%c1_34, %c0_35, %c0_36, %c0_37] : memref<2x1x96x24xbf16, #tpu.memory_space<vmem>>, vector<1x1x80x24xbf16>
    %33 = vector.shape_cast %32 : vector<1x1x80x24xbf16> to vector<80x24xbf16>
    %c0_38 = arith.constant 0 : index
    %c0_39 = arith.constant 0 : index
    %c0_40 = arith.constant 0 : index
    %34 = vector.load %arg2[%c0_38, %c0_39, %c0_40] : memref<5x24x320xbf16, #tpu.memory_space<vmem>>, vector<1x24x320xbf16>
    %35 = vector.shape_cast %34 : vector<1x24x320xbf16> to vector<24x320xbf16>
    %cst_41 = arith.constant dense<0.000000e+00> : vector<80x320xf32>
    %36 = tpu.matmul %33, %35, %cst_41 {dimension_numbers = #tpu.dot_dimension_numbers<[1], [0], [0], [1], [0, 0, 1, 1], [], []>} : vector<80x24xbf16>, vector<24x320xbf16>, vector<80x320xf32> -> vector<80x320xf32>
    %37 = arith.addf %31, %36 : vector<80x320xf32>
    %c0_42 = arith.constant 0 : index
    %c0_43 = arith.constant 0 : index
    %c8_44 = arith.constant 8 : index
    %c0_45 = arith.constant 0 : index
    %38 = vector.load %arg1[%c0_42, %c0_43, %c8_44, %c0_45] : memref<2x1x96x24xbf16, #tpu.memory_space<vmem>>, vector<1x1x80x24xbf16>
    %39 = vector.shape_cast %38 : vector<1x1x80x24xbf16> to vector<80x24xbf16>
    %c1_46 = arith.constant 1 : index
    %c0_47 = arith.constant 0 : index
    %c0_48 = arith.constant 0 : index
    %40 = vector.load %arg2[%c1_46, %c0_47, %c0_48] : memref<5x24x320xbf16, #tpu.memory_space<vmem>>, vector<1x24x320xbf16>
    %41 = vector.shape_cast %40 : vector<1x24x320xbf16> to vector<24x320xbf16>
    %cst_49 = arith.constant dense<0.000000e+00> : vector<80x320xf32>
    %42 = tpu.matmul %39, %41, %cst_49 {dimension_numbers = #tpu.dot_dimension_numbers<[1], [0], [0], [1], [0, 0, 1, 1], [], []>} : vector<80x24xbf16>, vector<24x320xbf16>, vector<80x320xf32> -> vector<80x320xf32>
    %43 = arith.addf %37, %42 : vector<80x320xf32>
    %c1_50 = arith.constant 1 : index
    %c0_51 = arith.constant 0 : index
    %c8_52 = arith.constant 8 : index
    %c0_53 = arith.constant 0 : index
    %44 = vector.load %arg1[%c1_50, %c0_51, %c8_52, %c0_53] : memref<2x1x96x24xbf16, #tpu.memory_space<vmem>>, vector<1x1x80x24xbf16>
    %45 = vector.shape_cast %44 : vector<1x1x80x24xbf16> to vector<80x24xbf16>
    %c2_54 = arith.constant 2 : index
    %c0_55 = arith.constant 0 : index
    %c0_56 = arith.constant 0 : index
    %46 = vector.load %arg2[%c2_54, %c0_55, %c0_56] : memref<5x24x320xbf16, #tpu.memory_space<vmem>>, vector<1x24x320xbf16>
    %47 = vector.shape_cast %46 : vector<1x24x320xbf16> to vector<24x320xbf16>
    %cst_57 = arith.constant dense<0.000000e+00> : vector<80x320xf32>
    %48 = tpu.matmul %45, %47, %cst_57 {dimension_numbers = #tpu.dot_dimension_numbers<[1], [0], [0], [1], [0, 0, 1, 1], [], []>} : vector<80x24xbf16>, vector<24x320xbf16>, vector<80x320xf32> -> vector<80x320xf32>
    %49 = arith.addf %43, %48 : vector<80x320xf32>
    %c0_58 = arith.constant 0 : index
    %c0_59 = arith.constant 0 : index
    %c16_60 = arith.constant 16 : index
    %c0_61 = arith.constant 0 : index
    %50 = vector.load %arg1[%c0_58, %c0_59, %c16_60, %c0_61] : memref<2x1x96x24xbf16, #tpu.memory_space<vmem>>, vector<1x1x80x24xbf16>
    %51 = vector.shape_cast %50 : vector<1x1x80x24xbf16> to vector<80x24xbf16>
    %c3_62 = arith.constant 3 : index
    %c0_63 = arith.constant 0 : index
    %c0_64 = arith.constant 0 : index
    %52 = vector.load %arg2[%c3_62, %c0_63, %c0_64] : memref<5x24x320xbf16, #tpu.memory_space<vmem>>, vector<1x24x320xbf16>
    %53 = vector.shape_cast %52 : vector<1x24x320xbf16> to vector<24x320xbf16>
    %cst_65 = arith.constant dense<0.000000e+00> : vector<80x320xf32>
    %54 = tpu.matmul %51, %53, %cst_65 {dimension_numbers = #tpu.dot_dimension_numbers<[1], [0], [0], [1], [0, 0, 1, 1], [], []>} : vector<80x24xbf16>, vector<24x320xbf16>, vector<80x320xf32> -> vector<80x320xf32>
    %55 = arith.addf %49, %54 : vector<80x320xf32>
    %c1_66 = arith.constant 1 : index
    %c0_67 = arith.constant 0 : index
    %c16_68 = arith.constant 16 : index
    %c0_69 = arith.constant 0 : index
    %56 = vector.load %arg1[%c1_66, %c0_67, %c16_68, %c0_69] : memref<2x1x96x24xbf16, #tpu.memory_space<vmem>>, vector<1x1x80x24xbf16>
    %57 = vector.shape_cast %56 : vector<1x1x80x24xbf16> to vector<80x24xbf16>
    %c4_70 = arith.constant 4 : index
    %c0_71 = arith.constant 0 : index
    %c0_72 = arith.constant 0 : index
    %58 = vector.load %arg2[%c4_70, %c0_71, %c0_72] : memref<5x24x320xbf16, #tpu.memory_space<vmem>>, vector<1x24x320xbf16>
    %59 = vector.shape_cast %58 : vector<1x24x320xbf16> to vector<24x320xbf16>
    %cst_73 = arith.constant dense<0.000000e+00> : vector<80x320xf32>
    %60 = tpu.matmul %57, %59, %cst_73 {dimension_numbers = #tpu.dot_dimension_numbers<[1], [0], [0], [1], [0, 0, 1, 1], [], []>} : vector<80x24xbf16>, vector<24x320xbf16>, vector<80x320xf32> -> vector<80x320xf32>
    %61 = arith.addf %55, %60 : vector<80x320xf32>
    %62 = arith.maximumf %30, %61 : vector<80x320xf32>
    %c0_74 = arith.constant 0 : index
    %c0_75 = arith.constant 0 : index
    %63 = vector.load %arg3[%c0_74, %c0_75] : memref<1x320xf32, #tpu.memory_space<vmem>>, vector<1x320xf32>
    %64 = vector.broadcast %63 : vector<1x320xf32> to vector<80x320xf32>
    %65 = arith.addf %62, %64 : vector<80x320xf32>
    %cst_76 = arith.constant 0.000000e+00 : f32
    %66 = vector.broadcast %cst_76 : f32 to vector<80x320xf32>
    %67 = arith.maximumf %65, %66 : vector<80x320xf32>
    %68 = vector.extract_strided_slice %67 {offsets = [0, 0], sizes = [80, 304], strides = [1, 1]} : vector<80x320xf32> to vector<80x304xf32>
    %69 = vector.extract_strided_slice %67 {offsets = [0, 16], sizes = [80, 304], strides = [1, 1]} : vector<80x320xf32> to vector<80x304xf32>
    %70 = arith.maximumf %68, %69 : vector<80x304xf32>
    %cst_77 = arith.constant 0.000000e+00 : f32
    %71 = vector.broadcast %cst_77 : f32 to vector<8x304xf32>
    %72 = tpu.concatenate %71, %70, %71 in 0 : vector<8x304xf32>, vector<80x304xf32>, vector<8x304xf32> -> vector<96x304xf32>
    %cst_78 = arith.constant 0.000000e+00 : f32
    %73 = vector.broadcast %cst_78 : f32 to vector<64x256xf32>
    %74 = vector.extract_strided_slice %72 {offsets = [0, 0], sizes = [64, 304], strides = [1, 1]} : vector<96x304xf32> to vector<64x304xf32>
    %75 = arith.truncf %74 : vector<64x304xf32> to vector<64x304xbf16>
    %c0_79 = arith.constant 0 : index
    %c0_80 = arith.constant 0 : index
    %c0_81 = arith.constant 0 : index
    %76 = vector.load %arg4[%c0_79, %c0_80, %c0_81] : memref<5x304x256xbf16, #tpu.memory_space<vmem>>, vector<1x304x256xbf16>
    %77 = vector.shape_cast %76 : vector<1x304x256xbf16> to vector<304x256xbf16>
    %cst_82 = arith.constant dense<0.000000e+00> : vector<64x256xf32>
    %78 = tpu.matmul %75, %77, %cst_82 {dimension_numbers = #tpu.dot_dimension_numbers<[1], [0], [0], [1], [0, 0, 1, 1], [], []>} : vector<64x304xbf16>, vector<304x256xbf16>, vector<64x256xf32> -> vector<64x256xf32>
    %79 = arith.addf %73, %78 : vector<64x256xf32>
    %80 = vector.extract_strided_slice %72 {offsets = [8, 0], sizes = [64, 304], strides = [1, 1]} : vector<96x304xf32> to vector<64x304xf32>
    %81 = arith.truncf %80 : vector<64x304xf32> to vector<64x304xbf16>
    %c1_83 = arith.constant 1 : index
    %c0_84 = arith.constant 0 : index
    %c0_85 = arith.constant 0 : index
    %82 = vector.load %arg4[%c1_83, %c0_84, %c0_85] : memref<5x304x256xbf16, #tpu.memory_space<vmem>>, vector<1x304x256xbf16>
    %83 = vector.shape_cast %82 : vector<1x304x256xbf16> to vector<304x256xbf16>
    %cst_86 = arith.constant dense<0.000000e+00> : vector<64x256xf32>
    %84 = tpu.matmul %81, %83, %cst_86 {dimension_numbers = #tpu.dot_dimension_numbers<[1], [0], [0], [1], [0, 0, 1, 1], [], []>} : vector<64x304xbf16>, vector<304x256xbf16>, vector<64x256xf32> -> vector<64x256xf32>
    %85 = arith.addf %79, %84 : vector<64x256xf32>
    %86 = vector.extract_strided_slice %72 {offsets = [16, 0], sizes = [64, 304], strides = [1, 1]} : vector<96x304xf32> to vector<64x304xf32>
    %87 = arith.truncf %86 : vector<64x304xf32> to vector<64x304xbf16>
    %c2_87 = arith.constant 2 : index
    %c0_88 = arith.constant 0 : index
    %c0_89 = arith.constant 0 : index
    %88 = vector.load %arg4[%c2_87, %c0_88, %c0_89] : memref<5x304x256xbf16, #tpu.memory_space<vmem>>, vector<1x304x256xbf16>
    %89 = vector.shape_cast %88 : vector<1x304x256xbf16> to vector<304x256xbf16>
    %cst_90 = arith.constant dense<0.000000e+00> : vector<64x256xf32>
    %90 = tpu.matmul %87, %89, %cst_90 {dimension_numbers = #tpu.dot_dimension_numbers<[1], [0], [0], [1], [0, 0, 1, 1], [], []>} : vector<64x304xbf16>, vector<304x256xbf16>, vector<64x256xf32> -> vector<64x256xf32>
    %91 = arith.addf %85, %90 : vector<64x256xf32>
    %92 = vector.extract_strided_slice %72 {offsets = [24, 0], sizes = [64, 304], strides = [1, 1]} : vector<96x304xf32> to vector<64x304xf32>
    %93 = arith.truncf %92 : vector<64x304xf32> to vector<64x304xbf16>
    %c3_91 = arith.constant 3 : index
    %c0_92 = arith.constant 0 : index
    %c0_93 = arith.constant 0 : index
    %94 = vector.load %arg4[%c3_91, %c0_92, %c0_93] : memref<5x304x256xbf16, #tpu.memory_space<vmem>>, vector<1x304x256xbf16>
    %95 = vector.shape_cast %94 : vector<1x304x256xbf16> to vector<304x256xbf16>
    %cst_94 = arith.constant dense<0.000000e+00> : vector<64x256xf32>
    %96 = tpu.matmul %93, %95, %cst_94 {dimension_numbers = #tpu.dot_dimension_numbers<[1], [0], [0], [1], [0, 0, 1, 1], [], []>} : vector<64x304xbf16>, vector<304x256xbf16>, vector<64x256xf32> -> vector<64x256xf32>
    %97 = arith.addf %91, %96 : vector<64x256xf32>
    %98 = vector.extract_strided_slice %72 {offsets = [32, 0], sizes = [64, 304], strides = [1, 1]} : vector<96x304xf32> to vector<64x304xf32>
    %99 = arith.truncf %98 : vector<64x304xf32> to vector<64x304xbf16>
    %c4_95 = arith.constant 4 : index
    %c0_96 = arith.constant 0 : index
    %c0_97 = arith.constant 0 : index
    %100 = vector.load %arg4[%c4_95, %c0_96, %c0_97] : memref<5x304x256xbf16, #tpu.memory_space<vmem>>, vector<1x304x256xbf16>
    %101 = vector.shape_cast %100 : vector<1x304x256xbf16> to vector<304x256xbf16>
    %cst_98 = arith.constant dense<0.000000e+00> : vector<64x256xf32>
    %102 = tpu.matmul %99, %101, %cst_98 {dimension_numbers = #tpu.dot_dimension_numbers<[1], [0], [0], [1], [0, 0, 1, 1], [], []>} : vector<64x304xbf16>, vector<304x256xbf16>, vector<64x256xf32> -> vector<64x256xf32>
    %103 = arith.addf %97, %102 : vector<64x256xf32>
    %c0_99 = arith.constant 0 : index
    %c0_100 = arith.constant 0 : index
    %104 = vector.load %arg5[%c0_99, %c0_100] : memref<1x256xf32, #tpu.memory_space<vmem>>, vector<1x256xf32>
    %105 = vector.broadcast %104 : vector<1x256xf32> to vector<64x256xf32>
    %106 = arith.addf %103, %105 : vector<64x256xf32>
    %cst_101 = arith.constant 0.000000e+00 : f32
    %107 = vector.broadcast %cst_101 : f32 to vector<64x256xf32>
    %108 = arith.maximumf %106, %107 : vector<64x256xf32>
    %109 = vector.extract_strided_slice %108 {offsets = [0, 0], sizes = [64, 224], strides = [1, 1]} : vector<64x256xf32> to vector<64x224xf32>
    %110 = vector.extract_strided_slice %108 {offsets = [0, 32], sizes = [64, 224], strides = [1, 1]} : vector<64x256xf32> to vector<64x224xf32>
    %111 = arith.maximumf %109, %110 : vector<64x224xf32>
    %112 = vector.extract_strided_slice %111 {offsets = [0, 0], sizes = [8, 224], strides = [1, 1]} : vector<64x224xf32> to vector<8x224xf32>
    %113 = vector.extract_strided_slice %111 {offsets = [8, 0], sizes = [8, 224], strides = [1, 1]} : vector<64x224xf32> to vector<8x224xf32>
    %114 = arith.maximumf %112, %113 : vector<8x224xf32>
    %115 = vector.extract_strided_slice %111 {offsets = [16, 0], sizes = [8, 224], strides = [1, 1]} : vector<64x224xf32> to vector<8x224xf32>
    %116 = vector.extract_strided_slice %111 {offsets = [24, 0], sizes = [8, 224], strides = [1, 1]} : vector<64x224xf32> to vector<8x224xf32>
    %117 = arith.maximumf %115, %116 : vector<8x224xf32>
    %118 = vector.extract_strided_slice %111 {offsets = [32, 0], sizes = [8, 224], strides = [1, 1]} : vector<64x224xf32> to vector<8x224xf32>
    %119 = vector.extract_strided_slice %111 {offsets = [40, 0], sizes = [8, 224], strides = [1, 1]} : vector<64x224xf32> to vector<8x224xf32>
    %120 = arith.maximumf %118, %119 : vector<8x224xf32>
    %121 = vector.extract_strided_slice %111 {offsets = [48, 0], sizes = [8, 224], strides = [1, 1]} : vector<64x224xf32> to vector<8x224xf32>
    %122 = vector.extract_strided_slice %111 {offsets = [56, 0], sizes = [8, 224], strides = [1, 1]} : vector<64x224xf32> to vector<8x224xf32>
    %123 = arith.maximumf %121, %122 : vector<8x224xf32>
    %124 = tpu.concatenate %114, %117, %120, %123 in 1 : vector<8x224xf32>, vector<8x224xf32>, vector<8x224xf32>, vector<8x224xf32> -> vector<8x896xf32>
    %125 = arith.truncf %124 : vector<8x896xf32> to vector<8x896xbf16>
    %c0_102 = arith.constant 0 : index
    %c0_103 = arith.constant 0 : index
    %126 = vector.load %arg6[%c0_102, %c0_103] : memref<896x128xbf16, #tpu.memory_space<vmem>>, vector<896x128xbf16>
    %cst_104 = arith.constant dense<0.000000e+00> : vector<8x128xf32>
    %127 = tpu.matmul %125, %126, %cst_104 {dimension_numbers = #tpu.dot_dimension_numbers<[1], [0], [0], [1], [0, 0, 1, 1], [], []>} : vector<8x896xbf16>, vector<896x128xbf16>, vector<8x128xf32> -> vector<8x128xf32>
    %c0_105 = arith.constant 0 : index
    %c0_106 = arith.constant 0 : index
    %128 = vector.load %arg7[%c0_105, %c0_106] : memref<1x128xf32, #tpu.memory_space<vmem>>, vector<1x128xf32>
    %129 = vector.broadcast %128 : vector<1x128xf32> to vector<8x128xf32>
    %130 = arith.addf %127, %129 : vector<8x128xf32>
    %c0_107 = arith.constant 0 : index
    %c0_108 = arith.constant 0 : index
    %131 = vector.load %arg8[%c0_107, %c0_108] : memref<8x128xf32, #tpu.memory_space<vmem>>, vector<8x128xf32>
    tpu.vector_store %arg8[%c0_107, %c0_108], %130 {strides = array<i32>} : memref<8x128xf32, #tpu.memory_space<vmem>>, vector<8x128xf32>,
    return
  }
  func.func @transform_0(%arg0: i32) -> (i32, i32, i32, i32) {
    %c0_i32 = arith.constant 0 : i32
    %c0_i32_0 = arith.constant 0 : i32
    %c0_i32_1 = arith.constant 0 : i32
    %c0_i32_2 = arith.constant 0 : i32
    return %c0_i32, %arg0, %c0_i32_0, %c0_i32_1 : i32, i32, i32, i32
  }
  func.func @transform_1(%arg0: i32) -> (i32, i32, i32) {
    %c0_i32 = arith.constant 0 : i32
    %c0_i32_0 = arith.constant 0 : i32
    %c0_i32_1 = arith.constant 0 : i32
    %c0_i32_2 = arith.constant 0 : i32
    return %c0_i32, %c0_i32_0, %c0_i32_1 : i32, i32, i32
  }
  func.func @transform_2(%arg0: i32) -> (i32, i32) {
    %c0_i32 = arith.constant 0 : i32
    %c0_i32_0 = arith.constant 0 : i32
    %c0_i32_1 = arith.constant 0 : i32
    return %c0_i32, %c0_i32_0 : i32, i32
  }
  func.func @transform_3(%arg0: i32) -> (i32, i32, i32) {
    %c0_i32 = arith.constant 0 : i32
    %c0_i32_0 = arith.constant 0 : i32
    %c0_i32_1 = arith.constant 0 : i32
    %c0_i32_2 = arith.constant 0 : i32
    return %c0_i32, %c0_i32_0, %c0_i32_1 : i32, i32, i32
  }
  func.func @transform_4(%arg0: i32) -> (i32, i32) {
    %c0_i32 = arith.constant 0 : i32
    %c0_i32_0 = arith.constant 0 : i32
    %c0_i32_1 = arith.constant 0 : i32
    return %c0_i32, %c0_i32_0 : i32, i32
  }
  func.func @transform_5(%arg0: i32) -> (i32, i32) {
    %c0_i32 = arith.constant 0 : i32
    %c0_i32_0 = arith.constant 0 : i32
    %c0_i32_1 = arith.constant 0 : i32
    return %c0_i32, %c0_i32_0 : i32, i32
  }
  func.func @transform_6(%arg0: i32) -> (i32, i32) {
    %c0_i32 = arith.constant 0 : i32
    %c0_i32_0 = arith.constant 0 : i32
    %c0_i32_1 = arith.constant 0 : i32
    return %c0_i32, %c0_i32_0 : i32, i32
  }
  func.func @transform_7(%arg0: i32) -> (i32, i32) {
    %c0_i32 = arith.constant 0 : i32
    %c0_i32_0 = arith.constant 0 : i32
    return %arg0, %c0_i32 : i32, i32
  }
}

</mosaic_0001>

<llo_original>
// kernel: forward.1
$region0: #{forward.1}
  #allocation0 [shape = 'u32[]', space=smem, size = 0x4, offset = 0x4, fixed_abs, tag = 'smem constant byte address 0x4 - core index']
  #allocation1 [shape = 'u32[72,128]{1,0:T(1,128)}', space=vmem, size = 0x9000, scoped, tag = 'internal scratch']
  %s0 = inlined_call_operand.vmem [shape: bf16[2,2,96,24], index: 0, kind: input, shape index: {}]
  %s1 = inlined_call_operand.vmem [shape: bf16[5,24,320], index: 1, kind: input, shape index: {}]
  %s2 = inlined_call_operand.vmem [shape: f32[1,320], index: 2, kind: input, shape index: {}]
  %s3 = inlined_call_operand.hbm [shape: bf16[5,304,256], index: 3, kind: input, shape index: {}]
  %s4 = inlined_call_operand.vmem [shape: f32[1,256], index: 4, kind: input, shape index: {}]
  %s5 = inlined_call_operand.vmem [shape: bf16[896,128], index: 5, kind: input, shape index: {}]
  %s6 = inlined_call_operand.vmem [shape: f32[1,128], index: 6, kind: input, shape index: {}]
  %s7 = inlined_call_operand.hbm [shape: f32[16,128], index: 7, kind: output, shape index: {}]
  %s8 = sld [smem:[#allocation0]]
  $region106: #{forward.1} parent=0
    _
  %s10 = ssub.s32 1, %s8
  %s11 = scalar_select 0, %s10, %s8
  $region1: #{forward.1} parent=0
    #allocation2 [shape = 'u8[98304]{0}', space=vmem, size = 0x18000, scoped, tag = 'input window, operand 0']
    #allocation3 [shape = 'u8[778240]{0}', space=vmem, size = 0xbe000, scoped, tag = 'input window, operand 3, single buffered']
    #allocation4 [shape = 's32[2]{0}', space=sflag, size = 0x8, scoped, tag = 'scoped memory for forward.1']
    #allocation5 [shape = 's32[2]{0}', space=sflag, size = 0x8, scoped, tag = 'scoped memory for forward.1']
    #allocation6 [shape = 'u8[8192]{0}', space=vmem, size = 0x2000, scoped, tag = 'output window, operand 0']
    %12 = vsyncpa [#allocation4], 0
    %13 = vsyncpa [#allocation5], 0
    %s14 = scalar_lea.sflag [#allocation5], 1
    %15 = vsyncpa %s14, 0
    loop: start=0, step=1, limit=4
    $region2: #{forward.1} parent=1 // loop_pre_header
      _
    $region3: #{forward.1} parent=1 // loop_header
      %s17 = sphi 0, %s21
      %p18 = scmp.ge.s32.totalorder %s17, 4
      %s27 = sphi 0, %s29
      %s30 = sphi 0, %s27
      %s31 = sphi 0, %s30
      %s47 = sphi 0, %s31
      %s51 = sphi 0, %s51
      %s53 = sphi 0, %s51
      %s54 = sphi 0, %s53
      %s68 = sphi 0, %s54
      %s72 = sphi 0, %s72
      %s74 = sphi 0, %s72
      %s75 = sphi 0, %s74
      %s89 = sphi 0, %s75
      %s93 = sphi 0, %s93
      %s95 = sphi 0, %s93
      %s96 = sphi 0, %s95
      %s110 = sphi 0, %s96
      %s114 = sphi 0, %s114
      %s116 = sphi 0, %s114
      %s117 = sphi 0, %s116
      %s131 = sphi 0, %s117
      %s135 = sphi 0, %s135
      %s137 = sphi 0, %s135
      %s138 = sphi 0, %s137
      %s152 = sphi 0, %s138
      %s156 = sphi 0, %s156
      %s158 = sphi 0, %s156
      %s159 = sphi 0, %s158
      %s173 = sphi 0, %s159
      %s179 = sphi 0, %s181
      %s182 = sphi 0, %s179
      %s183 = sphi 0, %s182
      %s199 = sphi 0, %s183
    $region4: #{forward.1} parent=1 // loop_header_branch
      %20 = sbr.rel (%p18) target = $region8
    $region5: #{forward.1} parent=1 // loop_body
      %s22 = ssub.s32 %s17, 1
      %s23 = ssub.s32 %s17, 2
      %s24 = sadd.s32 %s17, 1
      %s25 = ssub.s32 %s17, %s24
      %p26 = scmp.eq.s32.totalorder %s25, 0
      %s28 = sadd.s32 %s27, 1
      %s29 = scalar_select %p26, %s27, %s28
      %p32 = pneg %p26
      %p33 = scmp.eq.s32.totalorder %s17, 1
      %p34 = por %p32, %p33
      %p35 = scmp.ne.s32.totalorder %s27, %s30
      %p36 = scmp.eq.s32.totalorder %s17, 0
      %p37 = por %p35, %p36
      %p38 = scmp.ne.s32.totalorder %s27, %s30
      %p39 = scmp.eq.s32.totalorder %s22, 1
      %p40 = por %p38, %p39
      %p41 = scmp.ne.s32.totalorder %s30, %s31
      %p42 = scmp.eq.s32.totalorder %s22, 0
      %p43 = por %p41, %p42
      %p44 = scmp.ne.s32.totalorder %s30, %s31
      %p45 = scmp.eq.s32.totalorder %s23, 1
      %p46 = por %p44, %p45
      %p48 = scmp.ne.s32.totalorder %s31, %s47
      %p49 = scmp.eq.s32.totalorder %s23, 0
      %p50 = por %p48, %p49
      %s52 = sadd.s32 %s51, 1
      %p55 = scmp.eq.s32.totalorder %s17, 1
      %p56 = scmp.ne.s32.totalorder %s51, %s53
      %p57 = scmp.eq.s32.totalorder %s17, 0
      %p58 = por %p56, %p57
      %p59 = scmp.ne.s32.totalorder %s51, %s53
      %p60 = scmp.eq.s32.totalorder %s22, 1
      %p61 = por %p59, %p60
      %p62 = scmp.ne.s32.totalorder %s53, %s54
      %p63 = scmp.eq.s32.totalorder %s22, 0
      %p64 = por %p62, %p63
      %p65 = scmp.ne.s32.totalorder %s53, %s54
      %p66 = scmp.eq.s32.totalorder %s23, 1
      %p67 = por %p65, %p66
      %p69 = scmp.ne.s32.totalorder %s54, %s68
      %p70 = scmp.eq.s32.totalorder %s23, 0
      %p71 = por %p69, %p70
      %s73 = sadd.s32 %s72, 1
      %p76 = scmp.eq.s32.totalorder %s17, 1
      %p77 = scmp.ne.s32.totalorder %s72, %s74
      %p78 = scmp.eq.s32.totalorder %s17, 0
      %p79 = por %p77, %p78
      %p80 = scmp.ne.s32.totalorder %s72, %s74
      %p81 = scmp.eq.s32.totalorder %s22, 1
      %p82 = por %p80, %p81
      %p83 = scmp.ne.s32.totalorder %s74, %s75
      %p84 = scmp.eq.s32.totalorder %s22, 0
      %p85 = por %p83, %p84
      %p86 = scmp.ne.s32.totalorder %s74, %s75
      %p87 = scmp.eq.s32.totalorder %s23, 1
      %p88 = por %p86, %p87
      %p90 = scmp.ne.s32.totalorder %s75, %s89
      %p91 = scmp.eq.s32.totalorder %s23, 0
      %p92 = por %p90, %p91
      %s94 = sadd.s32 %s93, 1
      %p97 = scmp.eq.s32.totalorder %s17, 1
      %p98 = scmp.ne.s32.totalorder %s93, %s95
      %p99 = scmp.eq.s32.totalorder %s17, 0
      %p100 = por %p98, %p99
      %p101 = scmp.ne.s32.totalorder %s93, %s95
      %p102 = scmp.eq.s32.totalorder %s22, 1
      %p103 = por %p101, %p102
      %p104 = scmp.ne.s32.totalorder %s95, %s96
      %p105 = scmp.eq.s32.totalorder %s22, 0
      %p106 = por %p104, %p105
      %p107 = scmp.ne.s32.totalorder %s95, %s96
      %p108 = scmp.eq.s32.totalorder %s23, 1
      %p109 = por %p107, %p108
      %p111 = scmp.ne.s32.totalorder %s96, %s110
      %p112 = scmp.eq.s32.totalorder %s23, 0
      %p113 = por %p111, %p112
      %s115 = sadd.s32 %s114, 1
      %p118 = scmp.eq.s32.totalorder %s17, 1
      %p119 = scmp.ne.s32.totalorder %s114, %s116
      %p120 = scmp.eq.s32.totalorder %s17, 0
      %p121 = por %p119, %p120
      %p122 = scmp.ne.s32.totalorder %s114, %s116
      %p123 = scmp.eq.s32.totalorder %s22, 1
      %p124 = por %p122, %p123
      %p125 = scmp.ne.s32.totalorder %s116, %s117
      %p126 = scmp.eq.s32.totalorder %s22, 0
      %p127 = por %p125, %p126
      %p128 = scmp.ne.s32.totalorder %s116, %s117
      %p129 = scmp.eq.s32.totalorder %s23, 1
      %p130 = por %p128, %p129
      %p132 = scmp.ne.s32.totalorder %s117, %s131
      %p133 = scmp.eq.s32.totalorder %s23, 0
      %p134 = por %p132, %p133
      %s136 = sadd.s32 %s135, 1
      %p139 = scmp.eq.s32.totalorder %s17, 1
      %p140 = scmp.ne.s32.totalorder %s135, %s137
      %p141 = scmp.eq.s32.totalorder %s17, 0
      %p142 = por %p140, %p141
      %p143 = scmp.ne.s32.totalorder %s135, %s137
      %p144 = scmp.eq.s32.totalorder %s22, 1
      %p145 = por %p143, %p144
      %p146 = scmp.ne.s32.totalorder %s137, %s138
      %p147 = scmp.eq.s32.totalorder %s22, 0
      %p148 = por %p146, %p147
      %p149 = scmp.ne.s32.totalorder %s137, %s138
      %p150 = scmp.eq.s32.totalorder %s23, 1
      %p151 = por %p149, %p150
      %p153 = scmp.ne.s32.totalorder %s138, %s152
      %p154 = scmp.eq.s32.totalorder %s23, 0
      %p155 = por %p153, %p154
      %s157 = sadd.s32 %s156, 1
      %p160 = scmp.eq.s32.totalorder %s17, 1
      %p161 = scmp.ne.s32.totalorder %s156, %s158
      %p162 = scmp.eq.s32.totalorder %s17, 0
      %p163 = por %p161, %p162
      %p164 = scmp.ne.s32.totalorder %s156, %s158
      %p165 = scmp.eq.s32.totalorder %s22, 1
      %p166 = por %p164, %p165
      %p167 = scmp.ne.s32.totalorder %s158, %s159
      %p168 = scmp.eq.s32.totalorder %s22, 0
      %p169 = por %p167, %p168
      %p170 = scmp.ne.s32.totalorder %s158, %s159
      %p171 = scmp.eq.s32.totalorder %s23, 1
      %p172 = por %p170, %p171
      %p174 = scmp.ne.s32.totalorder %s159, %s173
      %p175 = scmp.eq.s32.totalorder %s23, 0
      %p176 = por %p174, %p175
      %s177 = ssub.s32 %s17, %s24
      %p178 = scmp.eq.s32.totalorder %s177, 0
      %s180 = sadd.s32 %s179, 1
      %s181 = scalar_select %p178, %s179, %s180
      %p184 = pneg %p178
      %p185 = scmp.eq.s32.totalorder %s17, 1
      %p186 = por %p184, %p185
      %p187 = scmp.ne.s32.totalorder %s179, %s182
      %p188 = scmp.eq.s32.totalorder %s17, 0
      %p189 = por %p187, %p188
      %p190 = scmp.ne.s32.totalorder %s179, %s182
      %p191 = scmp.eq.s32.totalorder %s22, 1
      %p192 = por %p190, %p191
      %p193 = scmp.ne.s32.totalorder %s182, %s183
      %p194 = scmp.eq.s32.totalorder %s22, 0
      %p195 = por %p193, %p194
      %p196 = scmp.ne.s32.totalorder %s182, %s183
      %p197 = scmp.eq.s32.totalorder %s23, 1
      %p198 = por %p196, %p197
      %p200 = scmp.ne.s32.totalorder %s183, %s199
      %p201 = scmp.eq.s32.totalorder %s23, 0
      %p202 = por %p200, %p201
      %p203 = scmp.le.s32.totalorder 1, %s17
      %p204 = scmp.lt.s32.totalorder %s17, 3
      %p205 = pnand %p203, %p204
      %p206 = pneg %p205
      // Predicated region
      $region9: #{forward.1} parent=5 // pred_check
        _
      $region10: #{forward.1} parent=5 // pred_check_branch
        %208 = sbr.rel (%p205) target = $region12
      $region11: #{forward.1} parent=5 // pred_region
        %s209 = ssub.s32 %s17, 1
        // Predicated region
        $region13: #{forward.1} parent=11 // pred_check
          %p210 = pneg %p64
        $region14: #{forward.1} parent=11 // pred_check_branch
          %212 = sbr.rel (%p210) target = $region16
        $region15: #{forward.1} parent=11 // pred_region
          _
        $region16: #{forward.1} parent=11 // pred_fallthru
          _
        // Predicated region
        $region17: #{forward.1} parent=11 // pred_check
          %p213 = pneg %p85
        $region18: #{forward.1} parent=11 // pred_check_branch
          %215 = sbr.rel (%p213) target = $region20
        $region19: #{forward.1} parent=11 // pred_region
          _
        $region20: #{forward.1} parent=11 // pred_fallthru
          _
        // Predicated region
        $region21: #{forward.1} parent=11 // pred_check
          %p216 = pneg %p106
        $region22: #{forward.1} parent=11 // pred_check_branch
          %218 = sbr.rel (%p216) target = $region24
        $region23: #{forward.1} parent=11 // pred_region
          %220 = vsyncadd [#allocation4], 0
          %s221 = sshll.u32 %s3, 4
          %s222 = int_to_ptr.hbm [resolvable:$true] %s221
          %s223 = sshll.u32 [#allocation3], 4
          %s224 = int_to_ptr.vmem [resolvable:$true] %s223
          %229 = dma.hbm_to_vmem [thread:$0]  %s222, 24320, %s224, [#allocation4], 128, 128, 8
        $region24: #{forward.1} parent=11 // pred_fallthru
          _
        // Predicated region
        $region25: #{forward.1} parent=11 // pred_check
          %p230 = pneg %p127
        $region26: #{forward.1} parent=11 // pred_check_branch
          %232 = sbr.rel (%p230) target = $region28
        $region27: #{forward.1} parent=11 // pred_region
          _
        $region28: #{forward.1} parent=11 // pred_fallthru
          _
        // Predicated region
        $region29: #{forward.1} parent=11 // pred_check
          %p233 = pneg %p148
        $region30: #{forward.1} parent=11 // pred_check_branch
          %235 = sbr.rel (%p233) target = $region32
        $region31: #{forward.1} parent=11 // pred_region
          _
        $region32: #{forward.1} parent=11 // pred_fallthru
          _
        // Predicated region
        $region33: #{forward.1} parent=11 // pred_check
          %p236 = pneg %p169
        $region34: #{forward.1} parent=11 // pred_check_branch
          %238 = sbr.rel (%p236) target = $region36
        $region35: #{forward.1} parent=11 // pred_region
          _
        $region36: #{forward.1} parent=11 // pred_fallthru
          _
      $region12: #{forward.1} parent=5 // pred_fallthru
        _
      %p239 = scmp.lt.s32.totalorder %s17, 2
      // Predicated region
      $region37: #{forward.1} parent=5 // pred_check
        %p240 = pneg %p239
      $region38: #{forward.1} parent=5 // pred_check_branch
        %242 = sbr.rel (%p240) target = $region40
      $region39: #{forward.1} parent=5 // pred_region
        // Predicated region
        $region41: #{forward.1} parent=39 // pred_check
          %p243 = pneg %p37
        $region42: #{forward.1} parent=39 // pred_check_branch
          %245 = sbr.rel (%p243) target = $region44
        $region43: #{forward.1} parent=39 // pred_region
          %s246 = sand.u32 %s27, 1
          %s247 = sand.u32 %s27, 1
          %s248 = smul.addr %s247, 96
          %s249 = scalar_lea.vmem [#allocation2], %s248
          %s250 = smul.addr %s17, 12
          %s251 = smul.addr %s250, 4
          %s252 = scalar_lea.vmem %s0, %s251
          // Predicated region
          $region45: #{forward.1} parent=43 // pred_check
            _
          $region46: #{forward.1} parent=43 // pred_check_branch
            %254 = sbr.rel (0) target = $region48
          $region47: #{forward.1} parent=43 // pred_region
            // Predicated region
            $region49: #{forward.1} parent=47 // pred_check
              _
            $region50: #{forward.1} parent=47 // pred_check_branch
              %256 = sbr.rel target = $region52
            $region51: #{forward.1} parent=47 // pred_region
              // Predicated region
              $region64: #{forward.1} parent=51 // pred_check
                _
              $region65: #{forward.1} parent=51 // pred_check_branch
                %318 = sbr.rel (0) target = $region67
              $region66: #{forward.1} parent=51 // pred_region
                loop: start=0, step=1, limit=1
                $region68: #{forward.1} parent=66 // loop_pre_header
                  _
                $region69: #{forward.1} parent=66 // loop_header
                  %s320 = sphi 0, %s324
                  %p321 = scmp.ge.s32.totalorder %s320, 1
                  %s325 = sphi %s252, %s252
                  %s326 = sphi %s249, %s249
                $region70: #{forward.1} parent=66 // loop_header_branch
                  %323 = sbr.rel (%p321) target = $region74
                $region71: #{forward.1} parent=66 // loop_body
                  _
                $region72: #{forward.1} parent=66 // loop_footer
                  %s324 = sadd.s32 1, %s320
                $region73: #{forward.1} parent=66 // loop_footer_branch
                  %319 = sbr.rel target = $region69
                $region74: #{forward.1} parent=66 // loop_exit
                  _
                %s328 = ssub.s32 16, 1
                loop: start=0, step=1, limit=1
                $region75: #{forward.1} parent=66 // loop_pre_header
                  _
                $region76: #{forward.1} parent=66 // loop_header
                  %s330 = sphi 0, %s334
                  %p331 = scmp.ge.s32.totalorder %s330, 1
                  %s335 = sphi %s252, %s252
                  %s336 = sphi %s249, %s249
                $region77: #{forward.1} parent=66 // loop_header_branch
                  %333 = sbr.rel (%p331) target = $region81
                $region78: #{forward.1} parent=66 // loop_body
                  %v337 = vld [vmem:[%s335] sm:%s328]
                  %338 = vst [vmem:[%s336] sm:%s328] %v337
                  %v339 = vld [vmem:[%s335 + $0x4] sm:%s328]
                  %340 = vst [vmem:[%s336 + $0x4] sm:%s328] %v339
                  %v341 = vld [vmem:[%s335 + $0x8] sm:%s328]
                  %342 = vst [vmem:[%s336 + $0x8] sm:%s328] %v341
                  %v343 = vld [vmem:[%s335 + $0xc] sm:%s328]
                  %344 = vst [vmem:[%s336 + $0xc] sm:%s328] %v343
                  %v345 = vld [vmem:[%s335 + $0x10] sm:%s328]
                  %346 = vst [vmem:[%s336 + $0x10] sm:%s328] %v345
                  %v347 = vld [vmem:[%s335 + $0x14] sm:%s328]
                  %348 = vst [vmem:[%s336 + $0x14] sm:%s328] %v347
                  %v349 = vld [vmem:[%s335 + $0x18] sm:%s328]
                  %350 = vst [vmem:[%s336 + $0x18] sm:%s328] %v349
                  %v351 = vld [vmem:[%s335 + $0x1c] sm:%s328]
                  %352 = vst [vmem:[%s336 + $0x1c] sm:%s328] %v351
                  %v353 = vld [vmem:[%s335 + $0x20] sm:%s328]
                  %354 = vst [vmem:[%s336 + $0x20] sm:%s328] %v353
                  %v355 = vld [vmem:[%s335 + $0x24] sm:%s328]
                  %356 = vst [vmem:[%s336 + $0x24] sm:%s328] %v355
                  %v357 = vld [vmem:[%s335 + $0x28] sm:%s328]
                  %358 = vst [vmem:[%s336 + $0x28] sm:%s328] %v357
                  %v359 = vld [vmem:[%s335 + $0x2c] sm:%s328]
                  %360 = vst [vmem:[%s336 + $0x2c] sm:%s328] %v359
                  %v361 = vld [vmem:[%s335 + $0x60] sm:%s328]
                  %362 = vst [vmem:[%s336 + $0x30] sm:%s328] %v361
                  %v363 = vld [vmem:[%s335 + $0x64] sm:%s328]
                  %364 = vst [vmem:[%s336 + $0x34] sm:%s328] %v363
                  %v365 = vld [vmem:[%s335 + $0x68] sm:%s328]
                  %366 = vst [vmem:[%s336 + $0x38] sm:%s328] %v365
                  %v367 = vld [vmem:[%s335 + $0x6c] sm:%s328]
                  %368 = vst [vmem:[%s336 + $0x3c] sm:%s328] %v367
                  %v369 = vld [vmem:[%s335 + $0x70] sm:%s328]
                  %370 = vst [vmem:[%s336 + $0x40] sm:%s328] %v369
                  %v371 = vld [vmem:[%s335 + $0x74] sm:%s328]
                  %372 = vst [vmem:[%s336 + $0x44] sm:%s328] %v371
                  %v373 = vld [vmem:[%s335 + $0x78] sm:%s328]
                  %374 = vst [vmem:[%s336 + $0x48] sm:%s328] %v373
                  %v375 = vld [vmem:[%s335 + $0x7c] sm:%s328]
                  %376 = vst [vmem:[%s336 + $0x4c] sm:%s328] %v375
                  %v377 = vld [vmem:[%s335 + $0x80] sm:%s328]
                  %378 = vst [vmem:[%s336 + $0x50] sm:%s328] %v377
                  %v379 = vld [vmem:[%s335 + $0x84] sm:%s328]
                  %380 = vst [vmem:[%s336 + $0x54] sm:%s328] %v379
                  %v381 = vld [vmem:[%s335 + $0x88] sm:%s328]
                  %382 = vst [vmem:[%s336 + $0x58] sm:%s328] %v381
                  %v383 = vld [vmem:[%s335 + $0x8c] sm:%s328]
                  %384 = vst [vmem:[%s336 + $0x5c] sm:%s328] %v383
                $region79: #{forward.1} parent=66 // loop_footer
                  %s334 = sadd.s32 1, %s330
                $region80: #{forward.1} parent=66 // loop_footer_branch
                  %329 = sbr.rel target = $region76
                $region81: #{forward.1} parent=66 // loop_exit
                  _
              $region67: #{forward.1} parent=51 // pred_fallthru
                _
            $region52: #{forward.1} parent=47 // pred_fallthru
              _
            // Predicated region
            $region53: #{forward.1} parent=47 // pred_check
              _
            $region54: #{forward.1} parent=47 // pred_check_branch
              %258 = sbr.rel (0) target = $region56
            $region55: #{forward.1} parent=47 // pred_region
              %s260 = ssub.s32 16, 1
              loop: start=0, step=1, limit=1
              $region57: #{forward.1} parent=55 // loop_pre_header
                _
              $region58: #{forward.1} parent=55 // loop_header
                %s262 = sphi 0, %s266
                %p263 = scmp.ge.s32.totalorder %s262, 1
                %s267 = sphi %s252, %s252
                %s268 = sphi %s249, %s249
              $region59: #{forward.1} parent=55 // loop_header_branch
                %265 = sbr.rel (%p263) target = $region63
              $region60: #{forward.1} parent=55 // loop_body
                %v269 = vld [vmem:[%s267] sm:%s260]
                %270 = vst [vmem:[%s268] sm:%s260] %v269
                %v271 = vld [vmem:[%s267 + $0x4] sm:%s260]
                %272 = vst [vmem:[%s268 + $0x4] sm:%s260] %v271
                %v273 = vld [vmem:[%s267 + $0x8] sm:%s260]
                %274 = vst [vmem:[%s268 + $0x8] sm:%s260] %v273
                %v275 = vld [vmem:[%s267 + $0xc] sm:%s260]
                %276 = vst [vmem:[%s268 + $0xc] sm:%s260] %v275
                %v277 = vld [vmem:[%s267 + $0x10] sm:%s260]
                %278 = vst [vmem:[%s268 + $0x10] sm:%s260] %v277
                %v279 = vld [vmem:[%s267 + $0x14] sm:%s260]
                %280 = vst [vmem:[%s268 + $0x14] sm:%s260] %v279
                %v281 = vld [vmem:[%s267 + $0x18] sm:%s260]
                %282 = vst [vmem:[%s268 + $0x18] sm:%s260] %v281
                %v283 = vld [vmem:[%s267 + $0x1c] sm:%s260]
                %284 = vst [vmem:[%s268 + $0x1c] sm:%s260] %v283
                %v285 = vld [vmem:[%s267 + $0x20] sm:%s260]
                %286 = vst [vmem:[%s268 + $0x20] sm:%s260] %v285
                %v287 = vld [vmem:[%s267 + $0x24] sm:%s260]
                %288 = vst [vmem:[%s268 + $0x24] sm:%s260] %v287
                %v289 = vld [vmem:[%s267 + $0x28] sm:%s260]
                %290 = vst [vmem:[%s268 + $0x28] sm:%s260] %v289
                %v291 = vld [vmem:[%s267 + $0x2c] sm:%s260]
                %292 = vst [vmem:[%s268 + $0x2c] sm:%s260] %v291
                %v293 = vld [vmem:[%s267 + $0x60] sm:%s260]
                %294 = vst [vmem:[%s268 + $0x30] sm:%s260] %v293
                %v295 = vld [vmem:[%s267 + $0x64] sm:%s260]
                %296 = vst [vmem:[%s268 + $0x34] sm:%s260] %v295
                %v297 = vld [vmem:[%s267 + $0x68] sm:%s260]
                %298 = vst [vmem:[%s268 + $0x38] sm:%s260] %v297
                %v299 = vld [vmem:[%s267 + $0x6c] sm:%s260]
                %300 = vst [vmem:[%s268 + $0x3c] sm:%s260] %v299
                %v301 = vld [vmem:[%s267 + $0x70] sm:%s260]
                %302 = vst [vmem:[%s268 + $0x40] sm:%s260] %v301
                %v303 = vld [vmem:[%s267 + $0x74] sm:%s260]
                %304 = vst [vmem:[%s268 + $0x44] sm:%s260] %v303
                %v305 = vld [vmem:[%s267 + $0x78] sm:%s260]
                %306 = vst [vmem:[%s268 + $0x48] sm:%s260] %v305
                %v307 = vld [vmem:[%s267 + $0x7c] sm:%s260]
                %308 = vst [vmem:[%s268 + $0x4c] sm:%s260] %v307
                %v309 = vld [vmem:[%s267 + $0x80] sm:%s260]
                %310 = vst [vmem:[%s268 + $0x50] sm:%s260] %v309
                %v311 = vld [vmem:[%s267 + $0x84] sm:%s260]
                %312 = vst [vmem:[%s268 + $0x54] sm:%s260] %v311
                %v313 = vld [vmem:[%s267 + $0x88] sm:%s260]
                %314 = vst [vmem:[%s268 + $0x58] sm:%s260] %v313
                %v315 = vld [vmem:[%s267 + $0x8c] sm:%s260]
                %316 = vst [vmem:[%s268 + $0x5c] sm:%s260] %v315
              $region61: #{forward.1} parent=55 // loop_footer
                %s266 = sadd.s32 1, %s262
              $region62: #{forward.1} parent=55 // loop_footer_branch
                %261 = sbr.rel target = $region58
              $region63: #{forward.1} parent=55 // loop_exit
                _
            $region56: #{forward.1} parent=47 // pred_fallthru
              _
          $region48: #{forward.1} parent=43 // pred_fallthru
            _
          %385 = vnop
        $region44: #{forward.1} parent=39 // pred_fallthru
          _
      $region40: #{forward.1} parent=5 // pred_fallthru
        _
      %p386 = scmp.le.s32.totalorder 1, %s17
      %p387 = scmp.lt.s32.totalorder %s17, 3
      %p388 = pnand %p386, %p387
      %p389 = pneg %p388
      // Predicated region
      $region82: #{forward.1} parent=5 // pred_check
        _
      $region83: #{forward.1} parent=5 // pred_check_branch
        %391 = sbr.rel (%p388) target = $region85
      $region84: #{forward.1} parent=5 // pred_region
        %s392 = ssub.s32 %s17, 1
        %s393 = sand.u32 %s30, 1
        %s394 = sand.u32 %s30, 1
        %s395 = smul.addr %s394, 96
        %s396 = scalar_lea.vmem [#allocation2], %s395
        // Predicated region
        $region86: #{forward.1} parent=84 // pred_check
          %p397 = pneg %p43
        $region87: #{forward.1} parent=84 // pred_check_branch
          %399 = sbr.rel (%p397) target = $region89
        $region88: #{forward.1} parent=84 // pred_region
          _
        $region89: #{forward.1} parent=84 // pred_fallthru
          _
        // Predicated region
        $region90: #{forward.1} parent=84 // pred_check
          %p400 = pneg %p106
        $region91: #{forward.1} parent=84 // pred_check_branch
          %402 = sbr.rel (%p400) target = $region93
        $region92: #{forward.1} parent=84 // pred_region
          %404 = dma.done [#allocation4], 24320
        $region93: #{forward.1} parent=84 // pred_fallthru
          _
        %s405 = sand.u32 %s30, 1
        %s406 = sand.u32 %s30, 1
        %s407 = smul.addr %s406, 96
        %s408 = scalar_lea.vmem [#allocation2], %s407
        %p409 = pneg %p43
        %p410 = pneg %p40
        %p411 = pneg %p64
        %p412 = pneg %p61
        %p413 = pneg %p85
        %p414 = pneg %p82
        %p415 = pneg %p106
        %p416 = pneg %p103
        %p417 = pneg %p127
        %p418 = pneg %p124
        %p419 = pneg %p148
        %p420 = pneg %p145
        %p421 = pneg %p169
        %p422 = pneg %p166
        %p423 = pneg %p195
        %p424 = pneg %p192
        %s425 = sand.u32 %s182, 1
        %s426 = scalar_lea.sflag [#allocation5], %s425
        %s427 = sand.u32 %s182, 1
        %s428 = smul.addr %s427, 8
        %s429 = scalar_lea.vmem [#allocation6], %s428
        %v431 = vld [vmem:[%s396] sm:$0xf]
        %v432 = vld [vmem:[%s396 + $0x4] sm:$0xf]
        %v433 = vld [vmem:[%s396 + $0x8] sm:$0xf]
        %v434 = vld [vmem:[%s396 + $0xc] sm:$0xf]
        %v435 = vld [vmem:[%s396 + $0x10] sm:$0xf]
        %v436 = vld [vmem:[%s396 + $0x14] sm:$0xf]
        %v437 = vld [vmem:[%s396 + $0x18] sm:$0xf]
        %v438 = vld [vmem:[%s396 + $0x1c] sm:$0xf]
        %v439 = vld [vmem:[%s396 + $0x20] sm:$0xf]
        %v440 = vld [vmem:[%s396 + $0x24] sm:$0xf]
        %v441 = vld [vmem:[%s1] sm:$0xff]
        %v442 = vld [vmem:[%s1 + $0x8] sm:$0xf]
        %v443 = vld [vmem:[%s1 + $0xc] sm:$0xff]
        %v444 = vld [vmem:[%s1 + $0x14] sm:$0xf]
        %v445 = vld [vmem:[%s1 + $0x18] sm:$0xff]
        %v446 = vld [vmem:[%s1 + $0x20] sm:$0xf]
        %s447 = scalar_lea.vmem %s396, 48 [#allocation2]
        %v448 = vld [vmem:[%s447] sm:$0xf]
        %v449 = vld [vmem:[%s447 + $0x4] sm:$0xf]
        %v450 = vld [vmem:[%s447 + $0x8] sm:$0xf]
        %v451 = vld [vmem:[%s447 + $0xc] sm:$0xf]
        %v452 = vld [vmem:[%s447 + $0x10] sm:$0xf]
        %v453 = vld [vmem:[%s447 + $0x14] sm:$0xf]
        %v454 = vld [vmem:[%s447 + $0x18] sm:$0xf]
        %v455 = vld [vmem:[%s447 + $0x1c] sm:$0xf]
        %v456 = vld [vmem:[%s447 + $0x20] sm:$0xf]
        %v457 = vld [vmem:[%s447 + $0x24] sm:$0xf]
        %s458 = scalar_lea.vmem %s1, 36
        %v459 = vld [vmem:[%s458] sm:$0xff]
        %v460 = vld [vmem:[%s458 + $0x8] sm:$0xf]
        %v461 = vld [vmem:[%s458 + $0xc] sm:$0xff]
        %v462 = vld [vmem:[%s458 + $0x14] sm:$0xf]
        %v463 = vld [vmem:[%s458 + $0x18] sm:$0xff]
        %v464 = vld [vmem:[%s458 + $0x20] sm:$0xf]
        %v475 = vunpack.c.l.b16 %v448
        %v476 = vunpack.c.l.b16 %v449
        %v477 = vunpack.c.l.b16 %v450
        %v478 = vunpack.c.l.b16 %v451
        %v479 = vunpack.c.l.b16 %v452
        %v480 = vunpack.c.l.b16 %v453
        %v481 = vunpack.c.l.b16 %v454
        %v482 = vunpack.c.l.b16 %v455
        %v483 = vunpack.c.l.b16 %v456
        %v484 = vunpack.c.l.b16 %v457
        %v485 = vpack.c.b16 %v476, %v475
        %v486 = vpack.c.b16 %v478, %v477
        %v487 = vpack.c.b16 %v480, %v479
        %v488 = vpack.c.b16 %v482, %v481
        %v489 = vpack.c.b16 %v484, %v483
        %v496 = vunpack.c.l.b16 %v459
        %v497 = vunpack.c.h.b16 %v459
        %v498 = vunpack.c.l.b16 %v460
        %v499 = vunpack.c.l.b16 %v461
        %v500 = vunpack.c.h.b16 %v461
        %v501 = vunpack.c.l.b16 %v462
        %v502 = vunpack.c.l.b16 %v463
        %v503 = vunpack.c.h.b16 %v463
        %v504 = vunpack.c.l.b16 %v464
        %v505 = vpack.c.b16 %v499, %v496
        %v506 = vpack.c.b16 %v500, %v497
        %v507 = vpack.c.b16 %v501, %v498
        %v508 = vpack.c.b16 %v502, %v502
        %v509 = vpack.c.b16 %v503, %v503
        %v510 = vpack.c.b16 %v504, %v504
        %vm514 = vcmask 195584
        %v516 = vsel %vm514, %v485, 0
        %v519 = vsel %vm514, %v486, 0
        %v522 = vsel %vm514, %v487, 0
        %v525 = vsel %vm514, %v488, 0
        %v528 = vsel %vm514, %v489, 0
        %vm530 = vcmask 1043456
        %v532 = vsel %vm530, %v508, 0
        %v535 = vsel %vm530, %v509, 0
        %v538 = vsel %vm530, %v510, 0
        %540 = vmatpush.bf16.msra.mxu0 0
        %541 = vmatpush.bf16.msra.mxu0 0
        %542 = vmatpush.bf16.msra.mxu0 0
        %543 = vmatpush.bf16.msra.mxu0 0
        %544 = vmatpush.bf16.msra.mxu0 0
        %545 = vmatpush.bf16.msra.mxu0 0
        %546 = vmatpush.bf16.msra.mxu0 %v532
        %547 = vmatpush.bf16.msra.mxu0 %v505
        %548 = vmatmul.bf16.gmra.mxu0 %v516
        %v549 = vpop.f32.mrf.mxu0
        %v550 = vadd.f32 0.0, %v549
        %v551 = vpop.f32.mrf.mxu0
        %v552 = vadd.f32 0.0, %v551
        %553 = vmatmul.bf16.gmra.mxu0 %v519
        %v554 = vpop.f32.mrf.mxu0
        %v555 = vadd.f32 0.0, %v554
        %v556 = vpop.f32.mrf.mxu0
        %v557 = vadd.f32 0.0, %v556
        %558 = vmatmul.bf16.gmra.mxu0 %v522
        %v559 = vpop.f32.mrf.mxu0
        %v560 = vadd.f32 0.0, %v559
        %v561 = vpop.f32.mrf.mxu0
        %v562 = vadd.f32 0.0, %v561
        %563 = vmatmul.bf16.gmra.mxu0 %v525
        %v564 = vpop.f32.mrf.mxu0
        %v565 = vadd.f32 0.0, %v564
        %v566 = vpop.f32.mrf.mxu0
        %v567 = vadd.f32 0.0, %v566
        %568 = vmatmul.bf16.gmra.mxu0 %v528
        %v569 = vpop.f32.mrf.mxu0
        %v570 = vadd.f32 0.0, %v569
        %v571 = vpop.f32.mrf.mxu0
        %v572 = vadd.f32 0.0, %v571
        %573 = vdwg.mxu0
        %574 = vmatpush.bf16.msra.mxu0 0
        %575 = vmatpush.bf16.msra.mxu0 0
        %576 = vmatpush.bf16.msra.mxu0 0
        %577 = vmatpush.bf16.msra.mxu0 0
        %578 = vmatpush.bf16.msra.mxu0 0
        %579 = vmatpush.bf16.msra.mxu0 0
        %580 = vmatpush.bf16.msra.mxu0 %v535
        %581 = vmatpush.bf16.msra.mxu0 %v506
        %582 = vmatmul.bf16.gmra.mxu0 %v516
        %v583 = vpop.f32.mrf.mxu0
        %v584 = vadd.f32 0.0, %v583
        %v585 = vpop.f32.mrf.mxu0
        %v586 = vadd.f32 0.0, %v585
        %587 = vmatmul.bf16.gmra.mxu0 %v519
        %v588 = vpop.f32.mrf.mxu0
        %v589 = vadd.f32 0.0, %v588
        %v590 = vpop.f32.mrf.mxu0
        %v591 = vadd.f32 0.0, %v590
        %592 = vmatmul.bf16.gmra.mxu0 %v522
        %v593 = vpop.f32.mrf.mxu0
        %v594 = vadd.f32 0.0, %v593
        %v595 = vpop.f32.mrf.mxu0
        %v596 = vadd.f32 0.0, %v595
        %597 = vmatmul.bf16.gmra.mxu0 %v525
        %v598 = vpop.f32.mrf.mxu0
        %v599 = vadd.f32 0.0, %v598
        %v600 = vpop.f32.mrf.mxu0
        %v601 = vadd.f32 0.0, %v600
        %602 = vmatmul.bf16.gmra.mxu0 %v528
        %v603 = vpop.f32.mrf.mxu0
        %v604 = vadd.f32 0.0, %v603
        %v605 = vpop.f32.mrf.mxu0
        %v606 = vadd.f32 0.0, %v605
        %607 = vdwg.mxu0
        %608 = vmatpush.bf16.msra.mxu0 0
        %609 = vmatpush.bf16.msra.mxu0 0
        %610 = vmatpush.bf16.msra.mxu0 0
        %611 = vmatpush.bf16.msra.mxu0 0
        %612 = vmatpush.bf16.msra.mxu0 0
        %613 = vmatpush.bf16.msra.mxu0 0
        %614 = vmatpush.bf16.msra.mxu0 %v538
        %615 = vmatpush.bf16.msra.mxu0 %v507
        %616 = vmatmul.bf16.gmra.mxu0 %v516
        %v617 = vpop.f32.mrf.mxu0
        %v618 = vadd.f32 0.0, %v617
        %v619 = vpop.f32.mrf.mxu0
        %v620 = vadd.f32 0.0, %v619
        %621 = vmatmul.bf16.gmra.mxu0 %v519
        %v622 = vpop.f32.mrf.mxu0
        %v623 = vadd.f32 0.0, %v622
        %v624 = vpop.f32.mrf.mxu0
        %v625 = vadd.f32 0.0, %v624
        %626 = vmatmul.bf16.gmra.mxu0 %v522
        %v627 = vpop.f32.mrf.mxu0
        %v628 = vadd.f32 0.0, %v627
        %v629 = vpop.f32.mrf.mxu0
        %v630 = vadd.f32 0.0, %v629
        %631 = vmatmul.bf16.gmra.mxu0 %v525
        %v632 = vpop.f32.mrf.mxu0
        %v633 = vadd.f32 0.0, %v632
        %v634 = vpop.f32.mrf.mxu0
        %v635 = vadd.f32 0.0, %v634
        %636 = vmatmul.bf16.gmra.mxu0 %v528
        %v637 = vpop.f32.mrf.mxu0
        %v638 = vadd.f32 0.0, %v637
        %v639 = vpop.f32.mrf.mxu0
        %v640 = vadd.f32 0.0, %v639
        %641 = vdwg.mxu0
        %v652 = vunpack.c.l.b16 %v431
        %v653 = vunpack.c.l.b16 %v432
        %v654 = vunpack.c.l.b16 %v433
        %v655 = vunpack.c.l.b16 %v434
        %v656 = vunpack.c.l.b16 %v435
        %v657 = vunpack.c.l.b16 %v436
        %v658 = vunpack.c.l.b16 %v437
        %v659 = vunpack.c.l.b16 %v438
        %v660 = vunpack.c.l.b16 %v439
        %v661 = vunpack.c.l.b16 %v440
        %v662 = vpack.c.b16 %v653, %v652
        %v663 = vpack.c.b16 %v655, %v654
        %v664 = vpack.c.b16 %v657, %v656
        %v665 = vpack.c.b16 %v659, %v658
        %v666 = vpack.c.b16 %v661, %v660
        %v673 = vunpack.c.l.b16 %v441
        %v674 = vunpack.c.h.b16 %v441
        %v675 = vunpack.c.l.b16 %v442
        %v676 = vunpack.c.l.b16 %v443
        %v677 = vunpack.c.h.b16 %v443
        %v678 = vunpack.c.l.b16 %v444
        %v679 = vunpack.c.l.b16 %v445
        %v680 = vunpack.c.h.b16 %v445
        %v681 = vunpack.c.l.b16 %v446
        %v682 = vpack.c.b16 %v676, %v673
        %v683 = vpack.c.b16 %v677, %v674
        %v684 = vpack.c.b16 %v678, %v675
        %v685 = vpack.c.b16 %v679, %v679
        %v686 = vpack.c.b16 %v680, %v680
        %v687 = vpack.c.b16 %v681, %v681
        %v692 = vsel %vm514, %v662, 0
        %v695 = vsel %vm514, %v663, 0
        %v698 = vsel %vm514, %v664, 0
        %v701 = vsel %vm514, %v665, 0
        %v704 = vsel %vm514, %v666, 0
        %v707 = vsel %vm530, %v685, 0
        %v710 = vsel %vm530, %v686, 0
        %v713 = vsel %vm530, %v687, 0
        %715 = vmatpush.bf16.msra.mxu0 0
        %716 = vmatpush.bf16.msra.mxu0 0
        %717 = vmatpush.bf16.msra.mxu0 0
        %718 = vmatpush.bf16.msra.mxu0 0
        %719 = vmatpush.bf16.msra.mxu0 0
        %720 = vmatpush.bf16.msra.mxu0 0
        %721 = vmatpush.bf16.msra.mxu0 %v707
        %722 = vmatpush.bf16.msra.mxu0 %v682
        %723 = vmatmul.bf16.gmra.mxu0 %v692
        %v724 = vpop.f32.mrf.mxu0
        %v725 = vadd.f32 %v550, %v724
        %v726 = vpop.f32.mrf.mxu0
        %v727 = vadd.f32 %v552, %v726
        %728 = vmatmul.bf16.gmra.mxu0 %v695
        %v729 = vpop.f32.mrf.mxu0
        %v730 = vadd.f32 %v555, %v729
        %v731 = vpop.f32.mrf.mxu0
        %v732 = vadd.f32 %v557, %v731
        %733 = vmatmul.bf16.gmra.mxu0 %v698
        %v734 = vpop.f32.mrf.mxu0
        %v735 = vadd.f32 %v560, %v734
        %v736 = vpop.f32.mrf.mxu0
        %v737 = vadd.f32 %v562, %v736
        %738 = vmatmul.bf16.gmra.mxu0 %v701
        %v739 = vpop.f32.mrf.mxu0
        %v740 = vadd.f32 %v565, %v739
        %v741 = vpop.f32.mrf.mxu0
        %v742 = vadd.f32 %v567, %v741
        %743 = vmatmul.bf16.gmra.mxu0 %v704
        %v744 = vpop.f32.mrf.mxu0
        %v745 = vadd.f32 %v570, %v744
        %v746 = vpop.f32.mrf.mxu0
        %v747 = vadd.f32 %v572, %v746
        %748 = vdwg.mxu0
        %749 = vmatpush.bf16.msra.mxu0 0
        %750 = vmatpush.bf16.msra.mxu0 0
        %751 = vmatpush.bf16.msra.mxu0 0
        %752 = vmatpush.bf16.msra.mxu0 0
        %753 = vmatpush.bf16.msra.mxu0 0
        %754 = vmatpush.bf16.msra.mxu0 0
        %755 = vmatpush.bf16.msra.mxu0 %v710
        %756 = vmatpush.bf16.msra.mxu0 %v683
        %757 = vmatmul.bf16.gmra.mxu0 %v692
        %v758 = vpop.f32.mrf.mxu0
        %v759 = vadd.f32 %v584, %v758
        %v760 = vpop.f32.mrf.mxu0
        %v761 = vadd.f32 %v586, %v760
        %762 = vmatmul.bf16.gmra.mxu0 %v695
        %v763 = vpop.f32.mrf.mxu0
        %v764 = vadd.f32 %v589, %v763
        %v765 = vpop.f32.mrf.mxu0
        %v766 = vadd.f32 %v591, %v765
        %767 = vmatmul.bf16.gmra.mxu0 %v698
        %v768 = vpop.f32.mrf.mxu0
        %v769 = vadd.f32 %v594, %v768
        %v770 = vpop.f32.mrf.mxu0
        %v771 = vadd.f32 %v596, %v770
        %772 = vmatmul.bf16.gmra.mxu0 %v701
        %v773 = vpop.f32.mrf.mxu0
        %v774 = vadd.f32 %v599, %v773
        %v775 = vpop.f32.mrf.mxu0
        %v776 = vadd.f32 %v601, %v775
        %777 = vmatmul.bf16.gmra.mxu0 %v704
        %v778 = vpop.f32.mrf.mxu0
        %v779 = vadd.f32 %v604, %v778
        %v780 = vpop.f32.mrf.mxu0
        %v781 = vadd.f32 %v606, %v780
        %782 = vdwg.mxu0
        %783 = vmatpush.bf16.msra.mxu0 0
        %784 = vmatpush.bf16.msra.mxu0 0
        %785 = vmatpush.bf16.msra.mxu0 0
        %786 = vmatpush.bf16.msra.mxu0 0
        %787 = vmatpush.bf16.msra.mxu0 0
        %788 = vmatpush.bf16.msra.mxu0 0
        %789 = vmatpush.bf16.msra.mxu0 %v713
        %790 = vmatpush.bf16.msra.mxu0 %v684
        %791 = vmatmul.bf16.gmra.mxu0 %v692
        %v792 = vpop.f32.mrf.mxu0
        %v793 = vadd.f32 %v618, %v792
        %v794 = vpop.f32.mrf.mxu0
        %v795 = vadd.f32 %v620, %v794
        %796 = vmatmul.bf16.gmra.mxu0 %v695
        %v797 = vpop.f32.mrf.mxu0
        %v798 = vadd.f32 %v623, %v797
        %v799 = vpop.f32.mrf.mxu0
        %v800 = vadd.f32 %v625, %v799
        %801 = vmatmul.bf16.gmra.mxu0 %v698
        %v802 = vpop.f32.mrf.mxu0
        %v803 = vadd.f32 %v628, %v802
        %v804 = vpop.f32.mrf.mxu0
        %v805 = vadd.f32 %v630, %v804
        %806 = vmatmul.bf16.gmra.mxu0 %v701
        %v807 = vpop.f32.mrf.mxu0
        %v808 = vadd.f32 %v633, %v807
        %v809 = vpop.f32.mrf.mxu0
        %v810 = vadd.f32 %v635, %v809
        %811 = vmatmul.bf16.gmra.mxu0 %v704
        %v812 = vpop.f32.mrf.mxu0
        %v813 = vadd.f32 %v638, %v812
        %v814 = vpop.f32.mrf.mxu0
        %v815 = vadd.f32 %v640, %v814
        %816 = vdwg.mxu0
        %v817 = vld [vmem:[%s396 + $0x4] sm:$0xf]
        %v818 = vld [vmem:[%s396 + $0x8] sm:$0xf]
        %v819 = vld [vmem:[%s396 + $0xc] sm:$0xf]
        %v820 = vld [vmem:[%s396 + $0x10] sm:$0xf]
        %v821 = vld [vmem:[%s396 + $0x14] sm:$0xf]
        %v822 = vld [vmem:[%s396 + $0x18] sm:$0xf]
        %v823 = vld [vmem:[%s396 + $0x1c] sm:$0xf]
        %v824 = vld [vmem:[%s396 + $0x20] sm:$0xf]
        %v825 = vld [vmem:[%s396 + $0x24] sm:$0xf]
        %v826 = vld [vmem:[%s396 + $0x28] sm:$0xf]
        %s827 = scalar_lea.vmem %s1, 72
        %v828 = vld [vmem:[%s827] sm:$0xff]
        %v829 = vld [vmem:[%s827 + $0x8] sm:$0xf]
        %v830 = vld [vmem:[%s827 + $0xc] sm:$0xff]
        %v831 = vld [vmem:[%s827 + $0x14] sm:$0xf]
        %v832 = vld [vmem:[%s827 + $0x18] sm:$0xff]
        %v833 = vld [vmem:[%s827 + $0x20] sm:$0xf]
        %v844 = vunpack.c.l.b16 %v817
        %v845 = vunpack.c.l.b16 %v818
        %v846 = vunpack.c.l.b16 %v819
        %v847 = vunpack.c.l.b16 %v820
        %v848 = vunpack.c.l.b16 %v821
        %v849 = vunpack.c.l.b16 %v822
        %v850 = vunpack.c.l.b16 %v823
        %v851 = vunpack.c.l.b16 %v824
        %v852 = vunpack.c.l.b16 %v825
        %v853 = vunpack.c.l.b16 %v826
        %v854 = vpack.c.b16 %v845, %v844
        %v855 = vpack.c.b16 %v847, %v846
        %v856 = vpack.c.b16 %v849, %v848
        %v857 = vpack.c.b16 %v851, %v850
        %v858 = vpack.c.b16 %v853, %v852
        %v865 = vunpack.c.l.b16 %v828
        %v866 = vunpack.c.h.b16 %v828
        %v867 = vunpack.c.l.b16 %v829
        %v868 = vunpack.c.l.b16 %v830
        %v869 = vunpack.c.h.b16 %v830
        %v870 = vunpack.c.l.b16 %v831
        %v871 = vunpack.c.l.b16 %v832
        %v872 = vunpack.c.h.b16 %v832
        %v873 = vunpack.c.l.b16 %v833
        %v874 = vpack.c.b16 %v868, %v865
        %v875 = vpack.c.b16 %v869, %v866
        %v876 = vpack.c.b16 %v870, %v867
        %v877 = vpack.c.b16 %v871, %v871
        %v878 = vpack.c.b16 %v872, %v872
        %v879 = vpack.c.b16 %v873, %v873
        %v884 = vsel %vm514, %v854, 0
        %v887 = vsel %vm514, %v855, 0
        %v890 = vsel %vm514, %v856, 0
        %v893 = vsel %vm514, %v857, 0
        %v896 = vsel %vm514, %v858, 0
        %v899 = vsel %vm530, %v877, 0
        %v902 = vsel %vm530, %v878, 0
        %v905 = vsel %vm530, %v879, 0
        %907 = vmatpush.bf16.msra.mxu0 0
        %908 = vmatpush.bf16.msra.mxu0 0
        %909 = vmatpush.bf16.msra.mxu0 0
        %910 = vmatpush.bf16.msra.mxu0 0
        %911 = vmatpush.bf16.msra.mxu0 0
        %912 = vmatpush.bf16.msra.mxu0 0
        %913 = vmatpush.bf16.msra.mxu0 %v899
        %914 = vmatpush.bf16.msra.mxu0 %v874
        %915 = vmatmul.bf16.gmra.mxu0 %v884
        %v916 = vpop.f32.mrf.mxu0
        %v917 = vadd.f32 0.0, %v916
        %v918 = vpop.f32.mrf.mxu0
        %v919 = vadd.f32 0.0, %v918
        %920 = vmatmul.bf16.gmra.mxu0 %v887
        %v921 = vpop.f32.mrf.mxu0
        %v922 = vadd.f32 0.0, %v921
        %v923 = vpop.f32.mrf.mxu0
        %v924 = vadd.f32 0.0, %v923
        %925 = vmatmul.bf16.gmra.mxu0 %v890
        %v926 = vpop.f32.mrf.mxu0
        %v927 = vadd.f32 0.0, %v926
        %v928 = vpop.f32.mrf.mxu0
        %v929 = vadd.f32 0.0, %v928
        %930 = vmatmul.bf16.gmra.mxu0 %v893
        %v931 = vpop.f32.mrf.mxu0
        %v932 = vadd.f32 0.0, %v931
        %v933 = vpop.f32.mrf.mxu0
        %v934 = vadd.f32 0.0, %v933
        %935 = vmatmul.bf16.gmra.mxu0 %v896
        %v936 = vpop.f32.mrf.mxu0
        %v937 = vadd.f32 0.0, %v936
        %v938 = vpop.f32.mrf.mxu0
        %v939 = vadd.f32 0.0, %v938
        %940 = vdwg.mxu0
        %941 = vmatpush.bf16.msra.mxu0 0
        %942 = vmatpush.bf16.msra.mxu0 0
        %943 = vmatpush.bf16.msra.mxu0 0
        %944 = vmatpush.bf16.msra.mxu0 0
        %945 = vmatpush.bf16.msra.mxu0 0
        %946 = vmatpush.bf16.msra.mxu0 0
        %947 = vmatpush.bf16.msra.mxu0 %v902
        %948 = vmatpush.bf16.msra.mxu0 %v875
        %949 = vmatmul.bf16.gmra.mxu0 %v884
        %v950 = vpop.f32.mrf.mxu0
        %v951 = vadd.f32 0.0, %v950
        %v952 = vpop.f32.mrf.mxu0
        %v953 = vadd.f32 0.0, %v952
        %954 = vmatmul.bf16.gmra.mxu0 %v887
        %v955 = vpop.f32.mrf.mxu0
        %v956 = vadd.f32 0.0, %v955
        %v957 = vpop.f32.mrf.mxu0
        %v958 = vadd.f32 0.0, %v957
        %959 = vmatmul.bf16.gmra.mxu0 %v890
        %v960 = vpop.f32.mrf.mxu0
        %v961 = vadd.f32 0.0, %v960
        %v962 = vpop.f32.mrf.mxu0
        %v963 = vadd.f32 0.0, %v962
        %964 = vmatmul.bf16.gmra.mxu0 %v893
        %v965 = vpop.f32.mrf.mxu0
        %v966 = vadd.f32 0.0, %v965
        %v967 = vpop.f32.mrf.mxu0
        %v968 = vadd.f32 0.0, %v967
        %969 = vmatmul.bf16.gmra.mxu0 %v896
        %v970 = vpop.f32.mrf.mxu0
        %v971 = vadd.f32 0.0, %v970
        %v972 = vpop.f32.mrf.mxu0
        %v973 = vadd.f32 0.0, %v972
        %974 = vdwg.mxu0
        %975 = vmatpush.bf16.msra.mxu0 0
        %976 = vmatpush.bf16.msra.mxu0 0
        %977 = vmatpush.bf16.msra.mxu0 0
        %978 = vmatpush.bf16.msra.mxu0 0
        %979 = vmatpush.bf16.msra.mxu0 0
        %980 = vmatpush.bf16.msra.mxu0 0
        %981 = vmatpush.bf16.msra.mxu0 %v905
        %982 = vmatpush.bf16.msra.mxu0 %v876
        %983 = vmatmul.bf16.gmra.mxu0 %v884
        %v984 = vpop.f32.mrf.mxu0
        %v985 = vadd.f32 0.0, %v984
        %v986 = vpop.f32.mrf.mxu0
        %v987 = vadd.f32 0.0, %v986
        %988 = vmatmul.bf16.gmra.mxu0 %v887
        %v989 = vpop.f32.mrf.mxu0
        %v990 = vadd.f32 0.0, %v989
        %v991 = vpop.f32.mrf.mxu0
        %v992 = vadd.f32 0.0, %v991
        %993 = vmatmul.bf16.gmra.mxu0 %v890
        %v994 = vpop.f32.mrf.mxu0
        %v995 = vadd.f32 0.0, %v994
        %v996 = vpop.f32.mrf.mxu0
        %v997 = vadd.f32 0.0, %v996
        %998 = vmatmul.bf16.gmra.mxu0 %v893
        %v999 = vpop.f32.mrf.mxu0
        %v1000 = vadd.f32 0.0, %v999
        %v1001 = vpop.f32.mrf.mxu0
        %v1002 = vadd.f32 0.0, %v1001
        %1003 = vmatmul.bf16.gmra.mxu0 %v896
        %v1004 = vpop.f32.mrf.mxu0
        %v1005 = vadd.f32 0.0, %v1004
        %v1006 = vpop.f32.mrf.mxu0
        %v1007 = vadd.f32 0.0, %v1006
        %1008 = vdwg.mxu0
        %v1009 = vadd.f32 %v725, %v917
        %v1010 = vadd.f32 %v759, %v951
        %v1011 = vadd.f32 %v793, %v985
        %v1012 = vadd.f32 %v727, %v919
        %v1013 = vadd.f32 %v761, %v953
        %v1014 = vadd.f32 %v795, %v987
        %v1015 = vadd.f32 %v730, %v922
        %v1016 = vadd.f32 %v764, %v956
        %v1017 = vadd.f32 %v798, %v990
        %v1018 = vadd.f32 %v732, %v924
        %v1019 = vadd.f32 %v766, %v958
        %v1020 = vadd.f32 %v800, %v992
        %v1021 = vadd.f32 %v735, %v927
        %v1022 = vadd.f32 %v769, %v961
        %v1023 = vadd.f32 %v803, %v995
        %v1024 = vadd.f32 %v737, %v929
        %v1025 = vadd.f32 %v771, %v963
        %v1026 = vadd.f32 %v805, %v997
        %v1027 = vadd.f32 %v740, %v932
        %v1028 = vadd.f32 %v774, %v966
        %v1029 = vadd.f32 %v808, %v1000
        %v1030 = vadd.f32 %v742, %v934
        %v1031 = vadd.f32 %v776, %v968
        %v1032 = vadd.f32 %v810, %v1002
        %v1033 = vadd.f32 %v745, %v937
        %v1034 = vadd.f32 %v779, %v971
        %v1035 = vadd.f32 %v813, %v1005
        %v1036 = vadd.f32 %v747, %v939
        %v1037 = vadd.f32 %v781, %v973
        %v1038 = vadd.f32 %v815, %v1007
        %v1039 = vld [vmem:[%s447 + $0x4] sm:$0xf]
        %v1040 = vld [vmem:[%s447 + $0x8] sm:$0xf]
        %v1041 = vld [vmem:[%s447 + $0xc] sm:$0xf]
        %v1042 = vld [vmem:[%s447 + $0x10] sm:$0xf]
        %v1043 = vld [vmem:[%s447 + $0x14] sm:$0xf]
        %v1044 = vld [vmem:[%s447 + $0x18] sm:$0xf]
        %v1045 = vld [vmem:[%s447 + $0x1c] sm:$0xf]
        %v1046 = vld [vmem:[%s447 + $0x20] sm:$0xf]
        %v1047 = vld [vmem:[%s447 + $0x24] sm:$0xf]
        %v1048 = vld [vmem:[%s447 + $0x28] sm:$0xf]
        %s1049 = scalar_lea.vmem %s1, 108
        %v1050 = vld [vmem:[%s1049] sm:$0xff]
        %v1051 = vld [vmem:[%s1049 + $0x8] sm:$0xf]
        %v1052 = vld [vmem:[%s1049 + $0xc] sm:$0xff]
        %v1053 = vld [vmem:[%s1049 + $0x14] sm:$0xf]
        %v1054 = vld [vmem:[%s1049 + $0x18] sm:$0xff]
        %v1055 = vld [vmem:[%s1049 + $0x20] sm:$0xf]
        %v1066 = vunpack.c.l.b16 %v1039
        %v1067 = vunpack.c.l.b16 %v1040
        %v1068 = vunpack.c.l.b16 %v1041
        %v1069 = vunpack.c.l.b16 %v1042
        %v1070 = vunpack.c.l.b16 %v1043
        %v1071 = vunpack.c.l.b16 %v1044
        %v1072 = vunpack.c.l.b16 %v1045
        %v1073 = vunpack.c.l.b16 %v1046
        %v1074 = vunpack.c.l.b16 %v1047
        %v1075 = vunpack.c.l.b16 %v1048
        %v1076 = vpack.c.b16 %v1067, %v1066
        %v1077 = vpack.c.b16 %v1069, %v1068
        %v1078 = vpack.c.b16 %v1071, %v1070
        %v1079 = vpack.c.b16 %v1073, %v1072
        %v1080 = vpack.c.b16 %v1075, %v1074
        %v1087 = vunpack.c.l.b16 %v1050
        %v1088 = vunpack.c.h.b16 %v1050
        %v1089 = vunpack.c.l.b16 %v1051
        %v1090 = vunpack.c.l.b16 %v1052
        %v1091 = vunpack.c.h.b16 %v1052
        %v1092 = vunpack.c.l.b16 %v1053
        %v1093 = vunpack.c.l.b16 %v1054
        %v1094 = vunpack.c.h.b16 %v1054
        %v1095 = vunpack.c.l.b16 %v1055
        %v1096 = vpack.c.b16 %v1090, %v1087
        %v1097 = vpack.c.b16 %v1091, %v1088
        %v1098 = vpack.c.b16 %v1092, %v1089
        %v1099 = vpack.c.b16 %v1093, %v1093
        %v1100 = vpack.c.b16 %v1094, %v1094
        %v1101 = vpack.c.b16 %v1095, %v1095
        %v1106 = vsel %vm514, %v1076, 0
        %v1109 = vsel %vm514, %v1077, 0
        %v1112 = vsel %vm514, %v1078, 0
        %v1115 = vsel %vm514, %v1079, 0
        %v1118 = vsel %vm514, %v1080, 0
        %v1121 = vsel %vm530, %v1099, 0
        %v1124 = vsel %vm530, %v1100, 0
        %v1127 = vsel %vm530, %v1101, 0
        %1129 = vmatpush.bf16.msra.mxu0 0
        %1130 = vmatpush.bf16.msra.mxu0 0
        %1131 = vmatpush.bf16.msra.mxu0 0
        %1132 = vmatpush.bf16.msra.mxu0 0
        %1133 = vmatpush.bf16.msra.mxu0 0
        %1134 = vmatpush.bf16.msra.mxu0 0
        %1135 = vmatpush.bf16.msra.mxu0 %v1121
        %1136 = vmatpush.bf16.msra.mxu0 %v1096
        %1137 = vmatmul.bf16.gmra.mxu0 %v1106
        %v1138 = vpop.f32.mrf.mxu0
        %v1139 = vadd.f32 0.0, %v1138
        %v1140 = vpop.f32.mrf.mxu0
        %v1141 = vadd.f32 0.0, %v1140
        %1142 = vmatmul.bf16.gmra.mxu0 %v1109
        %v1143 = vpop.f32.mrf.mxu0
        %v1144 = vadd.f32 0.0, %v1143
        %v1145 = vpop.f32.mrf.mxu0
        %v1146 = vadd.f32 0.0, %v1145
        %1147 = vmatmul.bf16.gmra.mxu0 %v1112
        %v1148 = vpop.f32.mrf.mxu0
        %v1149 = vadd.f32 0.0, %v1148
        %v1150 = vpop.f32.mrf.mxu0
        %v1151 = vadd.f32 0.0, %v1150
        %1152 = vmatmul.bf16.gmra.mxu0 %v1115
        %v1153 = vpop.f32.mrf.mxu0
        %v1154 = vadd.f32 0.0, %v1153
        %v1155 = vpop.f32.mrf.mxu0
        %v1156 = vadd.f32 0.0, %v1155
        %1157 = vmatmul.bf16.gmra.mxu0 %v1118
        %v1158 = vpop.f32.mrf.mxu0
        %v1159 = vadd.f32 0.0, %v1158
        %v1160 = vpop.f32.mrf.mxu0
        %v1161 = vadd.f32 0.0, %v1160
        %1162 = vdwg.mxu0
        %1163 = vmatpush.bf16.msra.mxu0 0
        %1164 = vmatpush.bf16.msra.mxu0 0
        %1165 = vmatpush.bf16.msra.mxu0 0
        %1166 = vmatpush.bf16.msra.mxu0 0
        %1167 = vmatpush.bf16.msra.mxu0 0
        %1168 = vmatpush.bf16.msra.mxu0 0
        %1169 = vmatpush.bf16.msra.mxu0 %v1124
        %1170 = vmatpush.bf16.msra.mxu0 %v1097
        %1171 = vmatmul.bf16.gmra.mxu0 %v1106
        %v1172 = vpop.f32.mrf.mxu0
        %v1173 = vadd.f32 0.0, %v1172
        %v1174 = vpop.f32.mrf.mxu0
        %v1175 = vadd.f32 0.0, %v1174
        %1176 = vmatmul.bf16.gmra.mxu0 %v1109
        %v1177 = vpop.f32.mrf.mxu0
        %v1178 = vadd.f32 0.0, %v1177
        %v1179 = vpop.f32.mrf.mxu0
        %v1180 = vadd.f32 0.0, %v1179
        %1181 = vmatmul.bf16.gmra.mxu0 %v1112
        %v1182 = vpop.f32.mrf.mxu0
        %v1183 = vadd.f32 0.0, %v1182
        %v1184 = vpop.f32.mrf.mxu0
        %v1185 = vadd.f32 0.0, %v1184
        %1186 = vmatmul.bf16.gmra.mxu0 %v1115
        %v1187 = vpop.f32.mrf.mxu0
        %v1188 = vadd.f32 0.0, %v1187
        %v1189 = vpop.f32.mrf.mxu0
        %v1190 = vadd.f32 0.0, %v1189
        %1191 = vmatmul.bf16.gmra.mxu0 %v1118
        %v1192 = vpop.f32.mrf.mxu0
        %v1193 = vadd.f32 0.0, %v1192
        %v1194 = vpop.f32.mrf.mxu0
        %v1195 = vadd.f32 0.0, %v1194
        %1196 = vdwg.mxu0
        %1197 = vmatpush.bf16.msra.mxu0 0
        %1198 = vmatpush.bf16.msra.mxu0 0
        %1199 = vmatpush.bf16.msra.mxu0 0
        %1200 = vmatpush.bf16.msra.mxu0 0
        %1201 = vmatpush.bf16.msra.mxu0 0
        %1202 = vmatpush.bf16.msra.mxu0 0
        %1203 = vmatpush.bf16.msra.mxu0 %v1127
        %1204 = vmatpush.bf16.msra.mxu0 %v1098
        %1205 = vmatmul.bf16.gmra.mxu0 %v1106
        %v1206 = vpop.f32.mrf.mxu0
        %v1207 = vadd.f32 0.0, %v1206
        %v1208 = vpop.f32.mrf.mxu0
        %v1209 = vadd.f32 0.0, %v1208
        %1210 = vmatmul.bf16.gmra.mxu0 %v1109
        %v1211 = vpop.f32.mrf.mxu0
        %v1212 = vadd.f32 0.0, %v1211
        %v1213 = vpop.f32.mrf.mxu0
        %v1214 = vadd.f32 0.0, %v1213
        %1215 = vmatmul.bf16.gmra.mxu0 %v1112
        %v1216 = vpop.f32.mrf.mxu0
        %v1217 = vadd.f32 0.0, %v1216
        %v1218 = vpop.f32.mrf.mxu0
        %v1219 = vadd.f32 0.0, %v1218
        %1220 = vmatmul.bf16.gmra.mxu0 %v1115
        %v1221 = vpop.f32.mrf.mxu0
        %v1222 = vadd.f32 0.0, %v1221
        %v1223 = vpop.f32.mrf.mxu0
        %v1224 = vadd.f32 0.0, %v1223
        %1225 = vmatmul.bf16.gmra.mxu0 %v1118
        %v1226 = vpop.f32.mrf.mxu0
        %v1227 = vadd.f32 0.0, %v1226
        %v1228 = vpop.f32.mrf.mxu0
        %v1229 = vadd.f32 0.0, %v1228
        %1230 = vdwg.mxu0
        %v1231 = vadd.f32 %v1009, %v1139
        %v1232 = vadd.f32 %v1010, %v1173
        %v1233 = vadd.f32 %v1011, %v1207
        %v1234 = vadd.f32 %v1012, %v1141
        %v1235 = vadd.f32 %v1013, %v1175
        %v1236 = vadd.f32 %v1014, %v1209
        %v1237 = vadd.f32 %v1015, %v1144
        %v1238 = vadd.f32 %v1016, %v1178
        %v1239 = vadd.f32 %v1017, %v1212
        %v1240 = vadd.f32 %v1018, %v1146
        %v1241 = vadd.f32 %v1019, %v1180
        %v1242 = vadd.f32 %v1020, %v1214
        %v1243 = vadd.f32 %v1021, %v1149
        %v1244 = vadd.f32 %v1022, %v1183
        %v1245 = vadd.f32 %v1023, %v1217
        %v1246 = vadd.f32 %v1024, %v1151
        %v1247 = vadd.f32 %v1025, %v1185
        %v1248 = vadd.f32 %v1026, %v1219
        %v1249 = vadd.f32 %v1027, %v1154
        %v1250 = vadd.f32 %v1028, %v1188
        %v1251 = vadd.f32 %v1029, %v1222
        %v1252 = vadd.f32 %v1030, %v1156
        %v1253 = vadd.f32 %v1031, %v1190
        %v1254 = vadd.f32 %v1032, %v1224
        %v1255 = vadd.f32 %v1033, %v1159
        %v1256 = vadd.f32 %v1034, %v1193
        %v1257 = vadd.f32 %v1035, %v1227
        %v1258 = vadd.f32 %v1036, %v1161
        %v1259 = vadd.f32 %v1037, %v1195
        %v1260 = vadd.f32 %v1038, %v1229
        %v1261 = vld [vmem:[%s396 + $0x8] sm:$0xf]
        %v1262 = vld [vmem:[%s396 + $0xc] sm:$0xf]
        %v1263 = vld [vmem:[%s396 + $0x10] sm:$0xf]
        %v1264 = vld [vmem:[%s396 + $0x14] sm:$0xf]
        %v1265 = vld [vmem:[%s396 + $0x18] sm:$0xf]
        %v1266 = vld [vmem:[%s396 + $0x1c] sm:$0xf]
        %v1267 = vld [vmem:[%s396 + $0x20] sm:$0xf]
        %v1268 = vld [vmem:[%s396 + $0x24] sm:$0xf]
        %v1269 = vld [vmem:[%s396 + $0x28] sm:$0xf]
        %v1270 = vld [vmem:[%s396 + $0x2c] sm:$0xf]
        %s1271 = scalar_lea.vmem %s1, 144
        %v1272 = vld [vmem:[%s1271] sm:$0xff]
        %v1273 = vld [vmem:[%s1271 + $0x8] sm:$0xf]
        %v1274 = vld [vmem:[%s1271 + $0xc] sm:$0xff]
        %v1275 = vld [vmem:[%s1271 + $0x14] sm:$0xf]
        %v1276 = vld [vmem:[%s1271 + $0x18] sm:$0xff]
        %v1277 = vld [vmem:[%s1271 + $0x20] sm:$0xf]
        %v1288 = vunpack.c.l.b16 %v1261
        %v1289 = vunpack.c.l.b16 %v1262
        %v1290 = vunpack.c.l.b16 %v1263
        %v1291 = vunpack.c.l.b16 %v1264
        %v1292 = vunpack.c.l.b16 %v1265
        %v1293 = vunpack.c.l.b16 %v1266
        %v1294 = vunpack.c.l.b16 %v1267
        %v1295 = vunpack.c.l.b16 %v1268
        %v1296 = vunpack.c.l.b16 %v1269
        %v1297 = vunpack.c.l.b16 %v1270
        %v1298 = vpack.c.b16 %v1289, %v1288
        %v1299 = vpack.c.b16 %v1291, %v1290
        %v1300 = vpack.c.b16 %v1293, %v1292
        %v1301 = vpack.c.b16 %v1295, %v1294
        %v1302 = vpack.c.b16 %v1297, %v1296
        %v1309 = vunpack.c.l.b16 %v1272
        %v1310 = vunpack.c.h.b16 %v1272
        %v1311 = vunpack.c.l.b16 %v1273
        %v1312 = vunpack.c.l.b16 %v1274
        %v1313 = vunpack.c.h.b16 %v1274
        %v1314 = vunpack.c.l.b16 %v1275
        %v1315 = vunpack.c.l.b16 %v1276
        %v1316 = vunpack.c.h.b16 %v1276
        %v1317 = vunpack.c.l.b16 %v1277
        %v1318 = vpack.c.b16 %v1312, %v1309
        %v1319 = vpack.c.b16 %v1313, %v1310
        %v1320 = vpack.c.b16 %v1314, %v1311
        %v1321 = vpack.c.b16 %v1315, %v1315
        %v1322 = vpack.c.b16 %v1316, %v1316
        %v1323 = vpack.c.b16 %v1317, %v1317
        %v1328 = vsel %vm514, %v1298, 0
        %v1331 = vsel %vm514, %v1299, 0
        %v1334 = vsel %vm514, %v1300, 0
        %v1337 = vsel %vm514, %v1301, 0
        %v1340 = vsel %vm514, %v1302, 0
        %v1343 = vsel %vm530, %v1321, 0
        %v1346 = vsel %vm530, %v1322, 0
        %v1349 = vsel %vm530, %v1323, 0
        %1351 = vmatpush.bf16.msra.mxu0 0
        %1352 = vmatpush.bf16.msra.mxu0 0
        %1353 = vmatpush.bf16.msra.mxu0 0
        %1354 = vmatpush.bf16.msra.mxu0 0
        %1355 = vmatpush.bf16.msra.mxu0 0
        %1356 = vmatpush.bf16.msra.mxu0 0
        %1357 = vmatpush.bf16.msra.mxu0 %v1343
        %1358 = vmatpush.bf16.msra.mxu0 %v1318
        %1359 = vmatmul.bf16.gmra.mxu0 %v1328
        %v1360 = vpop.f32.mrf.mxu0
        %v1361 = vadd.f32 0.0, %v1360
        %v1362 = vpop.f32.mrf.mxu0
        %v1363 = vadd.f32 0.0, %v1362
        %1364 = vmatmul.bf16.gmra.mxu0 %v1331
        %v1365 = vpop.f32.mrf.mxu0
        %v1366 = vadd.f32 0.0, %v1365
        %v1367 = vpop.f32.mrf.mxu0
        %v1368 = vadd.f32 0.0, %v1367
        %1369 = vmatmul.bf16.gmra.mxu0 %v1334
        %v1370 = vpop.f32.mrf.mxu0
        %v1371 = vadd.f32 0.0, %v1370
        %v1372 = vpop.f32.mrf.mxu0
        %v1373 = vadd.f32 0.0, %v1372
        %1374 = vmatmul.bf16.gmra.mxu0 %v1337
        %v1375 = vpop.f32.mrf.mxu0
        %v1376 = vadd.f32 0.0, %v1375
        %v1377 = vpop.f32.mrf.mxu0
        %v1378 = vadd.f32 0.0, %v1377
        %1379 = vmatmul.bf16.gmra.mxu0 %v1340
        %v1380 = vpop.f32.mrf.mxu0
        %v1381 = vadd.f32 0.0, %v1380
        %v1382 = vpop.f32.mrf.mxu0
        %v1383 = vadd.f32 0.0, %v1382
        %1384 = vdwg.mxu0
        %1385 = vmatpush.bf16.msra.mxu0 0
        %1386 = vmatpush.bf16.msra.mxu0 0
        %1387 = vmatpush.bf16.msra.mxu0 0
        %1388 = vmatpush.bf16.msra.mxu0 0
        %1389 = vmatpush.bf16.msra.mxu0 0
        %1390 = vmatpush.bf16.msra.mxu0 0
        %1391 = vmatpush.bf16.msra.mxu0 %v1346
        %1392 = vmatpush.bf16.msra.mxu0 %v1319
        %1393 = vmatmul.bf16.gmra.mxu0 %v1328
        %v1394 = vpop.f32.mrf.mxu0
        %v1395 = vadd.f32 0.0, %v1394
        %v1396 = vpop.f32.mrf.mxu0
        %v1397 = vadd.f32 0.0, %v1396
        %1398 = vmatmul.bf16.gmra.mxu0 %v1331
        %v1399 = vpop.f32.mrf.mxu0
        %v1400 = vadd.f32 0.0, %v1399
        %v1401 = vpop.f32.mrf.mxu0
        %v1402 = vadd.f32 0.0, %v1401
        %1403 = vmatmul.bf16.gmra.mxu0 %v1334
        %v1404 = vpop.f32.mrf.mxu0
        %v1405 = vadd.f32 0.0, %v1404
        %v1406 = vpop.f32.mrf.mxu0
        %v1407 = vadd.f32 0.0, %v1406
        %1408 = vmatmul.bf16.gmra.mxu0 %v1337
        %v1409 = vpop.f32.mrf.mxu0
        %v1410 = vadd.f32 0.0, %v1409
        %v1411 = vpop.f32.mrf.mxu0
        %v1412 = vadd.f32 0.0, %v1411
        %1413 = vmatmul.bf16.gmra.mxu0 %v1340
        %v1414 = vpop.f32.mrf.mxu0
        %v1415 = vadd.f32 0.0, %v1414
        %v1416 = vpop.f32.mrf.mxu0
        %v1417 = vadd.f32 0.0, %v1416
        %1418 = vdwg.mxu0
        %1419 = vmatpush.bf16.msra.mxu0 0
        %1420 = vmatpush.bf16.msra.mxu0 0
        %1421 = vmatpush.bf16.msra.mxu0 0
        %1422 = vmatpush.bf16.msra.mxu0 0
        %1423 = vmatpush.bf16.msra.mxu0 0
        %1424 = vmatpush.bf16.msra.mxu0 0
        %1425 = vmatpush.bf16.msra.mxu0 %v1349
        %1426 = vmatpush.bf16.msra.mxu0 %v1320
        %1427 = vmatmul.bf16.gmra.mxu0 %v1328
        %v1428 = vpop.f32.mrf.mxu0
        %v1429 = vadd.f32 0.0, %v1428
        %v1430 = vpop.f32.mrf.mxu0
        %v1431 = vadd.f32 0.0, %v1430
        %1432 = vmatmul.bf16.gmra.mxu0 %v1331
        %v1433 = vpop.f32.mrf.mxu0
        %v1434 = vadd.f32 0.0, %v1433
        %v1435 = vpop.f32.mrf.mxu0
        %v1436 = vadd.f32 0.0, %v1435
        %1437 = vmatmul.bf16.gmra.mxu0 %v1334
        %v1438 = vpop.f32.mrf.mxu0
        %v1439 = vadd.f32 0.0, %v1438
        %v1440 = vpop.f32.mrf.mxu0
        %v1441 = vadd.f32 0.0, %v1440
        %1442 = vmatmul.bf16.gmra.mxu0 %v1337
        %v1443 = vpop.f32.mrf.mxu0
        %v1444 = vadd.f32 0.0, %v1443
        %v1445 = vpop.f32.mrf.mxu0
        %v1446 = vadd.f32 0.0, %v1445
        %1447 = vmatmul.bf16.gmra.mxu0 %v1340
        %v1448 = vpop.f32.mrf.mxu0
        %v1449 = vadd.f32 0.0, %v1448
        %v1450 = vpop.f32.mrf.mxu0
        %v1451 = vadd.f32 0.0, %v1450
        %1452 = vdwg.mxu0
        %v1453 = vadd.f32 %v1231, %v1361
        %v1454 = vadd.f32 %v1232, %v1395
        %v1455 = vadd.f32 %v1233, %v1429
        %v1456 = vadd.f32 %v1234, %v1363
        %v1457 = vadd.f32 %v1235, %v1397
        %v1458 = vadd.f32 %v1236, %v1431
        %v1459 = vadd.f32 %v1237, %v1366
        %v1460 = vadd.f32 %v1238, %v1400
        %v1461 = vadd.f32 %v1239, %v1434
        %v1462 = vadd.f32 %v1240, %v1368
        %v1463 = vadd.f32 %v1241, %v1402
        %v1464 = vadd.f32 %v1242, %v1436
        %v1465 = vadd.f32 %v1243, %v1371
        %v1466 = vadd.f32 %v1244, %v1405
        %v1467 = vadd.f32 %v1245, %v1439
        %v1468 = vadd.f32 %v1246, %v1373
        %v1469 = vadd.f32 %v1247, %v1407
        %v1470 = vadd.f32 %v1248, %v1441
        %v1471 = vadd.f32 %v1249, %v1376
        %v1472 = vadd.f32 %v1250, %v1410
        %v1473 = vadd.f32 %v1251, %v1444
        %v1474 = vadd.f32 %v1252, %v1378
        %v1475 = vadd.f32 %v1253, %v1412
        %v1476 = vadd.f32 %v1254, %v1446
        %v1477 = vadd.f32 %v1255, %v1381
        %v1478 = vadd.f32 %v1256, %v1415
        %v1479 = vadd.f32 %v1257, %v1449
        %v1480 = vadd.f32 %v1258, %v1383
        %v1481 = vadd.f32 %v1259, %v1417
        %v1482 = vadd.f32 %v1260, %v1451
        %1483 = vmatpush.bf16.msra.mxu0 0
        %1484 = vmatpush.bf16.msra.mxu0 0
        %1485 = vmatpush.bf16.msra.mxu0 0
        %1486 = vmatpush.bf16.msra.mxu0 0
        %1487 = vmatpush.bf16.msra.mxu0 0
        %1488 = vmatpush.bf16.msra.mxu0 0
        %1489 = vmatpush.bf16.msra.mxu0 %v532
        %1490 = vmatpush.bf16.msra.mxu0 %v505
        %1491 = vmatmul.bf16.gmra.mxu0 %v884
        %v1492 = vpop.f32.mrf.mxu0
        %v1493 = vadd.f32 0.0, %v1492
        %v1494 = vpop.f32.mrf.mxu0
        %v1495 = vadd.f32 0.0, %v1494
        %1496 = vmatmul.bf16.gmra.mxu0 %v887
        %v1497 = vpop.f32.mrf.mxu0
        %v1498 = vadd.f32 0.0, %v1497
        %v1499 = vpop.f32.mrf.mxu0
        %v1500 = vadd.f32 0.0, %v1499
        %1501 = vmatmul.bf16.gmra.mxu0 %v890
        %v1502 = vpop.f32.mrf.mxu0
        %v1503 = vadd.f32 0.0, %v1502
        %v1504 = vpop.f32.mrf.mxu0
        %v1505 = vadd.f32 0.0, %v1504
        %1506 = vmatmul.bf16.gmra.mxu0 %v893
        %v1507 = vpop.f32.mrf.mxu0
        %v1508 = vadd.f32 0.0, %v1507
        %v1509 = vpop.f32.mrf.mxu0
        %v1510 = vadd.f32 0.0, %v1509
        %1511 = vmatmul.bf16.gmra.mxu0 %v896
        %v1512 = vpop.f32.mrf.mxu0
        %v1513 = vadd.f32 0.0, %v1512
        %v1514 = vpop.f32.mrf.mxu0
        %v1515 = vadd.f32 0.0, %v1514
        %1516 = vdwg.mxu0
        %1517 = vmatpush.bf16.msra.mxu0 0
        %1518 = vmatpush.bf16.msra.mxu0 0
        %1519 = vmatpush.bf16.msra.mxu0 0
        %1520 = vmatpush.bf16.msra.mxu0 0
        %1521 = vmatpush.bf16.msra.mxu0 0
        %1522 = vmatpush.bf16.msra.mxu0 0
        %1523 = vmatpush.bf16.msra.mxu0 %v535
        %1524 = vmatpush.bf16.msra.mxu0 %v506
        %1525 = vmatmul.bf16.gmra.mxu0 %v884
        %v1526 = vpop.f32.mrf.mxu0
        %v1527 = vadd.f32 0.0, %v1526
        %v1528 = vpop.f32.mrf.mxu0
        %v1529 = vadd.f32 0.0, %v1528
        %1530 = vmatmul.bf16.gmra.mxu0 %v887
        %v1531 = vpop.f32.mrf.mxu0
        %v1532 = vadd.f32 0.0, %v1531
        %v1533 = vpop.f32.mrf.mxu0
        %v1534 = vadd.f32 0.0, %v1533
        %1535 = vmatmul.bf16.gmra.mxu0 %v890
        %v1536 = vpop.f32.mrf.mxu0
        %v1537 = vadd.f32 0.0, %v1536
        %v1538 = vpop.f32.mrf.mxu0
        %v1539 = vadd.f32 0.0, %v1538
        %1540 = vmatmul.bf16.gmra.mxu0 %v893
        %v1541 = vpop.f32.mrf.mxu0
        %v1542 = vadd.f32 0.0, %v1541
        %v1543 = vpop.f32.mrf.mxu0
        %v1544 = vadd.f32 0.0, %v1543
        %1545 = vmatmul.bf16.gmra.mxu0 %v896
        %v1546 = vpop.f32.mrf.mxu0
        %v1547 = vadd.f32 0.0, %v1546
        %v1548 = vpop.f32.mrf.mxu0
        %v1549 = vadd.f32 0.0, %v1548
        %1550 = vdwg.mxu0
        %1551 = vmatpush.bf16.msra.mxu0 0
        %1552 = vmatpush.bf16.msra.mxu0 0
        %1553 = vmatpush.bf16.msra.mxu0 0
        %1554 = vmatpush.bf16.msra.mxu0 0
        %1555 = vmatpush.bf16.msra.mxu0 0
        %1556 = vmatpush.bf16.msra.mxu0 0
        %1557 = vmatpush.bf16.msra.mxu0 %v538
        %1558 = vmatpush.bf16.msra.mxu0 %v507
        %1559 = vmatmul.bf16.gmra.mxu0 %v884
        %v1560 = vpop.f32.mrf.mxu0
        %v1561 = vadd.f32 0.0, %v1560
        %v1562 = vpop.f32.mrf.mxu0
        %v1563 = vadd.f32 0.0, %v1562
        %1564 = vmatmul.bf16.gmra.mxu0 %v887
        %v1565 = vpop.f32.mrf.mxu0
        %v1566 = vadd.f32 0.0, %v1565
        %v1567 = vpop.f32.mrf.mxu0
        %v1568 = vadd.f32 0.0, %v1567
        %1569 = vmatmul.bf16.gmra.mxu0 %v890
        %v1570 = vpop.f32.mrf.mxu0
        %v1571 = vadd.f32 0.0, %v1570
        %v1572 = vpop.f32.mrf.mxu0
        %v1573 = vadd.f32 0.0, %v1572
        %1574 = vmatmul.bf16.gmra.mxu0 %v893
        %v1575 = vpop.f32.mrf.mxu0
        %v1576 = vadd.f32 0.0, %v1575
        %v1577 = vpop.f32.mrf.mxu0
        %v1578 = vadd.f32 0.0, %v1577
        %1579 = vmatmul.bf16.gmra.mxu0 %v896
        %v1580 = vpop.f32.mrf.mxu0
        %v1581 = vadd.f32 0.0, %v1580
        %v1582 = vpop.f32.mrf.mxu0
        %v1583 = vadd.f32 0.0, %v1582
        %1584 = vdwg.mxu0
        %1585 = vmatpush.bf16.msra.mxu0 0
        %1586 = vmatpush.bf16.msra.mxu0 0
        %1587 = vmatpush.bf16.msra.mxu0 0
        %1588 = vmatpush.bf16.msra.mxu0 0
        %1589 = vmatpush.bf16.msra.mxu0 0
        %1590 = vmatpush.bf16.msra.mxu0 0
        %1591 = vmatpush.bf16.msra.mxu0 %v707
        %1592 = vmatpush.bf16.msra.mxu0 %v682
        %1593 = vmatmul.bf16.gmra.mxu0 %v516
        %v1594 = vpop.f32.mrf.mxu0
        %v1595 = vadd.f32 %v1493, %v1594
        %v1596 = vpop.f32.mrf.mxu0
        %v1597 = vadd.f32 %v1495, %v1596
        %1598 = vmatmul.bf16.gmra.mxu0 %v519
        %v1599 = vpop.f32.mrf.mxu0
        %v1600 = vadd.f32 %v1498, %v1599
        %v1601 = vpop.f32.mrf.mxu0
        %v1602 = vadd.f32 %v1500, %v1601
        %1603 = vmatmul.bf16.gmra.mxu0 %v522
        %v1604 = vpop.f32.mrf.mxu0
        %v1605 = vadd.f32 %v1503, %v1604
        %v1606 = vpop.f32.mrf.mxu0
        %v1607 = vadd.f32 %v1505, %v1606
        %1608 = vmatmul.bf16.gmra.mxu0 %v525
        %v1609 = vpop.f32.mrf.mxu0
        %v1610 = vadd.f32 %v1508, %v1609
        %v1611 = vpop.f32.mrf.mxu0
        %v1612 = vadd.f32 %v1510, %v1611
        %1613 = vmatmul.bf16.gmra.mxu0 %v528
        %v1614 = vpop.f32.mrf.mxu0
        %v1615 = vadd.f32 %v1513, %v1614
        %v1616 = vpop.f32.mrf.mxu0
        %v1617 = vadd.f32 %v1515, %v1616
        %1618 = vdwg.mxu0
        %1619 = vmatpush.bf16.msra.mxu0 0
        %1620 = vmatpush.bf16.msra.mxu0 0
        %1621 = vmatpush.bf16.msra.mxu0 0
        %1622 = vmatpush.bf16.msra.mxu0 0
        %1623 = vmatpush.bf16.msra.mxu0 0
        %1624 = vmatpush.bf16.msra.mxu0 0
        %1625 = vmatpush.bf16.msra.mxu0 %v710
        %1626 = vmatpush.bf16.msra.mxu0 %v683
        %1627 = vmatmul.bf16.gmra.mxu0 %v516
        %v1628 = vpop.f32.mrf.mxu0
        %v1629 = vadd.f32 %v1527, %v1628
        %v1630 = vpop.f32.mrf.mxu0
        %v1631 = vadd.f32 %v1529, %v1630
        %1632 = vmatmul.bf16.gmra.mxu0 %v519
        %v1633 = vpop.f32.mrf.mxu0
        %v1634 = vadd.f32 %v1532, %v1633
        %v1635 = vpop.f32.mrf.mxu0
        %v1636 = vadd.f32 %v1534, %v1635
        %1637 = vmatmul.bf16.gmra.mxu0 %v522
        %v1638 = vpop.f32.mrf.mxu0
        %v1639 = vadd.f32 %v1537, %v1638
        %v1640 = vpop.f32.mrf.mxu0
        %v1641 = vadd.f32 %v1539, %v1640
        %1642 = vmatmul.bf16.gmra.mxu0 %v525
        %v1643 = vpop.f32.mrf.mxu0
        %v1644 = vadd.f32 %v1542, %v1643
        %v1645 = vpop.f32.mrf.mxu0
        %v1646 = vadd.f32 %v1544, %v1645
        %1647 = vmatmul.bf16.gmra.mxu0 %v528
        %v1648 = vpop.f32.mrf.mxu0
        %v1649 = vadd.f32 %v1547, %v1648
        %v1650 = vpop.f32.mrf.mxu0
        %v1651 = vadd.f32 %v1549, %v1650
        %1652 = vdwg.mxu0
        %1653 = vmatpush.bf16.msra.mxu0 0
        %1654 = vmatpush.bf16.msra.mxu0 0
        %1655 = vmatpush.bf16.msra.mxu0 0
        %1656 = vmatpush.bf16.msra.mxu0 0
        %1657 = vmatpush.bf16.msra.mxu0 0
        %1658 = vmatpush.bf16.msra.mxu0 0
        %1659 = vmatpush.bf16.msra.mxu0 %v713
        %1660 = vmatpush.bf16.msra.mxu0 %v684
        %1661 = vmatmul.bf16.gmra.mxu0 %v516
        %v1662 = vpop.f32.mrf.mxu0
        %v1663 = vadd.f32 %v1561, %v1662
        %v1664 = vpop.f32.mrf.mxu0
        %v1665 = vadd.f32 %v1563, %v1664
        %1666 = vmatmul.bf16.gmra.mxu0 %v519
        %v1667 = vpop.f32.mrf.mxu0
        %v1668 = vadd.f32 %v1566, %v1667
        %v1669 = vpop.f32.mrf.mxu0
        %v1670 = vadd.f32 %v1568, %v1669
        %1671 = vmatmul.bf16.gmra.mxu0 %v522
        %v1672 = vpop.f32.mrf.mxu0
        %v1673 = vadd.f32 %v1571, %v1672
        %v1674 = vpop.f32.mrf.mxu0
        %v1675 = vadd.f32 %v1573, %v1674
        %1676 = vmatmul.bf16.gmra.mxu0 %v525
        %v1677 = vpop.f32.mrf.mxu0
        %v1678 = vadd.f32 %v1576, %v1677
        %v1679 = vpop.f32.mrf.mxu0
        %v1680 = vadd.f32 %v1578, %v1679
        %1681 = vmatmul.bf16.gmra.mxu0 %v528
        %v1682 = vpop.f32.mrf.mxu0
        %v1683 = vadd.f32 %v1581, %v1682
        %v1684 = vpop.f32.mrf.mxu0
        %v1685 = vadd.f32 %v1583, %v1684
        %1686 = vdwg.mxu0
        %1687 = vmatpush.bf16.msra.mxu0 0
        %1688 = vmatpush.bf16.msra.mxu0 0
        %1689 = vmatpush.bf16.msra.mxu0 0
        %1690 = vmatpush.bf16.msra.mxu0 0
        %1691 = vmatpush.bf16.msra.mxu0 0
        %1692 = vmatpush.bf16.msra.mxu0 0
        %1693 = vmatpush.bf16.msra.mxu0 %v899
        %1694 = vmatpush.bf16.msra.mxu0 %v874
        %1695 = vmatmul.bf16.gmra.mxu0 %v1106
        %v1696 = vpop.f32.mrf.mxu0
        %v1697 = vadd.f32 0.0, %v1696
        %v1698 = vpop.f32.mrf.mxu0
        %v1699 = vadd.f32 0.0, %v1698
        %1700 = vmatmul.bf16.gmra.mxu0 %v1109
        %v1701 = vpop.f32.mrf.mxu0
        %v1702 = vadd.f32 0.0, %v1701
        %v1703 = vpop.f32.mrf.mxu0
        %v1704 = vadd.f32 0.0, %v1703
        %1705 = vmatmul.bf16.gmra.mxu0 %v1112
        %v1706 = vpop.f32.mrf.mxu0
        %v1707 = vadd.f32 0.0, %v1706
        %v1708 = vpop.f32.mrf.mxu0
        %v1709 = vadd.f32 0.0, %v1708
        %1710 = vmatmul.bf16.gmra.mxu0 %v1115
        %v1711 = vpop.f32.mrf.mxu0
        %v1712 = vadd.f32 0.0, %v1711
        %v1713 = vpop.f32.mrf.mxu0
        %v1714 = vadd.f32 0.0, %v1713
        %1715 = vmatmul.bf16.gmra.mxu0 %v1118
        %v1716 = vpop.f32.mrf.mxu0
        %v1717 = vadd.f32 0.0, %v1716
        %v1718 = vpop.f32.mrf.mxu0
        %v1719 = vadd.f32 0.0, %v1718
        %1720 = vdwg.mxu0
        %1721 = vmatpush.bf16.msra.mxu0 0
        %1722 = vmatpush.bf16.msra.mxu0 0
        %1723 = vmatpush.bf16.msra.mxu0 0
        %1724 = vmatpush.bf16.msra.mxu0 0
        %1725 = vmatpush.bf16.msra.mxu0 0
        %1726 = vmatpush.bf16.msra.mxu0 0
        %1727 = vmatpush.bf16.msra.mxu0 %v902
        %1728 = vmatpush.bf16.msra.mxu0 %v875
        %1729 = vmatmul.bf16.gmra.mxu0 %v1106
        %v1730 = vpop.f32.mrf.mxu0
        %v1731 = vadd.f32 0.0, %v1730
        %v1732 = vpop.f32.mrf.mxu0
        %v1733 = vadd.f32 0.0, %v1732
        %1734 = vmatmul.bf16.gmra.mxu0 %v1109
        %v1735 = vpop.f32.mrf.mxu0
        %v1736 = vadd.f32 0.0, %v1735
        %v1737 = vpop.f32.mrf.mxu0
        %v1738 = vadd.f32 0.0, %v1737
        %1739 = vmatmul.bf16.gmra.mxu0 %v1112
        %v1740 = vpop.f32.mrf.mxu0
        %v1741 = vadd.f32 0.0, %v1740
        %v1742 = vpop.f32.mrf.mxu0
        %v1743 = vadd.f32 0.0, %v1742
        %1744 = vmatmul.bf16.gmra.mxu0 %v1115
        %v1745 = vpop.f32.mrf.mxu0
        %v1746 = vadd.f32 0.0, %v1745
        %v1747 = vpop.f32.mrf.mxu0
        %v1748 = vadd.f32 0.0, %v1747
        %1749 = vmatmul.bf16.gmra.mxu0 %v1118
        %v1750 = vpop.f32.mrf.mxu0
        %v1751 = vadd.f32 0.0, %v1750
        %v1752 = vpop.f32.mrf.mxu0
        %v1753 = vadd.f32 0.0, %v1752
        %1754 = vdwg.mxu0
        %1755 = vmatpush.bf16.msra.mxu0 0
        %1756 = vmatpush.bf16.msra.mxu0 0
        %1757 = vmatpush.bf16.msra.mxu0 0
        %1758 = vmatpush.bf16.msra.mxu0 0
        %1759 = vmatpush.bf16.msra.mxu0 0
        %1760 = vmatpush.bf16.msra.mxu0 0
        %1761 = vmatpush.bf16.msra.mxu0 %v905
        %1762 = vmatpush.bf16.msra.mxu0 %v876
        %1763 = vmatmul.bf16.gmra.mxu0 %v1106
        %v1764 = vpop.f32.mrf.mxu0
        %v1765 = vadd.f32 0.0, %v1764
        %v1766 = vpop.f32.mrf.mxu0
        %v1767 = vadd.f32 0.0, %v1766
        %1768 = vmatmul.bf16.gmra.mxu0 %v1109
        %v1769 = vpop.f32.mrf.mxu0
        %v1770 = vadd.f32 0.0, %v1769
        %v1771 = vpop.f32.mrf.mxu0
        %v1772 = vadd.f32 0.0, %v1771
        %1773 = vmatmul.bf16.gmra.mxu0 %v1112
        %v1774 = vpop.f32.mrf.mxu0
        %v1775 = vadd.f32 0.0, %v1774
        %v1776 = vpop.f32.mrf.mxu0
        %v1777 = vadd.f32 0.0, %v1776
        %1778 = vmatmul.bf16.gmra.mxu0 %v1115
        %v1779 = vpop.f32.mrf.mxu0
        %v1780 = vadd.f32 0.0, %v1779
        %v1781 = vpop.f32.mrf.mxu0
        %v1782 = vadd.f32 0.0, %v1781
        %1783 = vmatmul.bf16.gmra.mxu0 %v1118
        %v1784 = vpop.f32.mrf.mxu0
        %v1785 = vadd.f32 0.0, %v1784
        %v1786 = vpop.f32.mrf.mxu0
        %v1787 = vadd.f32 0.0, %v1786
        %1788 = vdwg.mxu0
        %v1789 = vadd.f32 %v1595, %v1697
        %v1790 = vadd.f32 %v1629, %v1731
        %v1791 = vadd.f32 %v1663, %v1765
        %v1792 = vadd.f32 %v1597, %v1699
        %v1793 = vadd.f32 %v1631, %v1733
        %v1794 = vadd.f32 %v1665, %v1767
        %v1795 = vadd.f32 %v1600, %v1702
        %v1796 = vadd.f32 %v1634, %v1736
        %v1797 = vadd.f32 %v1668, %v1770
        %v1798 = vadd.f32 %v1602, %v1704
        %v1799 = vadd.f32 %v1636, %v1738
        %v1800 = vadd.f32 %v1670, %v1772
        %v1801 = vadd.f32 %v1605, %v1707
        %v1802 = vadd.f32 %v1639, %v1741
        %v1803 = vadd.f32 %v1673, %v1775
        %v1804 = vadd.f32 %v1607, %v1709
        %v1805 = vadd.f32 %v1641, %v1743
        %v1806 = vadd.f32 %v1675, %v1777
        %v1807 = vadd.f32 %v1610, %v1712
        %v1808 = vadd.f32 %v1644, %v1746
        %v1809 = vadd.f32 %v1678, %v1780
        %v1810 = vadd.f32 %v1612, %v1714
        %v1811 = vadd.f32 %v1646, %v1748
        %v1812 = vadd.f32 %v1680, %v1782
        %v1813 = vadd.f32 %v1615, %v1717
        %v1814 = vadd.f32 %v1649, %v1751
        %v1815 = vadd.f32 %v1683, %v1785
        %v1816 = vadd.f32 %v1617, %v1719
        %v1817 = vadd.f32 %v1651, %v1753
        %v1818 = vadd.f32 %v1685, %v1787
        %1819 = vmatpush.bf16.msra.mxu0 0
        %1820 = vmatpush.bf16.msra.mxu0 0
        %1821 = vmatpush.bf16.msra.mxu0 0
        %1822 = vmatpush.bf16.msra.mxu0 0
        %1823 = vmatpush.bf16.msra.mxu0 0
        %1824 = vmatpush.bf16.msra.mxu0 0
        %1825 = vmatpush.bf16.msra.mxu0 %v1121
        %1826 = vmatpush.bf16.msra.mxu0 %v1096
        %1827 = vmatmul.bf16.gmra.mxu0 %v1328
        %v1828 = vpop.f32.mrf.mxu0
        %v1829 = vadd.f32 0.0, %v1828
        %v1830 = vpop.f32.mrf.mxu0
        %v1831 = vadd.f32 0.0, %v1830
        %1832 = vmatmul.bf16.gmra.mxu0 %v1331
        %v1833 = vpop.f32.mrf.mxu0
        %v1834 = vadd.f32 0.0, %v1833
        %v1835 = vpop.f32.mrf.mxu0
        %v1836 = vadd.f32 0.0, %v1835
        %1837 = vmatmul.bf16.gmra.mxu0 %v1334
        %v1838 = vpop.f32.mrf.mxu0
        %v1839 = vadd.f32 0.0, %v1838
        %v1840 = vpop.f32.mrf.mxu0
        %v1841 = vadd.f32 0.0, %v1840
        %1842 = vmatmul.bf16.gmra.mxu0 %v1337
        %v1843 = vpop.f32.mrf.mxu0
        %v1844 = vadd.f32 0.0, %v1843
        %v1845 = vpop.f32.mrf.mxu0
        %v1846 = vadd.f32 0.0, %v1845
        %1847 = vmatmul.bf16.gmra.mxu0 %v1340
        %v1848 = vpop.f32.mrf.mxu0
        %v1849 = vadd.f32 0.0, %v1848
        %v1850 = vpop.f32.mrf.mxu0
        %v1851 = vadd.f32 0.0, %v1850
        %1852 = vdwg.mxu0
        %1853 = vmatpush.bf16.msra.mxu0 0
        %1854 = vmatpush.bf16.msra.mxu0 0
        %1855 = vmatpush.bf16.msra.mxu0 0
        %1856 = vmatpush.bf16.msra.mxu0 0
        %1857 = vmatpush.bf16.msra.mxu0 0
        %1858 = vmatpush.bf16.msra.mxu0 0
        %1859 = vmatpush.bf16.msra.mxu0 %v1124
        %1860 = vmatpush.bf16.msra.mxu0 %v1097
        %1861 = vmatmul.bf16.gmra.mxu0 %v1328
        %v1862 = vpop.f32.mrf.mxu0
        %v1863 = vadd.f32 0.0, %v1862
        %v1864 = vpop.f32.mrf.mxu0
        %v1865 = vadd.f32 0.0, %v1864
        %1866 = vmatmul.bf16.gmra.mxu0 %v1331
        %v1867 = vpop.f32.mrf.mxu0
        %v1868 = vadd.f32 0.0, %v1867
        %v1869 = vpop.f32.mrf.mxu0
        %v1870 = vadd.f32 0.0, %v1869
        %1871 = vmatmul.bf16.gmra.mxu0 %v1334
        %v1872 = vpop.f32.mrf.mxu0
        %v1873 = vadd.f32 0.0, %v1872
        %v1874 = vpop.f32.mrf.mxu0
        %v1875 = vadd.f32 0.0, %v1874
        %1876 = vmatmul.bf16.gmra.mxu0 %v1337
        %v1877 = vpop.f32.mrf.mxu0
        %v1878 = vadd.f32 0.0, %v1877
        %v1879 = vpop.f32.mrf.mxu0
        %v1880 = vadd.f32 0.0, %v1879
        %1881 = vmatmul.bf16.gmra.mxu0 %v1340
        %v1882 = vpop.f32.mrf.mxu0
        %v1883 = vadd.f32 0.0, %v1882
        %v1884 = vpop.f32.mrf.mxu0
        %v1885 = vadd.f32 0.0, %v1884
        %1886 = vdwg.mxu0
        %1887 = vmatpush.bf16.msra.mxu0 0
        %1888 = vmatpush.bf16.msra.mxu0 0
        %1889 = vmatpush.bf16.msra.mxu0 0
        %1890 = vmatpush.bf16.msra.mxu0 0
        %1891 = vmatpush.bf16.msra.mxu0 0
        %1892 = vmatpush.bf16.msra.mxu0 0
        %1893 = vmatpush.bf16.msra.mxu0 %v1127
        %1894 = vmatpush.bf16.msra.mxu0 %v1098
        %1895 = vmatmul.bf16.gmra.mxu0 %v1328
        %v1896 = vpop.f32.mrf.mxu0
        %v1897 = vadd.f32 0.0, %v1896
        %v1898 = vpop.f32.mrf.mxu0
        %v1899 = vadd.f32 0.0, %v1898
        %1900 = vmatmul.bf16.gmra.mxu0 %v1331
        %v1901 = vpop.f32.mrf.mxu0
        %v1902 = vadd.f32 0.0, %v1901
        %v1903 = vpop.f32.mrf.mxu0
        %v1904 = vadd.f32 0.0, %v1903
        %1905 = vmatmul.bf16.gmra.mxu0 %v1334
        %v1906 = vpop.f32.mrf.mxu0
        %v1907 = vadd.f32 0.0, %v1906
        %v1908 = vpop.f32.mrf.mxu0
        %v1909 = vadd.f32 0.0, %v1908
        %1910 = vmatmul.bf16.gmra.mxu0 %v1337
        %v1911 = vpop.f32.mrf.mxu0
        %v1912 = vadd.f32 0.0, %v1911
        %v1913 = vpop.f32.mrf.mxu0
        %v1914 = vadd.f32 0.0, %v1913
        %1915 = vmatmul.bf16.gmra.mxu0 %v1340
        %v1916 = vpop.f32.mrf.mxu0
        %v1917 = vadd.f32 0.0, %v1916
        %v1918 = vpop.f32.mrf.mxu0
        %v1919 = vadd.f32 0.0, %v1918
        %1920 = vdwg.mxu0
        %v1921 = vadd.f32 %v1789, %v1829
        %v1922 = vadd.f32 %v1790, %v1863
        %v1923 = vadd.f32 %v1791, %v1897
        %v1924 = vadd.f32 %v1792, %v1831
        %v1925 = vadd.f32 %v1793, %v1865
        %v1926 = vadd.f32 %v1794, %v1899
        %v1927 = vadd.f32 %v1795, %v1834
        %v1928 = vadd.f32 %v1796, %v1868
        %v1929 = vadd.f32 %v1797, %v1902
        %v1930 = vadd.f32 %v1798, %v1836
        %v1931 = vadd.f32 %v1799, %v1870
        %v1932 = vadd.f32 %v1800, %v1904
        %v1933 = vadd.f32 %v1801, %v1839
        %v1934 = vadd.f32 %v1802, %v1873
        %v1935 = vadd.f32 %v1803, %v1907
        %v1936 = vadd.f32 %v1804, %v1841
        %v1937 = vadd.f32 %v1805, %v1875
        %v1938 = vadd.f32 %v1806, %v1909
        %v1939 = vadd.f32 %v1807, %v1844
        %v1940 = vadd.f32 %v1808, %v1878
        %v1941 = vadd.f32 %v1809, %v1912
        %v1942 = vadd.f32 %v1810, %v1846
        %v1943 = vadd.f32 %v1811, %v1880
        %v1944 = vadd.f32 %v1812, %v1914
        %v1945 = vadd.f32 %v1813, %v1849
        %v1946 = vadd.f32 %v1814, %v1883
        %v1947 = vadd.f32 %v1815, %v1917
        %v1948 = vadd.f32 %v1816, %v1851
        %v1949 = vadd.f32 %v1817, %v1885
        %v1950 = vadd.f32 %v1818, %v1919
        %v1951 = vld [vmem:[%s447 + $0x8] sm:$0xf]
        %v1952 = vld [vmem:[%s447 + $0xc] sm:$0xf]
        %v1953 = vld [vmem:[%s447 + $0x10] sm:$0xf]
        %v1954 = vld [vmem:[%s447 + $0x14] sm:$0xf]
        %v1955 = vld [vmem:[%s447 + $0x18] sm:$0xf]
        %v1956 = vld [vmem:[%s447 + $0x1c] sm:$0xf]
        %v1957 = vld [vmem:[%s447 + $0x20] sm:$0xf]
        %v1958 = vld [vmem:[%s447 + $0x24] sm:$0xf]
        %v1959 = vld [vmem:[%s447 + $0x28] sm:$0xf]
        %v1960 = vld [vmem:[%s447 + $0x2c] sm:$0xf]
        %v1971 = vunpack.c.l.b16 %v1951
        %v1972 = vunpack.c.l.b16 %v1952
        %v1973 = vunpack.c.l.b16 %v1953
        %v1974 = vunpack.c.l.b16 %v1954
        %v1975 = vunpack.c.l.b16 %v1955
        %v1976 = vunpack.c.l.b16 %v1956
        %v1977 = vunpack.c.l.b16 %v1957
        %v1978 = vunpack.c.l.b16 %v1958
        %v1979 = vunpack.c.l.b16 %v1959
        %v1980 = vunpack.c.l.b16 %v1960
        %v1981 = vpack.c.b16 %v1972, %v1971
        %v1982 = vpack.c.b16 %v1974, %v1973
        %v1983 = vpack.c.b16 %v1976, %v1975
        %v1984 = vpack.c.b16 %v1978, %v1977
        %v1985 = vpack.c.b16 %v1980, %v1979
        %v1987 = vsel %vm514, %v1981, 0
        %v1990 = vsel %vm514, %v1982, 0
        %v1993 = vsel %vm514, %v1983, 0
        %v1996 = vsel %vm514, %v1984, 0
        %v1999 = vsel %vm514, %v1985, 0
        %2001 = vmatpush.bf16.msra.mxu0 0
        %2002 = vmatpush.bf16.msra.mxu0 0
        %2003 = vmatpush.bf16.msra.mxu0 0
        %2004 = vmatpush.bf16.msra.mxu0 0
        %2005 = vmatpush.bf16.msra.mxu0 0
        %2006 = vmatpush.bf16.msra.mxu0 0
        %2007 = vmatpush.bf16.msra.mxu0 %v1343
        %2008 = vmatpush.bf16.msra.mxu0 %v1318
        %2009 = vmatmul.bf16.gmra.mxu0 %v1987
        %v2010 = vpop.f32.mrf.mxu0
        %v2011 = vadd.f32 0.0, %v2010
        %v2012 = vpop.f32.mrf.mxu0
        %v2013 = vadd.f32 0.0, %v2012
        %2014 = vmatmul.bf16.gmra.mxu0 %v1990
        %v2015 = vpop.f32.mrf.mxu0
        %v2016 = vadd.f32 0.0, %v2015
        %v2017 = vpop.f32.mrf.mxu0
        %v2018 = vadd.f32 0.0, %v2017
        %2019 = vmatmul.bf16.gmra.mxu0 %v1993
        %v2020 = vpop.f32.mrf.mxu0
        %v2021 = vadd.f32 0.0, %v2020
        %v2022 = vpop.f32.mrf.mxu0
        %v2023 = vadd.f32 0.0, %v2022
        %2024 = vmatmul.bf16.gmra.mxu0 %v1996
        %v2025 = vpop.f32.mrf.mxu0
        %v2026 = vadd.f32 0.0, %v2025
        %v2027 = vpop.f32.mrf.mxu0
        %v2028 = vadd.f32 0.0, %v2027
        %2029 = vmatmul.bf16.gmra.mxu0 %v1999
        %v2030 = vpop.f32.mrf.mxu0
        %v2031 = vadd.f32 0.0, %v2030
        %v2032 = vpop.f32.mrf.mxu0
        %v2033 = vadd.f32 0.0, %v2032
        %2034 = vdwg.mxu0
        %2035 = vmatpush.bf16.msra.mxu0 0
        %2036 = vmatpush.bf16.msra.mxu0 0
        %2037 = vmatpush.bf16.msra.mxu0 0
        %2038 = vmatpush.bf16.msra.mxu0 0
        %2039 = vmatpush.bf16.msra.mxu0 0
        %2040 = vmatpush.bf16.msra.mxu0 0
        %2041 = vmatpush.bf16.msra.mxu0 %v1346
        %2042 = vmatpush.bf16.msra.mxu0 %v1319
        %2043 = vmatmul.bf16.gmra.mxu0 %v1987
        %v2044 = vpop.f32.mrf.mxu0
        %v2045 = vadd.f32 0.0, %v2044
        %v2046 = vpop.f32.mrf.mxu0
        %v2047 = vadd.f32 0.0, %v2046
        %2048 = vmatmul.bf16.gmra.mxu0 %v1990
        %v2049 = vpop.f32.mrf.mxu0
        %v2050 = vadd.f32 0.0, %v2049
        %v2051 = vpop.f32.mrf.mxu0
        %v2052 = vadd.f32 0.0, %v2051
        %2053 = vmatmul.bf16.gmra.mxu0 %v1993
        %v2054 = vpop.f32.mrf.mxu0
        %v2055 = vadd.f32 0.0, %v2054
        %v2056 = vpop.f32.mrf.mxu0
        %v2057 = vadd.f32 0.0, %v2056
        %2058 = vmatmul.bf16.gmra.mxu0 %v1996
        %v2059 = vpop.f32.mrf.mxu0
        %v2060 = vadd.f32 0.0, %v2059
        %v2061 = vpop.f32.mrf.mxu0
        %v2062 = vadd.f32 0.0, %v2061
        %2063 = vmatmul.bf16.gmra.mxu0 %v1999
        %v2064 = vpop.f32.mrf.mxu0
        %v2065 = vadd.f32 0.0, %v2064
        %v2066 = vpop.f32.mrf.mxu0
        %v2067 = vadd.f32 0.0, %v2066
        %2068 = vdwg.mxu0
        %2069 = vmatpush.bf16.msra.mxu0 0
        %2070 = vmatpush.bf16.msra.mxu0 0
        %2071 = vmatpush.bf16.msra.mxu0 0
        %2072 = vmatpush.bf16.msra.mxu0 0
        %2073 = vmatpush.bf16.msra.mxu0 0
        %2074 = vmatpush.bf16.msra.mxu0 0
        %2075 = vmatpush.bf16.msra.mxu0 %v1349
        %2076 = vmatpush.bf16.msra.mxu0 %v1320
        %2077 = vmatmul.bf16.gmra.mxu0 %v1987
        %v2078 = vpop.f32.mrf.mxu0
        %v2079 = vadd.f32 0.0, %v2078
        %v2080 = vpop.f32.mrf.mxu0
        %v2081 = vadd.f32 0.0, %v2080
        %2082 = vmatmul.bf16.gmra.mxu0 %v1990
        %v2083 = vpop.f32.mrf.mxu0
        %v2084 = vadd.f32 0.0, %v2083
        %v2085 = vpop.f32.mrf.mxu0
        %v2086 = vadd.f32 0.0, %v2085
        %2087 = vmatmul.bf16.gmra.mxu0 %v1993
        %v2088 = vpop.f32.mrf.mxu0
        %v2089 = vadd.f32 0.0, %v2088
        %v2090 = vpop.f32.mrf.mxu0
        %v2091 = vadd.f32 0.0, %v2090
        %2092 = vmatmul.bf16.gmra.mxu0 %v1996
        %v2093 = vpop.f32.mrf.mxu0
        %v2094 = vadd.f32 0.0, %v2093
        %v2095 = vpop.f32.mrf.mxu0
        %v2096 = vadd.f32 0.0, %v2095
        %2097 = vmatmul.bf16.gmra.mxu0 %v1999
        %v2098 = vpop.f32.mrf.mxu0
        %v2099 = vadd.f32 0.0, %v2098
        %v2100 = vpop.f32.mrf.mxu0
        %v2101 = vadd.f32 0.0, %v2100
        %2102 = vdwg.mxu0
        %v2103 = vadd.f32 %v1921, %v2011
        %v2104 = vadd.f32 %v1922, %v2045
        %v2105 = vadd.f32 %v1923, %v2079
        %v2106 = vadd.f32 %v1924, %v2013
        %v2107 = vadd.f32 %v1925, %v2047
        %v2108 = vadd.f32 %v1926, %v2081
        %v2109 = vadd.f32 %v1927, %v2016
        %v2110 = vadd.f32 %v1928, %v2050
        %v2111 = vadd.f32 %v1929, %v2084
        %v2112 = vadd.f32 %v1930, %v2018
        %v2113 = vadd.f32 %v1931, %v2052
        %v2114 = vadd.f32 %v1932, %v2086
        %v2115 = vadd.f32 %v1933, %v2021
        %v2116 = vadd.f32 %v1934, %v2055
        %v2117 = vadd.f32 %v1935, %v2089
        %v2118 = vadd.f32 %v1936, %v2023
        %v2119 = vadd.f32 %v1937, %v2057
        %v2120 = vadd.f32 %v1938, %v2091
        %v2121 = vadd.f32 %v1939, %v2026
        %v2122 = vadd.f32 %v1940, %v2060
        %v2123 = vadd.f32 %v1941, %v2094
        %v2124 = vadd.f32 %v1942, %v2028
        %v2125 = vadd.f32 %v1943, %v2062
        %v2126 = vadd.f32 %v1944, %v2096
        %v2127 = vadd.f32 %v1945, %v2031
        %v2128 = vadd.f32 %v1946, %v2065
        %v2129 = vadd.f32 %v1947, %v2099
        %v2130 = vadd.f32 %v1948, %v2033
        %v2131 = vadd.f32 %v1949, %v2067
        %v2132 = vadd.f32 %v1950, %v2101
        %v2133 = vmax.f32 %v1453, %v2103
        %v2134 = vmax.f32 %v1454, %v2104
        %v2135 = vmax.f32 %v1455, %v2105
        %v2136 = vmax.f32 %v1456, %v2106
        %v2137 = vmax.f32 %v1457, %v2107
        %v2138 = vmax.f32 %v1458, %v2108
        %v2139 = vmax.f32 %v1459, %v2109
        %v2140 = vmax.f32 %v1460, %v2110
        %v2141 = vmax.f32 %v1461, %v2111
        %v2142 = vmax.f32 %v1462, %v2112
        %v2143 = vmax.f32 %v1463, %v2113
        %v2144 = vmax.f32 %v1464, %v2114
        %v2145 = vmax.f32 %v1465, %v2115
        %v2146 = vmax.f32 %v1466, %v2116
        %v2147 = vmax.f32 %v1467, %v2117
        %v2148 = vmax.f32 %v1468, %v2118
        %v2149 = vmax.f32 %v1469, %v2119
        %v2150 = vmax.f32 %v1470, %v2120
        %v2151 = vmax.f32 %v1471, %v2121
        %v2152 = vmax.f32 %v1472, %v2122
        %v2153 = vmax.f32 %v1473, %v2123
        %v2154 = vmax.f32 %v1474, %v2124
        %v2155 = vmax.f32 %v1475, %v2125
        %v2156 = vmax.f32 %v1476, %v2126
        %v2157 = vmax.f32 %v1477, %v2127
        %v2158 = vmax.f32 %v1478, %v2128
        %v2159 = vmax.f32 %v1479, %v2129
        %v2160 = vmax.f32 %v1480, %v2130
        %v2161 = vmax.f32 %v1481, %v2131
        %v2162 = vmax.f32 %v1482, %v2132
        %v2163 = vld [vmem:[%s2] sm:$0x7]
        %v2165 = vperm.slane %v2163, 0
        %v2166 = vperm.slane %v2163, 1
        %v2167 = vperm.slane %v2163, 2
        %v2171 = vadd.f32 %v2133, %v2165
        %v2172 = vadd.f32 %v2134, %v2166
        %v2173 = vadd.f32 %v2135, %v2167
        %v2174 = vadd.f32 %v2136, %v2165
        %v2175 = vadd.f32 %v2137, %v2166
        %v2176 = vadd.f32 %v2138, %v2167
        %v2177 = vadd.f32 %v2139, %v2165
        %v2178 = vadd.f32 %v2140, %v2166
        %v2179 = vadd.f32 %v2141, %v2167
        %v2180 = vadd.f32 %v2142, %v2165
        %v2181 = vadd.f32 %v2143, %v2166
        %v2182 = vadd.f32 %v2144, %v2167
        %v2183 = vadd.f32 %v2145, %v2165
        %v2184 = vadd.f32 %v2146, %v2166
        %v2185 = vadd.f32 %v2147, %v2167
        %v2186 = vadd.f32 %v2148, %v2165
        %v2187 = vadd.f32 %v2149, %v2166
        %v2188 = vadd.f32 %v2150, %v2167
        %v2189 = vadd.f32 %v2151, %v2165
        %v2190 = vadd.f32 %v2152, %v2166
        %v2191 = vadd.f32 %v2153, %v2167
        %v2192 = vadd.f32 %v2154, %v2165
        %v2193 = vadd.f32 %v2155, %v2166
        %v2194 = vadd.f32 %v2156, %v2167
        %v2195 = vadd.f32 %v2157, %v2165
        %v2196 = vadd.f32 %v2158, %v2166
        %v2197 = vadd.f32 %v2159, %v2167
        %v2198 = vadd.f32 %v2160, %v2165
        %v2199 = vadd.f32 %v2161, %v2166
        %v2200 = vadd.f32 %v2162, %v2167
        %v2201 = vmax.f32 %v2171, 0.0
        %v2202 = vmax.f32 %v2172, 0.0
        %v2203 = vmax.f32 %v2173, 0.0
        %v2204 = vmax.f32 %v2174, 0.0
        %v2205 = vmax.f32 %v2175, 0.0
        %v2206 = vmax.f32 %v2176, 0.0
        %v2207 = vmax.f32 %v2177, 0.0
        %v2208 = vmax.f32 %v2178, 0.0
        %v2209 = vmax.f32 %v2179, 0.0
        %v2210 = vmax.f32 %v2180, 0.0
        %v2211 = vmax.f32 %v2181, 0.0
        %v2212 = vmax.f32 %v2182, 0.0
        %v2213 = vmax.f32 %v2183, 0.0
        %v2214 = vmax.f32 %v2184, 0.0
        %v2215 = vmax.f32 %v2185, 0.0
        %v2216 = vmax.f32 %v2186, 0.0
        %v2217 = vmax.f32 %v2187, 0.0
        %v2218 = vmax.f32 %v2188, 0.0
        %v2219 = vmax.f32 %v2189, 0.0
        %v2220 = vmax.f32 %v2190, 0.0
        %v2221 = vmax.f32 %v2191, 0.0
        %v2222 = vmax.f32 %v2192, 0.0
        %v2223 = vmax.f32 %v2193, 0.0
        %v2224 = vmax.f32 %v2194, 0.0
        %v2225 = vmax.f32 %v2195, 0.0
        %v2226 = vmax.f32 %v2196, 0.0
        %v2227 = vmax.f32 %v2197, 0.0
        %v2228 = vmax.f32 %v2198, 0.0
        %v2229 = vmax.f32 %v2199, 0.0
        %v2230 = vmax.f32 %v2200, 0.0
        %2261 = vrot.lane.b32.xlu0 %v2201, 112
        %v2262 = vpop.permute.xlu0 %2261
        %2263 = vrot.lane.b32.xlu0 %v2202, 112
        %v2264 = vpop.permute.xlu0 %2263
        %2265 = vrot.lane.b32.xlu0 %v2203, 112
        %v2266 = vpop.permute.xlu0 %2265
        %2267 = vrot.lane.b32.xlu0 %v2204, 112
        %v2268 = vpop.permute.xlu0 %2267
        %2269 = vrot.lane.b32.xlu0 %v2205, 112
        %v2270 = vpop.permute.xlu0 %2269
        %2271 = vrot.lane.b32.xlu0 %v2206, 112
        %v2272 = vpop.permute.xlu0 %2271
        %2273 = vrot.lane.b32.xlu0 %v2207, 112
        %v2274 = vpop.permute.xlu0 %2273
        %2275 = vrot.lane.b32.xlu0 %v2208, 112
        %v2276 = vpop.permute.xlu0 %2275
        %2277 = vrot.lane.b32.xlu0 %v2209, 112
        %v2278 = vpop.permute.xlu0 %2277
        %2279 = vrot.lane.b32.xlu0 %v2210, 112
        %v2280 = vpop.permute.xlu0 %2279
        %2281 = vrot.lane.b32.xlu0 %v2211, 112
        %v2282 = vpop.permute.xlu0 %2281
        %2283 = vrot.lane.b32.xlu0 %v2212, 112
        %v2284 = vpop.permute.xlu0 %2283
        %2285 = vrot.lane.b32.xlu0 %v2213, 112
        %v2286 = vpop.permute.xlu0 %2285
        %2287 = vrot.lane.b32.xlu0 %v2214, 112
        %v2288 = vpop.permute.xlu0 %2287
        %2289 = vrot.lane.b32.xlu0 %v2215, 112
        %v2290 = vpop.permute.xlu0 %2289
        %2291 = vrot.lane.b32.xlu0 %v2216, 112
        %v2292 = vpop.permute.xlu0 %2291
        %2293 = vrot.lane.b32.xlu0 %v2217, 112
        %v2294 = vpop.permute.xlu0 %2293
        %2295 = vrot.lane.b32.xlu0 %v2218, 112
        %v2296 = vpop.permute.xlu0 %2295
        %2297 = vrot.lane.b32.xlu0 %v2219, 112
        %v2298 = vpop.permute.xlu0 %2297
        %2299 = vrot.lane.b32.xlu0 %v2220, 112
        %v2300 = vpop.permute.xlu0 %2299
        %2301 = vrot.lane.b32.xlu0 %v2221, 112
        %v2302 = vpop.permute.xlu0 %2301
        %2303 = vrot.lane.b32.xlu0 %v2222, 112
        %v2304 = vpop.permute.xlu0 %2303
        %2305 = vrot.lane.b32.xlu0 %v2223, 112
        %v2306 = vpop.permute.xlu0 %2305
        %2307 = vrot.lane.b32.xlu0 %v2224, 112
        %v2308 = vpop.permute.xlu0 %2307
        %2309 = vrot.lane.b32.xlu0 %v2225, 112
        %v2310 = vpop.permute.xlu0 %2309
        %2311 = vrot.lane.b32.xlu0 %v2226, 112
        %v2312 = vpop.permute.xlu0 %2311
        %2313 = vrot.lane.b32.xlu0 %v2227, 112
        %v2314 = vpop.permute.xlu0 %2313
        %2315 = vrot.lane.b32.xlu0 %v2228, 112
        %v2316 = vpop.permute.xlu0 %2315
        %2317 = vrot.lane.b32.xlu0 %v2229, 112
        %v2318 = vpop.permute.xlu0 %2317
        %2319 = vrot.lane.b32.xlu0 %v2230, 112
        %v2320 = vpop.permute.xlu0 %2319
        %vm2321 = vcmask 916480
        %v2322 = vsel %vm2321, %v2262, %v2264
        %v2323 = vsel %vm2321, %v2264, %v2266
        %v2324 = vsel %vm2321, %v2268, %v2270
        %v2325 = vsel %vm2321, %v2270, %v2272
        %v2326 = vsel %vm2321, %v2274, %v2276
        %v2327 = vsel %vm2321, %v2276, %v2278
        %v2328 = vsel %vm2321, %v2280, %v2282
        %v2329 = vsel %vm2321, %v2282, %v2284
        %v2330 = vsel %vm2321, %v2286, %v2288
        %v2331 = vsel %vm2321, %v2288, %v2290
        %v2332 = vsel %vm2321, %v2292, %v2294
        %v2333 = vsel %vm2321, %v2294, %v2296
        %v2334 = vsel %vm2321, %v2298, %v2300
        %v2335 = vsel %vm2321, %v2300, %v2302
        %v2336 = vsel %vm2321, %v2304, %v2306
        %v2337 = vsel %vm2321, %v2306, %v2308
        %v2338 = vsel %vm2321, %v2310, %v2312
        %v2339 = vsel %vm2321, %v2312, %v2314
        %v2340 = vsel %vm2321, %v2316, %v2318
        %v2341 = vsel %vm2321, %v2318, %v2320
        %v2372 = vmax.f32 %v2201, %v2322
        %v2373 = vmax.f32 %v2202, %v2323
        %v2374 = vmax.f32 %v2203, %v2266
        %v2375 = vmax.f32 %v2204, %v2324
        %v2376 = vmax.f32 %v2205, %v2325
        %v2377 = vmax.f32 %v2206, %v2272
        %v2378 = vmax.f32 %v2207, %v2326
        %v2379 = vmax.f32 %v2208, %v2327
        %v2380 = vmax.f32 %v2209, %v2278
        %v2381 = vmax.f32 %v2210, %v2328
        %v2382 = vmax.f32 %v2211, %v2329
        %v2383 = vmax.f32 %v2212, %v2284
        %v2384 = vmax.f32 %v2213, %v2330
        %v2385 = vmax.f32 %v2214, %v2331
        %v2386 = vmax.f32 %v2215, %v2290
        %v2387 = vmax.f32 %v2216, %v2332
        %v2388 = vmax.f32 %v2217, %v2333
        %v2389 = vmax.f32 %v2218, %v2296
        %v2390 = vmax.f32 %v2219, %v2334
        %v2391 = vmax.f32 %v2220, %v2335
        %v2392 = vmax.f32 %v2221, %v2302
        %v2393 = vmax.f32 %v2222, %v2336
        %v2394 = vmax.f32 %v2223, %v2337
        %v2395 = vmax.f32 %v2224, %v2308
        %v2396 = vmax.f32 %v2225, %v2338
        %v2397 = vmax.f32 %v2226, %v2339
        %v2398 = vmax.f32 %v2227, %v2314
        %v2399 = vmax.f32 %v2228, %v2340
        %v2400 = vmax.f32 %v2229, %v2341
        %v2401 = vmax.f32 %v2230, %v2320
        %v2402 = vpack.c.bf16 %v2372, 0.0
        %v2403 = vpack.c.bf16 %v2373, 0.0
        %v2404 = vpack.c.bf16 %v2374, 0.0
        %v2405 = vpack.c.bf16 %v2378, %v2375
        %v2406 = vpack.c.bf16 %v2379, %v2376
        %v2407 = vpack.c.bf16 %v2380, %v2377
        %v2408 = vpack.c.bf16 %v2384, %v2381
        %v2409 = vpack.c.bf16 %v2385, %v2382
        %v2410 = vpack.c.bf16 %v2386, %v2383
        %v2411 = vpack.c.bf16 %v2390, %v2387
        %v2412 = vpack.c.bf16 %v2391, %v2388
        %v2413 = vpack.c.bf16 %v2392, %v2389
        %v2414 = vld [vmem:[#allocation3] sm:$0xff]
        %v2415 = vld [vmem:[#allocation3 + $0x8] sm:$0xff]
        %v2416 = vld [vmem:[#allocation3 + $0x10] sm:$0xff]
        %v2417 = vld [vmem:[#allocation3 + $0x18] sm:$0xff]
        %v2418 = vld [vmem:[#allocation3 + $0x20] sm:$0xff]
        %v2419 = vld [vmem:[#allocation3 + $0x28] sm:$0xff]
        %v2420 = vld [vmem:[#allocation3 + $0x30] sm:$0xff]
        %v2421 = vld [vmem:[#allocation3 + $0x38] sm:$0xff]
        %v2422 = vld [vmem:[#allocation3 + $0x40] sm:$0xff]
        %v2423 = vld [vmem:[#allocation3 + $0x48] sm:$0xff]
        %v2424 = vld [vmem:[#allocation3 + $0x50] sm:$0xff]
        %v2425 = vld [vmem:[#allocation3 + $0x58] sm:$0xff]
        %v2426 = vld [vmem:[#allocation3 + $0x60] sm:$0xff]
        %v2427 = vld [vmem:[#allocation3 + $0x68] sm:$0xff]
        %v2428 = vld [vmem:[#allocation3 + $0x70] sm:$0xff]
        %v2429 = vld [vmem:[#allocation3 + $0x78] sm:$0xff]
        %v2430 = vld [vmem:[#allocation3 + $0x80] sm:$0xff]
        %v2431 = vld [vmem:[#allocation3 + $0x88] sm:$0xff]
        %v2432 = vld [vmem:[#allocation3 + $0x90] sm:$0xff]
        %v2433 = vld [vmem:[#allocation3 + $0x98] sm:$0xff]
        %v2434 = vld [vmem:[#allocation3 + $0xa0] sm:$0xff]
        %v2435 = vld [vmem:[#allocation3 + $0xa8] sm:$0xff]
        %v2436 = vld [vmem:[#allocation3 + $0xb0] sm:$0xff]
        %v2437 = vld [vmem:[#allocation3 + $0xb8] sm:$0xff]
        %v2438 = vld [vmem:[#allocation3 + $0xc0] sm:$0xff]
        %v2439 = vld [vmem:[#allocation3 + $0xc8] sm:$0xff]
        %v2440 = vld [vmem:[#allocation3 + $0xd0] sm:$0xff]
        %v2441 = vld [vmem:[#allocation3 + $0xd8] sm:$0xff]
        %v2442 = vld [vmem:[#allocation3 + $0xe0] sm:$0xff]
        %v2443 = vld [vmem:[#allocation3 + $0xe8] sm:$0xff]
        %v2444 = vld [vmem:[#allocation3 + $0xf0] sm:$0xff]
        %v2445 = vld [vmem:[#allocation3 + $0xf8] sm:$0xff]
        %v2446 = vld [vmem:[#allocation3 + $0x100] sm:$0xff]
        %v2447 = vld [vmem:[#allocation3 + $0x108] sm:$0xff]
        %v2448 = vld [vmem:[#allocation3 + $0x110] sm:$0xff]
        %v2449 = vld [vmem:[#allocation3 + $0x118] sm:$0xff]
        %v2450 = vld [vmem:[#allocation3 + $0x120] sm:$0xff]
        %v2451 = vld [vmem:[#allocation3 + $0x128] sm:$0xff]
        %v2452 = vpack.c.bf16 %v2375, %v2372
        %v2453 = vpack.c.bf16 %v2376, %v2373
        %v2454 = vpack.c.bf16 %v2377, %v2374
        %v2455 = vpack.c.bf16 %v2381, %v2378
        %v2456 = vpack.c.bf16 %v2382, %v2379
        %v2457 = vpack.c.bf16 %v2383, %v2380
        %v2458 = vpack.c.bf16 %v2387, %v2384
        %v2459 = vpack.c.bf16 %v2388, %v2385
        %v2460 = vpack.c.bf16 %v2389, %v2386
        %v2461 = vpack.c.bf16 %v2393, %v2390
        %v2462 = vpack.c.bf16 %v2394, %v2391
        %v2463 = vpack.c.bf16 %v2395, %v2392
        %s2464 = scalar_lea.vmem [#allocation3], 304
        %v2465 = vld [vmem:[%s2464] sm:$0xff]
        %v2466 = vld [vmem:[%s2464 + $0x8] sm:$0xff]
        %v2467 = vld [vmem:[%s2464 + $0x10] sm:$0xff]
        %v2468 = vld [vmem:[%s2464 + $0x18] sm:$0xff]
        %v2469 = vld [vmem:[%s2464 + $0x20] sm:$0xff]
        %v2470 = vld [vmem:[%s2464 + $0x28] sm:$0xff]
        %v2471 = vld [vmem:[%s2464 + $0x30] sm:$0xff]
        %v2472 = vld [vmem:[%s2464 + $0x38] sm:$0xff]
        %v2473 = vld [vmem:[%s2464 + $0x40] sm:$0xff]
        %v2474 = vld [vmem:[%s2464 + $0x48] sm:$0xff]
        %v2475 = vld [vmem:[%s2464 + $0x50] sm:$0xff]
        %v2476 = vld [vmem:[%s2464 + $0x58] sm:$0xff]
        %v2477 = vld [vmem:[%s2464 + $0x60] sm:$0xff]
        %v2478 = vld [vmem:[%s2464 + $0x68] sm:$0xff]
        %v2479 = vld [vmem:[%s2464 + $0x70] sm:$0xff]
        %v2480 = vld [vmem:[%s2464 + $0x78] sm:$0xff]
        %v2481 = vld [vmem:[%s2464 + $0x80] sm:$0xff]
        %v2482 = vld [vmem:[%s2464 + $0x88] sm:$0xff]
        %v2483 = vld [vmem:[%s2464 + $0x90] sm:$0xff]
        %v2484 = vld [vmem:[%s2464 + $0x98] sm:$0xff]
        %v2485 = vld [vmem:[%s2464 + $0xa0] sm:$0xff]
        %v2486 = vld [vmem:[%s2464 + $0xa8] sm:$0xff]
        %v2487 = vld [vmem:[%s2464 + $0xb0] sm:$0xff]
        %v2488 = vld [vmem:[%s2464 + $0xb8] sm:$0xff]
        %v2489 = vld [vmem:[%s2464 + $0xc0] sm:$0xff]
        %v2490 = vld [vmem:[%s2464 + $0xc8] sm:$0xff]
        %v2491 = vld [vmem:[%s2464 + $0xd0] sm:$0xff]
        %v2492 = vld [vmem:[%s2464 + $0xd8] sm:$0xff]
        %v2493 = vld [vmem:[%s2464 + $0xe0] sm:$0xff]
        %v2494 = vld [vmem:[%s2464 + $0xe8] sm:$0xff]
        %v2495 = vld [vmem:[%s2464 + $0xf0] sm:$0xff]
        %v2496 = vld [vmem:[%s2464 + $0xf8] sm:$0xff]
        %v2497 = vld [vmem:[%s2464 + $0x100] sm:$0xff]
        %v2498 = vld [vmem:[%s2464 + $0x108] sm:$0xff]
        %v2499 = vld [vmem:[%s2464 + $0x110] sm:$0xff]
        %v2500 = vld [vmem:[%s2464 + $0x118] sm:$0xff]
        %v2501 = vld [vmem:[%s2464 + $0x120] sm:$0xff]
        %v2502 = vld [vmem:[%s2464 + $0x128] sm:$0xff]
        %v2541 = vunpack.c.l.b16 %v2465
        %v2542 = vunpack.c.h.b16 %v2465
        %v2543 = vunpack.c.l.b16 %v2466
        %v2544 = vunpack.c.h.b16 %v2466
        %v2545 = vunpack.c.l.b16 %v2467
        %v2546 = vunpack.c.h.b16 %v2467
        %v2547 = vunpack.c.l.b16 %v2468
        %v2548 = vunpack.c.h.b16 %v2468
        %v2549 = vunpack.c.l.b16 %v2469
        %v2550 = vunpack.c.h.b16 %v2469
        %v2551 = vunpack.c.l.b16 %v2470
        %v2552 = vunpack.c.h.b16 %v2470
        %v2553 = vunpack.c.l.b16 %v2471
        %v2554 = vunpack.c.h.b16 %v2471
        %v2555 = vunpack.c.l.b16 %v2472
        %v2556 = vunpack.c.h.b16 %v2472
        %v2557 = vunpack.c.l.b16 %v2473
        %v2558 = vunpack.c.h.b16 %v2473
        %v2559 = vunpack.c.l.b16 %v2474
        %v2560 = vunpack.c.h.b16 %v2474
        %v2561 = vunpack.c.l.b16 %v2475
        %v2562 = vunpack.c.h.b16 %v2475
        %v2563 = vunpack.c.l.b16 %v2476
        %v2564 = vunpack.c.h.b16 %v2476
        %v2565 = vunpack.c.l.b16 %v2477
        %v2566 = vunpack.c.h.b16 %v2477
        %v2567 = vunpack.c.l.b16 %v2478
        %v2568 = vunpack.c.h.b16 %v2478
        %v2569 = vunpack.c.l.b16 %v2479
        %v2570 = vunpack.c.h.b16 %v2479
        %v2571 = vunpack.c.l.b16 %v2480
        %v2572 = vunpack.c.h.b16 %v2480
        %v2573 = vunpack.c.l.b16 %v2481
        %v2574 = vunpack.c.h.b16 %v2481
        %v2575 = vunpack.c.l.b16 %v2482
        %v2576 = vunpack.c.h.b16 %v2482
        %v2577 = vunpack.c.l.b16 %v2483
        %v2578 = vunpack.c.h.b16 %v2483
        %v2579 = vunpack.c.l.b16 %v2484
        %v2580 = vunpack.c.h.b16 %v2484
        %v2581 = vunpack.c.l.b16 %v2485
        %v2582 = vunpack.c.h.b16 %v2485
        %v2583 = vunpack.c.l.b16 %v2486
        %v2584 = vunpack.c.h.b16 %v2486
        %v2585 = vunpack.c.l.b16 %v2487
        %v2586 = vunpack.c.h.b16 %v2487
        %v2587 = vunpack.c.l.b16 %v2488
        %v2588 = vunpack.c.h.b16 %v2488
        %v2589 = vunpack.c.l.b16 %v2489
        %v2590 = vunpack.c.h.b16 %v2489
        %v2591 = vunpack.c.l.b16 %v2490
        %v2592 = vunpack.c.h.b16 %v2490
        %v2593 = vunpack.c.l.b16 %v2491
        %v2594 = vunpack.c.h.b16 %v2491
        %v2595 = vunpack.c.l.b16 %v2492
        %v2596 = vunpack.c.h.b16 %v2492
        %v2597 = vunpack.c.l.b16 %v2493
        %v2598 = vunpack.c.h.b16 %v2493
        %v2599 = vunpack.c.l.b16 %v2494
        %v2600 = vunpack.c.h.b16 %v2494
        %v2601 = vunpack.c.l.b16 %v2495
        %v2602 = vunpack.c.h.b16 %v2495
        %v2603 = vunpack.c.l.b16 %v2496
        %v2604 = vunpack.c.h.b16 %v2496
        %v2605 = vunpack.c.l.b16 %v2497
        %v2606 = vunpack.c.h.b16 %v2497
        %v2607 = vunpack.c.l.b16 %v2498
        %v2608 = vunpack.c.h.b16 %v2498
        %v2609 = vunpack.c.l.b16 %v2499
        %v2610 = vunpack.c.h.b16 %v2499
        %v2611 = vunpack.c.l.b16 %v2500
        %v2612 = vunpack.c.h.b16 %v2500
        %v2613 = vunpack.c.l.b16 %v2501
        %v2614 = vunpack.c.h.b16 %v2501
        %v2615 = vunpack.c.l.b16 %v2502
        %v2616 = vunpack.c.h.b16 %v2502
        %v2617 = vpack.c.b16 %v2543, %v2541
        %v2618 = vpack.c.b16 %v2544, %v2542
        %v2619 = vpack.c.b16 %v2547, %v2545
        %v2620 = vpack.c.b16 %v2548, %v2546
        %v2621 = vpack.c.b16 %v2551, %v2549
        %v2622 = vpack.c.b16 %v2552, %v2550
        %v2623 = vpack.c.b16 %v2555, %v2553
        %v2624 = vpack.c.b16 %v2556, %v2554
        %v2625 = vpack.c.b16 %v2559, %v2557
        %v2626 = vpack.c.b16 %v2560, %v2558
        %v2627 = vpack.c.b16 %v2563, %v2561
        %v2628 = vpack.c.b16 %v2564, %v2562
        %v2629 = vpack.c.b16 %v2567, %v2565
        %v2630 = vpack.c.b16 %v2568, %v2566
        %v2631 = vpack.c.b16 %v2571, %v2569
        %v2632 = vpack.c.b16 %v2572, %v2570
        %v2633 = vpack.c.b16 %v2575, %v2573
        %v2634 = vpack.c.b16 %v2576, %v2574
        %v2635 = vpack.c.b16 %v2579, %v2577
        %v2636 = vpack.c.b16 %v2580, %v2578
        %v2637 = vpack.c.b16 %v2583, %v2581
        %v2638 = vpack.c.b16 %v2584, %v2582
        %v2639 = vpack.c.b16 %v2587, %v2585
        %v2640 = vpack.c.b16 %v2588, %v2586
        %v2641 = vpack.c.b16 %v2591, %v2589
        %v2642 = vpack.c.b16 %v2592, %v2590
        %v2643 = vpack.c.b16 %v2595, %v2593
        %v2644 = vpack.c.b16 %v2596, %v2594
        %v2645 = vpack.c.b16 %v2599, %v2597
        %v2646 = vpack.c.b16 %v2600, %v2598
        %v2647 = vpack.c.b16 %v2603, %v2601
        %v2648 = vpack.c.b16 %v2604, %v2602
        %v2649 = vpack.c.b16 %v2607, %v2605
        %v2650 = vpack.c.b16 %v2608, %v2606
        %v2651 = vpack.c.b16 %v2611, %v2609
        %v2652 = vpack.c.b16 %v2612, %v2610
        %v2653 = vpack.c.b16 %v2615, %v2613
        %v2654 = vpack.c.b16 %v2616, %v2614
        %vm2693 = vcmask 392192
        %v2695 = vsel %vm2693, %v2454, 0
        %v2698 = vsel %vm2693, %v2457, 0
        %v2701 = vsel %vm2693, %v2460, 0
        %v2704 = vsel %vm2693, %v2463, 0
        %2706 = vmatpush.bf16.msra.mxu0 %v2631
        %2707 = vmatpush.bf16.msra.mxu0 %v2629
        %2708 = vmatpush.bf16.msra.mxu0 %v2627
        %2709 = vmatpush.bf16.msra.mxu0 %v2625
        %2710 = vmatpush.bf16.msra.mxu0 %v2623
        %2711 = vmatpush.bf16.msra.mxu0 %v2621
        %2712 = vmatpush.bf16.msra.mxu0 %v2619
        %2713 = vmatpush.bf16.msra.mxu0 %v2617
        %2714 = vmatmul.bf16.gmra.mxu0 %v2452
        %v2715 = vpop.f32.mrf.mxu0
        %v2716 = vadd.f32 0.0, %v2715
        %v2717 = vpop.f32.mrf.mxu0
        %v2718 = vadd.f32 0.0, %v2717
        %2719 = vmatmul.bf16.gmra.mxu0 %v2455
        %v2720 = vpop.f32.mrf.mxu0
        %v2721 = vadd.f32 0.0, %v2720
        %v2722 = vpop.f32.mrf.mxu0
        %v2723 = vadd.f32 0.0, %v2722
        %2724 = vmatmul.bf16.gmra.mxu0 %v2458
        %v2725 = vpop.f32.mrf.mxu0
        %v2726 = vadd.f32 0.0, %v2725
        %v2727 = vpop.f32.mrf.mxu0
        %v2728 = vadd.f32 0.0, %v2727
        %2729 = vmatmul.bf16.gmra.mxu0 %v2461
        %v2730 = vpop.f32.mrf.mxu0
        %v2731 = vadd.f32 0.0, %v2730
        %v2732 = vpop.f32.mrf.mxu0
        %v2733 = vadd.f32 0.0, %v2732
        %2734 = vdwg.mxu0
        %2735 = vmatpush.bf16.msra.mxu0 %v2647
        %2736 = vmatpush.bf16.msra.mxu0 %v2645
        %2737 = vmatpush.bf16.msra.mxu0 %v2643
        %2738 = vmatpush.bf16.msra.mxu0 %v2641
        %2739 = vmatpush.bf16.msra.mxu0 %v2639
        %2740 = vmatpush.bf16.msra.mxu0 %v2637
        %2741 = vmatpush.bf16.msra.mxu0 %v2635
        %2742 = vmatpush.bf16.msra.mxu0 %v2633
        %2743 = vmatmul.bf16.gmra.mxu0 %v2453
        %v2744 = vpop.f32.mrf.mxu0
        %v2745 = vadd.f32 %v2716, %v2744
        %v2746 = vpop.f32.mrf.mxu0
        %v2747 = vadd.f32 %v2718, %v2746
        %2748 = vmatmul.bf16.gmra.mxu0 %v2456
        %v2749 = vpop.f32.mrf.mxu0
        %v2750 = vadd.f32 %v2721, %v2749
        %v2751 = vpop.f32.mrf.mxu0
        %v2752 = vadd.f32 %v2723, %v2751
        %2753 = vmatmul.bf16.gmra.mxu0 %v2459
        %v2754 = vpop.f32.mrf.mxu0
        %v2755 = vadd.f32 %v2726, %v2754
        %v2756 = vpop.f32.mrf.mxu0
        %v2757 = vadd.f32 %v2728, %v2756
        %2758 = vmatmul.bf16.gmra.mxu0 %v2462
        %v2759 = vpop.f32.mrf.mxu0
        %v2760 = vadd.f32 %v2731, %v2759
        %v2761 = vpop.f32.mrf.mxu0
        %v2762 = vadd.f32 %v2733, %v2761
        %2763 = vdwg.mxu0
        %2764 = vmatpush.bf16.msra.mxu0 0
        %2765 = vmatpush.bf16.msra.mxu0 0
        %2766 = vmatpush.bf16.msra.mxu0 0
        %2767 = vmatpush.bf16.msra.mxu0 0
        %2768 = vmatpush.bf16.msra.mxu0 0
        %2769 = vmatpush.bf16.msra.mxu0 %v2653
        %2770 = vmatpush.bf16.msra.mxu0 %v2651
        %2771 = vmatpush.bf16.msra.mxu0 %v2649
        %2772 = vmatmul.bf16.gmra.mxu0 %v2695
        %v2773 = vpop.f32.mrf.mxu0
        %v2774 = vadd.f32 %v2745, %v2773
        %v2775 = vpop.f32.mrf.mxu0
        %v2776 = vadd.f32 %v2747, %v2775
        %2777 = vmatmul.bf16.gmra.mxu0 %v2698
        %v2778 = vpop.f32.mrf.mxu0
        %v2779 = vadd.f32 %v2750, %v2778
        %v2780 = vpop.f32.mrf.mxu0
        %v2781 = vadd.f32 %v2752, %v2780
        %2782 = vmatmul.bf16.gmra.mxu0 %v2701
        %v2783 = vpop.f32.mrf.mxu0
        %v2784 = vadd.f32 %v2755, %v2783
        %v2785 = vpop.f32.mrf.mxu0
        %v2786 = vadd.f32 %v2757, %v2785
        %2787 = vmatmul.bf16.gmra.mxu0 %v2704
        %v2788 = vpop.f32.mrf.mxu0
        %v2789 = vadd.f32 %v2760, %v2788
        %v2790 = vpop.f32.mrf.mxu0
        %v2791 = vadd.f32 %v2762, %v2790
        %2792 = vdwg.mxu0
        %2793 = vmatpush.bf16.msra.mxu0 %v2632
        %2794 = vmatpush.bf16.msra.mxu0 %v2630
        %2795 = vmatpush.bf16.msra.mxu0 %v2628
        %2796 = vmatpush.bf16.msra.mxu0 %v2626
        %2797 = vmatpush.bf16.msra.mxu0 %v2624
        %2798 = vmatpush.bf16.msra.mxu0 %v2622
        %2799 = vmatpush.bf16.msra.mxu0 %v2620
        %2800 = vmatpush.bf16.msra.mxu0 %v2618
        %2801 = vmatmul.bf16.gmra.mxu0 %v2452
        %v2802 = vpop.f32.mrf.mxu0
        %v2803 = vadd.f32 0.0, %v2802
        %v2804 = vpop.f32.mrf.mxu0
        %v2805 = vadd.f32 0.0, %v2804
        %2806 = vmatmul.bf16.gmra.mxu0 %v2455
        %v2807 = vpop.f32.mrf.mxu0
        %v2808 = vadd.f32 0.0, %v2807
        %v2809 = vpop.f32.mrf.mxu0
        %v2810 = vadd.f32 0.0, %v2809
        %2811 = vmatmul.bf16.gmra.mxu0 %v2458
        %v2812 = vpop.f32.mrf.mxu0
        %v2813 = vadd.f32 0.0, %v2812
        %v2814 = vpop.f32.mrf.mxu0
        %v2815 = vadd.f32 0.0, %v2814
        %2816 = vmatmul.bf16.gmra.mxu0 %v2461
        %v2817 = vpop.f32.mrf.mxu0
        %v2818 = vadd.f32 0.0, %v2817
        %v2819 = vpop.f32.mrf.mxu0
        %v2820 = vadd.f32 0.0, %v2819
        %2821 = vdwg.mxu0
        %2822 = vmatpush.bf16.msra.mxu0 %v2648
        %2823 = vmatpush.bf16.msra.mxu0 %v2646
        %2824 = vmatpush.bf16.msra.mxu0 %v2644
        %2825 = vmatpush.bf16.msra.mxu0 %v2642
        %2826 = vmatpush.bf16.msra.mxu0 %v2640
        %2827 = vmatpush.bf16.msra.mxu0 %v2638
        %2828 = vmatpush.bf16.msra.mxu0 %v2636
        %2829 = vmatpush.bf16.msra.mxu0 %v2634
        %2830 = vmatmul.bf16.gmra.mxu0 %v2453
        %v2831 = vpop.f32.mrf.mxu0
        %v2832 = vadd.f32 %v2803, %v2831
        %v2833 = vpop.f32.mrf.mxu0
        %v2834 = vadd.f32 %v2805, %v2833
        %2835 = vmatmul.bf16.gmra.mxu0 %v2456
        %v2836 = vpop.f32.mrf.mxu0
        %v2837 = vadd.f32 %v2808, %v2836
        %v2838 = vpop.f32.mrf.mxu0
        %v2839 = vadd.f32 %v2810, %v2838
        %2840 = vmatmul.bf16.gmra.mxu0 %v2459
        %v2841 = vpop.f32.mrf.mxu0
        %v2842 = vadd.f32 %v2813, %v2841
        %v2843 = vpop.f32.mrf.mxu0
        %v2844 = vadd.f32 %v2815, %v2843
        %2845 = vmatmul.bf16.gmra.mxu0 %v2462
        %v2846 = vpop.f32.mrf.mxu0
        %v2847 = vadd.f32 %v2818, %v2846
        %v2848 = vpop.f32.mrf.mxu0
        %v2849 = vadd.f32 %v2820, %v2848
        %2850 = vdwg.mxu0
        %2851 = vmatpush.bf16.msra.mxu0 0
        %2852 = vmatpush.bf16.msra.mxu0 0
        %2853 = vmatpush.bf16.msra.mxu0 0
        %2854 = vmatpush.bf16.msra.mxu0 0
        %2855 = vmatpush.bf16.msra.mxu0 0
        %2856 = vmatpush.bf16.msra.mxu0 %v2654
        %2857 = vmatpush.bf16.msra.mxu0 %v2652
        %2858 = vmatpush.bf16.msra.mxu0 %v2650
        %2859 = vmatmul.bf16.gmra.mxu0 %v2695
        %v2860 = vpop.f32.mrf.mxu0
        %v2861 = vadd.f32 %v2832, %v2860
        %v2862 = vpop.f32.mrf.mxu0
        %v2863 = vadd.f32 %v2834, %v2862
        %2864 = vmatmul.bf16.gmra.mxu0 %v2698
        %v2865 = vpop.f32.mrf.mxu0
        %v2866 = vadd.f32 %v2837, %v2865
        %v2867 = vpop.f32.mrf.mxu0
        %v2868 = vadd.f32 %v2839, %v2867
        %2869 = vmatmul.bf16.gmra.mxu0 %v2701
        %v2870 = vpop.f32.mrf.mxu0
        %v2871 = vadd.f32 %v2842, %v2870
        %v2872 = vpop.f32.mrf.mxu0
        %v2873 = vadd.f32 %v2844, %v2872
        %2874 = vmatmul.bf16.gmra.mxu0 %v2704
        %v2875 = vpop.f32.mrf.mxu0
        %v2876 = vadd.f32 %v2847, %v2875
        %v2877 = vpop.f32.mrf.mxu0
        %v2878 = vadd.f32 %v2849, %v2877
        %2879 = vdwg.mxu0
        %v2918 = vunpack.c.l.b16 %v2414
        %v2919 = vunpack.c.h.b16 %v2414
        %v2920 = vunpack.c.l.b16 %v2415
        %v2921 = vunpack.c.h.b16 %v2415
        %v2922 = vunpack.c.l.b16 %v2416
        %v2923 = vunpack.c.h.b16 %v2416
        %v2924 = vunpack.c.l.b16 %v2417
        %v2925 = vunpack.c.h.b16 %v2417
        %v2926 = vunpack.c.l.b16 %v2418
        %v2927 = vunpack.c.h.b16 %v2418
        %v2928 = vunpack.c.l.b16 %v2419
        %v2929 = vunpack.c.h.b16 %v2419
        %v2930 = vunpack.c.l.b16 %v2420
        %v2931 = vunpack.c.h.b16 %v2420
        %v2932 = vunpack.c.l.b16 %v2421
        %v2933 = vunpack.c.h.b16 %v2421
        %v2934 = vunpack.c.l.b16 %v2422
        %v2935 = vunpack.c.h.b16 %v2422
        %v2936 = vunpack.c.l.b16 %v2423
        %v2937 = vunpack.c.h.b16 %v2423
        %v2938 = vunpack.c.l.b16 %v2424
        %v2939 = vunpack.c.h.b16 %v2424
        %v2940 = vunpack.c.l.b16 %v2425
        %v2941 = vunpack.c.h.b16 %v2425
        %v2942 = vunpack.c.l.b16 %v2426
        %v2943 = vunpack.c.h.b16 %v2426
        %v2944 = vunpack.c.l.b16 %v2427
        %v2945 = vunpack.c.h.b16 %v2427
        %v2946 = vunpack.c.l.b16 %v2428
        %v2947 = vunpack.c.h.b16 %v2428
        %v2948 = vunpack.c.l.b16 %v2429
        %v2949 = vunpack.c.h.b16 %v2429
        %v2950 = vunpack.c.l.b16 %v2430
        %v2951 = vunpack.c.h.b16 %v2430
        %v2952 = vunpack.c.l.b16 %v2431
        %v2953 = vunpack.c.h.b16 %v2431
        %v2954 = vunpack.c.l.b16 %v2432
        %v2955 = vunpack.c.h.b16 %v2432
        %v2956 = vunpack.c.l.b16 %v2433
        %v2957 = vunpack.c.h.b16 %v2433
        %v2958 = vunpack.c.l.b16 %v2434
        %v2959 = vunpack.c.h.b16 %v2434
        %v2960 = vunpack.c.l.b16 %v2435
        %v2961 = vunpack.c.h.b16 %v2435
        %v2962 = vunpack.c.l.b16 %v2436
        %v2963 = vunpack.c.h.b16 %v2436
        %v2964 = vunpack.c.l.b16 %v2437
        %v2965 = vunpack.c.h.b16 %v2437
        %v2966 = vunpack.c.l.b16 %v2438
        %v2967 = vunpack.c.h.b16 %v2438
        %v2968 = vunpack.c.l.b16 %v2439
        %v2969 = vunpack.c.h.b16 %v2439
        %v2970 = vunpack.c.l.b16 %v2440
        %v2971 = vunpack.c.h.b16 %v2440
        %v2972 = vunpack.c.l.b16 %v2441
        %v2973 = vunpack.c.h.b16 %v2441
        %v2974 = vunpack.c.l.b16 %v2442
        %v2975 = vunpack.c.h.b16 %v2442
        %v2976 = vunpack.c.l.b16 %v2443
        %v2977 = vunpack.c.h.b16 %v2443
        %v2978 = vunpack.c.l.b16 %v2444
        %v2979 = vunpack.c.h.b16 %v2444
        %v2980 = vunpack.c.l.b16 %v2445
        %v2981 = vunpack.c.h.b16 %v2445
        %v2982 = vunpack.c.l.b16 %v2446
        %v2983 = vunpack.c.h.b16 %v2446
        %v2984 = vunpack.c.l.b16 %v2447
        %v2985 = vunpack.c.h.b16 %v2447
        %v2986 = vunpack.c.l.b16 %v2448
        %v2987 = vunpack.c.h.b16 %v2448
        %v2988 = vunpack.c.l.b16 %v2449
        %v2989 = vunpack.c.h.b16 %v2449
        %v2990 = vunpack.c.l.b16 %v2450
        %v2991 = vunpack.c.h.b16 %v2450
        %v2992 = vunpack.c.l.b16 %v2451
        %v2993 = vunpack.c.h.b16 %v2451
        %v2994 = vpack.c.b16 %v2920, %v2918
        %v2995 = vpack.c.b16 %v2921, %v2919
        %v2996 = vpack.c.b16 %v2924, %v2922
        %v2997 = vpack.c.b16 %v2925, %v2923
        %v2998 = vpack.c.b16 %v2928, %v2926
        %v2999 = vpack.c.b16 %v2929, %v2927
        %v3000 = vpack.c.b16 %v2932, %v2930
        %v3001 = vpack.c.b16 %v2933, %v2931
        %v3002 = vpack.c.b16 %v2936, %v2934
        %v3003 = vpack.c.b16 %v2937, %v2935
        %v3004 = vpack.c.b16 %v2940, %v2938
        %v3005 = vpack.c.b16 %v2941, %v2939
        %v3006 = vpack.c.b16 %v2944, %v2942
        %v3007 = vpack.c.b16 %v2945, %v2943
        %v3008 = vpack.c.b16 %v2948, %v2946
        %v3009 = vpack.c.b16 %v2949, %v2947
        %v3010 = vpack.c.b16 %v2952, %v2950
        %v3011 = vpack.c.b16 %v2953, %v2951
        %v3012 = vpack.c.b16 %v2956, %v2954
        %v3013 = vpack.c.b16 %v2957, %v2955
        %v3014 = vpack.c.b16 %v2960, %v2958
        %v3015 = vpack.c.b16 %v2961, %v2959
        %v3016 = vpack.c.b16 %v2964, %v2962
        %v3017 = vpack.c.b16 %v2965, %v2963
        %v3018 = vpack.c.b16 %v2968, %v2966
        %v3019 = vpack.c.b16 %v2969, %v2967
        %v3020 = vpack.c.b16 %v2972, %v2970
        %v3021 = vpack.c.b16 %v2973, %v2971
        %v3022 = vpack.c.b16 %v2976, %v2974
        %v3023 = vpack.c.b16 %v2977, %v2975
        %v3024 = vpack.c.b16 %v2980, %v2978
        %v3025 = vpack.c.b16 %v2981, %v2979
        %v3026 = vpack.c.b16 %v2984, %v2982
        %v3027 = vpack.c.b16 %v2985, %v2983
        %v3028 = vpack.c.b16 %v2988, %v2986
        %v3029 = vpack.c.b16 %v2989, %v2987
        %v3030 = vpack.c.b16 %v2992, %v2990
        %v3031 = vpack.c.b16 %v2993, %v2991
        %v3071 = vsel %vm2693, %v2404, 0
        %v3074 = vsel %vm2693, %v2407, 0
        %v3077 = vsel %vm2693, %v2410, 0
        %v3080 = vsel %vm2693, %v2413, 0
        %3082 = vmatpush.bf16.msra.mxu0 %v3008
        %3083 = vmatpush.bf16.msra.mxu0 %v3006
        %3084 = vmatpush.bf16.msra.mxu0 %v3004
        %3085 = vmatpush.bf16.msra.mxu0 %v3002
        %3086 = vmatpush.bf16.msra.mxu0 %v3000
        %3087 = vmatpush.bf16.msra.mxu0 %v2998
        %3088 = vmatpush.bf16.msra.mxu0 %v2996
        %3089 = vmatpush.bf16.msra.mxu0 %v2994
        %3090 = vmatmul.bf16.gmra.mxu0 %v2402
        %v3091 = vpop.f32.mrf.mxu0
        %v3092 = vadd.f32 %v2774, %v3091
        %v3093 = vpop.f32.mrf.mxu0
        %v3094 = vadd.f32 %v2776, %v3093
        %3095 = vmatmul.bf16.gmra.mxu0 %v2405
        %v3096 = vpop.f32.mrf.mxu0
        %v3097 = vadd.f32 %v2779, %v3096
        %v3098 = vpop.f32.mrf.mxu0
        %v3099 = vadd.f32 %v2781, %v3098
        %3100 = vmatmul.bf16.gmra.mxu0 %v2408
        %v3101 = vpop.f32.mrf.mxu0
        %v3102 = vadd.f32 %v2784, %v3101
        %v3103 = vpop.f32.mrf.mxu0
        %v3104 = vadd.f32 %v2786, %v3103
        %3105 = vmatmul.bf16.gmra.mxu0 %v2411
        %v3106 = vpop.f32.mrf.mxu0
        %v3107 = vadd.f32 %v2789, %v3106
        %v3108 = vpop.f32.mrf.mxu0
        %v3109 = vadd.f32 %v2791, %v3108
        %3110 = vdwg.mxu0
        %3111 = vmatpush.bf16.msra.mxu0 %v3024
        %3112 = vmatpush.bf16.msra.mxu0 %v3022
        %3113 = vmatpush.bf16.msra.mxu0 %v3020
        %3114 = vmatpush.bf16.msra.mxu0 %v3018
        %3115 = vmatpush.bf16.msra.mxu0 %v3016
        %3116 = vmatpush.bf16.msra.mxu0 %v3014
        %3117 = vmatpush.bf16.msra.mxu0 %v3012
        %3118 = vmatpush.bf16.msra.mxu0 %v3010
        %3119 = vmatmul.bf16.gmra.mxu0 %v2403
        %v3120 = vpop.f32.mrf.mxu0
        %v3121 = vadd.f32 %v3092, %v3120
        %v3122 = vpop.f32.mrf.mxu0
        %v3123 = vadd.f32 %v3094, %v3122
        %3124 = vmatmul.bf16.gmra.mxu0 %v2406
        %v3125 = vpop.f32.mrf.mxu0
        %v3126 = vadd.f32 %v3097, %v3125
        %v3127 = vpop.f32.mrf.mxu0
        %v3128 = vadd.f32 %v3099, %v3127
        %3129 = vmatmul.bf16.gmra.mxu0 %v2409
        %v3130 = vpop.f32.mrf.mxu0
        %v3131 = vadd.f32 %v3102, %v3130
        %v3132 = vpop.f32.mrf.mxu0
        %v3133 = vadd.f32 %v3104, %v3132
        %3134 = vmatmul.bf16.gmra.mxu0 %v2412
        %v3135 = vpop.f32.mrf.mxu0
        %v3136 = vadd.f32 %v3107, %v3135
        %v3137 = vpop.f32.mrf.mxu0
        %v3138 = vadd.f32 %v3109, %v3137
        %3139 = vdwg.mxu0
        %3140 = vmatpush.bf16.msra.mxu0 0
        %3141 = vmatpush.bf16.msra.mxu0 0
        %3142 = vmatpush.bf16.msra.mxu0 0
        %3143 = vmatpush.bf16.msra.mxu0 0
        %3144 = vmatpush.bf16.msra.mxu0 0
        %3145 = vmatpush.bf16.msra.mxu0 %v3030
        %3146 = vmatpush.bf16.msra.mxu0 %v3028
        %3147 = vmatpush.bf16.msra.mxu0 %v3026
        %3148 = vmatmul.bf16.gmra.mxu0 %v3071
        %v3149 = vpop.f32.mrf.mxu0
        %v3150 = vadd.f32 %v3121, %v3149
        %v3151 = vpop.f32.mrf.mxu0
        %v3152 = vadd.f32 %v3123, %v3151
        %3153 = vmatmul.bf16.gmra.mxu0 %v3074
        %v3154 = vpop.f32.mrf.mxu0
        %v3155 = vadd.f32 %v3126, %v3154
        %v3156 = vpop.f32.mrf.mxu0
        %v3157 = vadd.f32 %v3128, %v3156
        %3158 = vmatmul.bf16.gmra.mxu0 %v3077
        %v3159 = vpop.f32.mrf.mxu0
        %v3160 = vadd.f32 %v3131, %v3159
        %v3161 = vpop.f32.mrf.mxu0
        %v3162 = vadd.f32 %v3133, %v3161
        %3163 = vmatmul.bf16.gmra.mxu0 %v3080
        %v3164 = vpop.f32.mrf.mxu0
        %v3165 = vadd.f32 %v3136, %v3164
        %v3166 = vpop.f32.mrf.mxu0
        %v3167 = vadd.f32 %v3138, %v3166
        %3168 = vdwg.mxu0
        %3169 = vmatpush.bf16.msra.mxu0 %v3009
        %3170 = vmatpush.bf16.msra.mxu0 %v3007
        %3171 = vmatpush.bf16.msra.mxu0 %v3005
        %3172 = vmatpush.bf16.msra.mxu0 %v3003
        %3173 = vmatpush.bf16.msra.mxu0 %v3001
        %3174 = vmatpush.bf16.msra.mxu0 %v2999
        %3175 = vmatpush.bf16.msra.mxu0 %v2997
        %3176 = vmatpush.bf16.msra.mxu0 %v2995
        %3177 = vmatmul.bf16.gmra.mxu0 %v2402
        %v3178 = vpop.f32.mrf.mxu0
        %v3179 = vadd.f32 %v2861, %v3178
        %v3180 = vpop.f32.mrf.mxu0
        %v3181 = vadd.f32 %v2863, %v3180
        %3182 = vmatmul.bf16.gmra.mxu0 %v2405
        %v3183 = vpop.f32.mrf.mxu0
        %v3184 = vadd.f32 %v2866, %v3183
        %v3185 = vpop.f32.mrf.mxu0
        %v3186 = vadd.f32 %v2868, %v3185
        %3187 = vmatmul.bf16.gmra.mxu0 %v2408
        %v3188 = vpop.f32.mrf.mxu0
        %v3189 = vadd.f32 %v2871, %v3188
        %v3190 = vpop.f32.mrf.mxu0
        %v3191 = vadd.f32 %v2873, %v3190
        %3192 = vmatmul.bf16.gmra.mxu0 %v2411
        %v3193 = vpop.f32.mrf.mxu0
        %v3194 = vadd.f32 %v2876, %v3193
        %v3195 = vpop.f32.mrf.mxu0
        %v3196 = vadd.f32 %v2878, %v3195
        %3197 = vdwg.mxu0
        %3198 = vmatpush.bf16.msra.mxu0 %v3025
        %3199 = vmatpush.bf16.msra.mxu0 %v3023
        %3200 = vmatpush.bf16.msra.mxu0 %v3021
        %3201 = vmatpush.bf16.msra.mxu0 %v3019
        %3202 = vmatpush.bf16.msra.mxu0 %v3017
        %3203 = vmatpush.bf16.msra.mxu0 %v3015
        %3204 = vmatpush.bf16.msra.mxu0 %v3013
        %3205 = vmatpush.bf16.msra.mxu0 %v3011
        %3206 = vmatmul.bf16.gmra.mxu0 %v2403
        %v3207 = vpop.f32.mrf.mxu0
        %v3208 = vadd.f32 %v3179, %v3207
        %v3209 = vpop.f32.mrf.mxu0
        %v3210 = vadd.f32 %v3181, %v3209
        %3211 = vmatmul.bf16.gmra.mxu0 %v2406
        %v3212 = vpop.f32.mrf.mxu0
        %v3213 = vadd.f32 %v3184, %v3212
        %v3214 = vpop.f32.mrf.mxu0
        %v3215 = vadd.f32 %v3186, %v3214
        %3216 = vmatmul.bf16.gmra.mxu0 %v2409
        %v3217 = vpop.f32.mrf.mxu0
        %v3218 = vadd.f32 %v3189, %v3217
        %v3219 = vpop.f32.mrf.mxu0
        %v3220 = vadd.f32 %v3191, %v3219
        %3221 = vmatmul.bf16.gmra.mxu0 %v2412
        %v3222 = vpop.f32.mrf.mxu0
        %v3223 = vadd.f32 %v3194, %v3222
        %v3224 = vpop.f32.mrf.mxu0
        %v3225 = vadd.f32 %v3196, %v3224
        %3226 = vdwg.mxu0
        %3227 = vmatpush.bf16.msra.mxu0 0
        %3228 = vmatpush.bf16.msra.mxu0 0
        %3229 = vmatpush.bf16.msra.mxu0 0
        %3230 = vmatpush.bf16.msra.mxu0 0
        %3231 = vmatpush.bf16.msra.mxu0 0
        %3232 = vmatpush.bf16.msra.mxu0 %v3031
        %3233 = vmatpush.bf16.msra.mxu0 %v3029
        %3234 = vmatpush.bf16.msra.mxu0 %v3027
        %3235 = vmatmul.bf16.gmra.mxu0 %v3071
        %v3236 = vpop.f32.mrf.mxu0
        %v3237 = vadd.f32 %v3208, %v3236
        %v3238 = vpop.f32.mrf.mxu0
        %v3239 = vadd.f32 %v3210, %v3238
        %3240 = vmatmul.bf16.gmra.mxu0 %v3074
        %v3241 = vpop.f32.mrf.mxu0
        %v3242 = vadd.f32 %v3213, %v3241
        %v3243 = vpop.f32.mrf.mxu0
        %v3244 = vadd.f32 %v3215, %v3243
        %3245 = vmatmul.bf16.gmra.mxu0 %v3077
        %v3246 = vpop.f32.mrf.mxu0
        %v3247 = vadd.f32 %v3218, %v3246
        %v3248 = vpop.f32.mrf.mxu0
        %v3249 = vadd.f32 %v3220, %v3248
        %3250 = vmatmul.bf16.gmra.mxu0 %v3080
        %v3251 = vpop.f32.mrf.mxu0
        %v3252 = vadd.f32 %v3223, %v3251
        %v3253 = vpop.f32.mrf.mxu0
        %v3254 = vadd.f32 %v3225, %v3253
        %3255 = vdwg.mxu0
        %v3256 = vpack.c.bf16 %v2396, %v2393
        %v3257 = vpack.c.bf16 %v2397, %v2394
        %v3258 = vpack.c.bf16 %v2398, %v2395
        %s3259 = scalar_lea.vmem [#allocation3], 608
        %v3260 = vld [vmem:[%s3259] sm:$0xff]
        %v3261 = vld [vmem:[%s3259 + $0x8] sm:$0xff]
        %v3262 = vld [vmem:[%s3259 + $0x10] sm:$0xff]
        %v3263 = vld [vmem:[%s3259 + $0x18] sm:$0xff]
        %v3264 = vld [vmem:[%s3259 + $0x20] sm:$0xff]
        %v3265 = vld [vmem:[%s3259 + $0x28] sm:$0xff]
        %v3266 = vld [vmem:[%s3259 + $0x30] sm:$0xff]
        %v3267 = vld [vmem:[%s3259 + $0x38] sm:$0xff]
        %v3268 = vld [vmem:[%s3259 + $0x40] sm:$0xff]
        %v3269 = vld [vmem:[%s3259 + $0x48] sm:$0xff]
        %v3270 = vld [vmem:[%s3259 + $0x50] sm:$0xff]
        %v3271 = vld [vmem:[%s3259 + $0x58] sm:$0xff]
        %v3272 = vld [vmem:[%s3259 + $0x60] sm:$0xff]
        %v3273 = vld [vmem:[%s3259 + $0x68] sm:$0xff]
        %v3274 = vld [vmem:[%s3259 + $0x70] sm:$0xff]
        %v3275 = vld [vmem:[%s3259 + $0x78] sm:$0xff]
        %v3276 = vld [vmem:[%s3259 + $0x80] sm:$0xff]
        %v3277 = vld [vmem:[%s3259 + $0x88] sm:$0xff]
        %v3278 = vld [vmem:[%s3259 + $0x90] sm:$0xff]
        %v3279 = vld [vmem:[%s3259 + $0x98] sm:$0xff]
        %v3280 = vld [vmem:[%s3259 + $0xa0] sm:$0xff]
        %v3281 = vld [vmem:[%s3259 + $0xa8] sm:$0xff]
        %v3282 = vld [vmem:[%s3259 + $0xb0] sm:$0xff]
        %v3283 = vld [vmem:[%s3259 + $0xb8] sm:$0xff]
        %v3284 = vld [vmem:[%s3259 + $0xc0] sm:$0xff]
        %v3285 = vld [vmem:[%s3259 + $0xc8] sm:$0xff]
        %v3286 = vld [vmem:[%s3259 + $0xd0] sm:$0xff]
        %v3287 = vld [vmem:[%s3259 + $0xd8] sm:$0xff]
        %v3288 = vld [vmem:[%s3259 + $0xe0] sm:$0xff]
        %v3289 = vld [vmem:[%s3259 + $0xe8] sm:$0xff]
        %v3290 = vld [vmem:[%s3259 + $0xf0] sm:$0xff]
        %v3291 = vld [vmem:[%s3259 + $0xf8] sm:$0xff]
        %v3292 = vld [vmem:[%s3259 + $0x100] sm:$0xff]
        %v3293 = vld [vmem:[%s3259 + $0x108] sm:$0xff]
        %v3294 = vld [vmem:[%s3259 + $0x110] sm:$0xff]
        %v3295 = vld [vmem:[%s3259 + $0x118] sm:$0xff]
        %v3296 = vld [vmem:[%s3259 + $0x120] sm:$0xff]
        %v3297 = vld [vmem:[%s3259 + $0x128] sm:$0xff]
        %v3336 = vunpack.c.l.b16 %v3260
        %v3337 = vunpack.c.h.b16 %v3260
        %v3338 = vunpack.c.l.b16 %v3261
        %v3339 = vunpack.c.h.b16 %v3261
        %v3340 = vunpack.c.l.b16 %v3262
        %v3341 = vunpack.c.h.b16 %v3262
        %v3342 = vunpack.c.l.b16 %v3263
        %v3343 = vunpack.c.h.b16 %v3263
        %v3344 = vunpack.c.l.b16 %v3264
        %v3345 = vunpack.c.h.b16 %v3264
        %v3346 = vunpack.c.l.b16 %v3265
        %v3347 = vunpack.c.h.b16 %v3265
        %v3348 = vunpack.c.l.b16 %v3266
        %v3349 = vunpack.c.h.b16 %v3266
        %v3350 = vunpack.c.l.b16 %v3267
        %v3351 = vunpack.c.h.b16 %v3267
        %v3352 = vunpack.c.l.b16 %v3268
        %v3353 = vunpack.c.h.b16 %v3268
        %v3354 = vunpack.c.l.b16 %v3269
        %v3355 = vunpack.c.h.b16 %v3269
        %v3356 = vunpack.c.l.b16 %v3270
        %v3357 = vunpack.c.h.b16 %v3270
        %v3358 = vunpack.c.l.b16 %v3271
        %v3359 = vunpack.c.h.b16 %v3271
        %v3360 = vunpack.c.l.b16 %v3272
        %v3361 = vunpack.c.h.b16 %v3272
        %v3362 = vunpack.c.l.b16 %v3273
        %v3363 = vunpack.c.h.b16 %v3273
        %v3364 = vunpack.c.l.b16 %v3274
        %v3365 = vunpack.c.h.b16 %v3274
        %v3366 = vunpack.c.l.b16 %v3275
        %v3367 = vunpack.c.h.b16 %v3275
        %v3368 = vunpack.c.l.b16 %v3276
        %v3369 = vunpack.c.h.b16 %v3276
        %v3370 = vunpack.c.l.b16 %v3277
        %v3371 = vunpack.c.h.b16 %v3277
        %v3372 = vunpack.c.l.b16 %v3278
        %v3373 = vunpack.c.h.b16 %v3278
        %v3374 = vunpack.c.l.b16 %v3279
        %v3375 = vunpack.c.h.b16 %v3279
        %v3376 = vunpack.c.l.b16 %v3280
        %v3377 = vunpack.c.h.b16 %v3280
        %v3378 = vunpack.c.l.b16 %v3281
        %v3379 = vunpack.c.h.b16 %v3281
        %v3380 = vunpack.c.l.b16 %v3282
        %v3381 = vunpack.c.h.b16 %v3282
        %v3382 = vunpack.c.l.b16 %v3283
        %v3383 = vunpack.c.h.b16 %v3283
        %v3384 = vunpack.c.l.b16 %v3284
        %v3385 = vunpack.c.h.b16 %v3284
        %v3386 = vunpack.c.l.b16 %v3285
        %v3387 = vunpack.c.h.b16 %v3285
        %v3388 = vunpack.c.l.b16 %v3286
        %v3389 = vunpack.c.h.b16 %v3286
        %v3390 = vunpack.c.l.b16 %v3287
        %v3391 = vunpack.c.h.b16 %v3287
        %v3392 = vunpack.c.l.b16 %v3288
        %v3393 = vunpack.c.h.b16 %v3288
        %v3394 = vunpack.c.l.b16 %v3289
        %v3395 = vunpack.c.h.b16 %v3289
        %v3396 = vunpack.c.l.b16 %v3290
        %v3397 = vunpack.c.h.b16 %v3290
        %v3398 = vunpack.c.l.b16 %v3291
        %v3399 = vunpack.c.h.b16 %v3291
        %v3400 = vunpack.c.l.b16 %v3292
        %v3401 = vunpack.c.h.b16 %v3292
        %v3402 = vunpack.c.l.b16 %v3293
        %v3403 = vunpack.c.h.b16 %v3293
        %v3404 = vunpack.c.l.b16 %v3294
        %v3405 = vunpack.c.h.b16 %v3294
        %v3406 = vunpack.c.l.b16 %v3295
        %v3407 = vunpack.c.h.b16 %v3295
        %v3408 = vunpack.c.l.b16 %v3296
        %v3409 = vunpack.c.h.b16 %v3296
        %v3410 = vunpack.c.l.b16 %v3297
        %v3411 = vunpack.c.h.b16 %v3297
        %v3412 = vpack.c.b16 %v3338, %v3336
        %v3413 = vpack.c.b16 %v3339, %v3337
        %v3414 = vpack.c.b16 %v3342, %v3340
        %v3415 = vpack.c.b16 %v3343, %v3341
        %v3416 = vpack.c.b16 %v3346, %v3344
        %v3417 = vpack.c.b16 %v3347, %v3345
        %v3418 = vpack.c.b16 %v3350, %v3348
        %v3419 = vpack.c.b16 %v3351, %v3349
        %v3420 = vpack.c.b16 %v3354, %v3352
        %v3421 = vpack.c.b16 %v3355, %v3353
        %v3422 = vpack.c.b16 %v3358, %v3356
        %v3423 = vpack.c.b16 %v3359, %v3357
        %v3424 = vpack.c.b16 %v3362, %v3360
        %v3425 = vpack.c.b16 %v3363, %v3361
        %v3426 = vpack.c.b16 %v3366, %v3364
        %v3427 = vpack.c.b16 %v3367, %v3365
        %v3428 = vpack.c.b16 %v3370, %v3368
        %v3429 = vpack.c.b16 %v3371, %v3369
        %v3430 = vpack.c.b16 %v3374, %v3372
        %v3431 = vpack.c.b16 %v3375, %v3373
        %v3432 = vpack.c.b16 %v3378, %v3376
        %v3433 = vpack.c.b16 %v3379, %v3377
        %v3434 = vpack.c.b16 %v3382, %v3380
        %v3435 = vpack.c.b16 %v3383, %v3381
        %v3436 = vpack.c.b16 %v3386, %v3384
        %v3437 = vpack.c.b16 %v3387, %v3385
        %v3438 = vpack.c.b16 %v3390, %v3388
        %v3439 = vpack.c.b16 %v3391, %v3389
        %v3440 = vpack.c.b16 %v3394, %v3392
        %v3441 = vpack.c.b16 %v3395, %v3393
        %v3442 = vpack.c.b16 %v3398, %v3396
        %v3443 = vpack.c.b16 %v3399, %v3397
        %v3444 = vpack.c.b16 %v3402, %v3400
        %v3445 = vpack.c.b16 %v3403, %v3401
        %v3446 = vpack.c.b16 %v3406, %v3404
        %v3447 = vpack.c.b16 %v3407, %v3405
        %v3448 = vpack.c.b16 %v3410, %v3408
        %v3449 = vpack.c.b16 %v3411, %v3409
        %v3489 = vsel %vm2693, %v3258, 0
        %3491 = vmatpush.bf16.msra.mxu0 %v3426
        %3492 = vmatpush.bf16.msra.mxu0 %v3424
        %3493 = vmatpush.bf16.msra.mxu0 %v3422
        %3494 = vmatpush.bf16.msra.mxu0 %v3420
        %3495 = vmatpush.bf16.msra.mxu0 %v3418
        %3496 = vmatpush.bf16.msra.mxu0 %v3416
        %3497 = vmatpush.bf16.msra.mxu0 %v3414
        %3498 = vmatpush.bf16.msra.mxu0 %v3412
        %3499 = vmatmul.bf16.gmra.mxu0 %v2405
        %v3500 = vpop.f32.mrf.mxu0
        %v3501 = vadd.f32 0.0, %v3500
        %v3502 = vpop.f32.mrf.mxu0
        %v3503 = vadd.f32 0.0, %v3502
        %3504 = vmatmul.bf16.gmra.mxu0 %v2408
        %v3505 = vpop.f32.mrf.mxu0
        %v3506 = vadd.f32 0.0, %v3505
        %v3507 = vpop.f32.mrf.mxu0
        %v3508 = vadd.f32 0.0, %v3507
        %3509 = vmatmul.bf16.gmra.mxu0 %v2411
        %v3510 = vpop.f32.mrf.mxu0
        %v3511 = vadd.f32 0.0, %v3510
        %v3512 = vpop.f32.mrf.mxu0
        %v3513 = vadd.f32 0.0, %v3512
        %3514 = vmatmul.bf16.gmra.mxu0 %v3256
        %v3515 = vpop.f32.mrf.mxu0
        %v3516 = vadd.f32 0.0, %v3515
        %v3517 = vpop.f32.mrf.mxu0
        %v3518 = vadd.f32 0.0, %v3517
        %3519 = vdwg.mxu0
        %3520 = vmatpush.bf16.msra.mxu0 %v3442
        %3521 = vmatpush.bf16.msra.mxu0 %v3440
        %3522 = vmatpush.bf16.msra.mxu0 %v3438
        %3523 = vmatpush.bf16.msra.mxu0 %v3436
        %3524 = vmatpush.bf16.msra.mxu0 %v3434
        %3525 = vmatpush.bf16.msra.mxu0 %v3432
        %3526 = vmatpush.bf16.msra.mxu0 %v3430
        %3527 = vmatpush.bf16.msra.mxu0 %v3428
        %3528 = vmatmul.bf16.gmra.mxu0 %v2406
        %v3529 = vpop.f32.mrf.mxu0
        %v3530 = vadd.f32 %v3501, %v3529
        %v3531 = vpop.f32.mrf.mxu0
        %v3532 = vadd.f32 %v3503, %v3531
        %3533 = vmatmul.bf16.gmra.mxu0 %v2409
        %v3534 = vpop.f32.mrf.mxu0
        %v3535 = vadd.f32 %v3506, %v3534
        %v3536 = vpop.f32.mrf.mxu0
        %v3537 = vadd.f32 %v3508, %v3536
        %3538 = vmatmul.bf16.gmra.mxu0 %v2412
        %v3539 = vpop.f32.mrf.mxu0
        %v3540 = vadd.f32 %v3511, %v3539
        %v3541 = vpop.f32.mrf.mxu0
        %v3542 = vadd.f32 %v3513, %v3541
        %3543 = vmatmul.bf16.gmra.mxu0 %v3257
        %v3544 = vpop.f32.mrf.mxu0
        %v3545 = vadd.f32 %v3516, %v3544
        %v3546 = vpop.f32.mrf.mxu0
        %v3547 = vadd.f32 %v3518, %v3546
        %3548 = vdwg.mxu0
        %3549 = vmatpush.bf16.msra.mxu0 0
        %3550 = vmatpush.bf16.msra.mxu0 0
        %3551 = vmatpush.bf16.msra.mxu0 0
        %3552 = vmatpush.bf16.msra.mxu0 0
        %3553 = vmatpush.bf16.msra.mxu0 0
        %3554 = vmatpush.bf16.msra.mxu0 %v3448
        %3555 = vmatpush.bf16.msra.mxu0 %v3446
        %3556 = vmatpush.bf16.msra.mxu0 %v3444
        %3557 = vmatmul.bf16.gmra.mxu0 %v3074
        %v3558 = vpop.f32.mrf.mxu0
        %v3559 = vadd.f32 %v3530, %v3558
        %v3560 = vpop.f32.mrf.mxu0
        %v3561 = vadd.f32 %v3532, %v3560
        %3562 = vmatmul.bf16.gmra.mxu0 %v3077
        %v3563 = vpop.f32.mrf.mxu0
        %v3564 = vadd.f32 %v3535, %v3563
        %v3565 = vpop.f32.mrf.mxu0
        %v3566 = vadd.f32 %v3537, %v3565
        %3567 = vmatmul.bf16.gmra.mxu0 %v3080
        %v3568 = vpop.f32.mrf.mxu0
        %v3569 = vadd.f32 %v3540, %v3568
        %v3570 = vpop.f32.mrf.mxu0
        %v3571 = vadd.f32 %v3542, %v3570
        %3572 = vmatmul.bf16.gmra.mxu0 %v3489
        %v3573 = vpop.f32.mrf.mxu0
        %v3574 = vadd.f32 %v3545, %v3573
        %v3575 = vpop.f32.mrf.mxu0
        %v3576 = vadd.f32 %v3547, %v3575
        %3577 = vdwg.mxu0
        %3578 = vmatpush.bf16.msra.mxu0 %v3427
        %3579 = vmatpush.bf16.msra.mxu0 %v3425
        %3580 = vmatpush.bf16.msra.mxu0 %v3423
        %3581 = vmatpush.bf16.msra.mxu0 %v3421
        %3582 = vmatpush.bf16.msra.mxu0 %v3419
        %3583 = vmatpush.bf16.msra.mxu0 %v3417
        %3584 = vmatpush.bf16.msra.mxu0 %v3415
        %3585 = vmatpush.bf16.msra.mxu0 %v3413
        %3586 = vmatmul.bf16.gmra.mxu0 %v2405
        %v3587 = vpop.f32.mrf.mxu0
        %v3588 = vadd.f32 0.0, %v3587
        %v3589 = vpop.f32.mrf.mxu0
        %v3590 = vadd.f32 0.0, %v3589
        %3591 = vmatmul.bf16.gmra.mxu0 %v2408
        %v3592 = vpop.f32.mrf.mxu0
        %v3593 = vadd.f32 0.0, %v3592
        %v3594 = vpop.f32.mrf.mxu0
        %v3595 = vadd.f32 0.0, %v3594
        %3596 = vmatmul.bf16.gmra.mxu0 %v2411
        %v3597 = vpop.f32.mrf.mxu0
        %v3598 = vadd.f32 0.0, %v3597
        %v3599 = vpop.f32.mrf.mxu0
        %v3600 = vadd.f32 0.0, %v3599
        %3601 = vmatmul.bf16.gmra.mxu0 %v3256
        %v3602 = vpop.f32.mrf.mxu0
        %v3603 = vadd.f32 0.0, %v3602
        %v3604 = vpop.f32.mrf.mxu0
        %v3605 = vadd.f32 0.0, %v3604
        %3606 = vdwg.mxu0
        %3607 = vmatpush.bf16.msra.mxu0 %v3443
        %3608 = vmatpush.bf16.msra.mxu0 %v3441
        %3609 = vmatpush.bf16.msra.mxu0 %v3439
        %3610 = vmatpush.bf16.msra.mxu0 %v3437
        %3611 = vmatpush.bf16.msra.mxu0 %v3435
        %3612 = vmatpush.bf16.msra.mxu0 %v3433
        %3613 = vmatpush.bf16.msra.mxu0 %v3431
        %3614 = vmatpush.bf16.msra.mxu0 %v3429
        %3615 = vmatmul.bf16.gmra.mxu0 %v2406
        %v3616 = vpop.f32.mrf.mxu0
        %v3617 = vadd.f32 %v3588, %v3616
        %v3618 = vpop.f32.mrf.mxu0
        %v3619 = vadd.f32 %v3590, %v3618
        %3620 = vmatmul.bf16.gmra.mxu0 %v2409
        %v3621 = vpop.f32.mrf.mxu0
        %v3622 = vadd.f32 %v3593, %v3621
        %v3623 = vpop.f32.mrf.mxu0
        %v3624 = vadd.f32 %v3595, %v3623
        %3625 = vmatmul.bf16.gmra.mxu0 %v2412
        %v3626 = vpop.f32.mrf.mxu0
        %v3627 = vadd.f32 %v3598, %v3626
        %v3628 = vpop.f32.mrf.mxu0
        %v3629 = vadd.f32 %v3600, %v3628
        %3630 = vmatmul.bf16.gmra.mxu0 %v3257
        %v3631 = vpop.f32.mrf.mxu0
        %v3632 = vadd.f32 %v3603, %v3631
        %v3633 = vpop.f32.mrf.mxu0
        %v3634 = vadd.f32 %v3605, %v3633
        %3635 = vdwg.mxu0
        %3636 = vmatpush.bf16.msra.mxu0 0
        %3637 = vmatpush.bf16.msra.mxu0 0
        %3638 = vmatpush.bf16.msra.mxu0 0
        %3639 = vmatpush.bf16.msra.mxu0 0
        %3640 = vmatpush.bf16.msra.mxu0 0
        %3641 = vmatpush.bf16.msra.mxu0 %v3449
        %3642 = vmatpush.bf16.msra.mxu0 %v3447
        %3643 = vmatpush.bf16.msra.mxu0 %v3445
        %3644 = vmatmul.bf16.gmra.mxu0 %v3074
        %v3645 = vpop.f32.mrf.mxu0
        %v3646 = vadd.f32 %v3617, %v3645
        %v3647 = vpop.f32.mrf.mxu0
        %v3648 = vadd.f32 %v3619, %v3647
        %3649 = vmatmul.bf16.gmra.mxu0 %v3077
        %v3650 = vpop.f32.mrf.mxu0
        %v3651 = vadd.f32 %v3622, %v3650
        %v3652 = vpop.f32.mrf.mxu0
        %v3653 = vadd.f32 %v3624, %v3652
        %3654 = vmatmul.bf16.gmra.mxu0 %v3080
        %v3655 = vpop.f32.mrf.mxu0
        %v3656 = vadd.f32 %v3627, %v3655
        %v3657 = vpop.f32.mrf.mxu0
        %v3658 = vadd.f32 %v3629, %v3657
        %3659 = vmatmul.bf16.gmra.mxu0 %v3489
        %v3660 = vpop.f32.mrf.mxu0
        %v3661 = vadd.f32 %v3632, %v3660
        %v3662 = vpop.f32.mrf.mxu0
        %v3663 = vadd.f32 %v3634, %v3662
        %3664 = vdwg.mxu0
        %v3665 = vadd.f32 %v3150, %v3559
        %v3666 = vadd.f32 %v3237, %v3646
        %v3667 = vadd.f32 %v3152, %v3561
        %v3668 = vadd.f32 %v3239, %v3648
        %v3669 = vadd.f32 %v3155, %v3564
        %v3670 = vadd.f32 %v3242, %v3651
        %v3671 = vadd.f32 %v3157, %v3566
        %v3672 = vadd.f32 %v3244, %v3653
        %v3673 = vadd.f32 %v3160, %v3569
        %v3674 = vadd.f32 %v3247, %v3656
        %v3675 = vadd.f32 %v3162, %v3571
        %v3676 = vadd.f32 %v3249, %v3658
        %v3677 = vadd.f32 %v3165, %v3574
        %v3678 = vadd.f32 %v3252, %v3661
        %v3679 = vadd.f32 %v3167, %v3576
        %v3680 = vadd.f32 %v3254, %v3663
        %v3681 = vpack.c.bf16 %v2399, %v2396
        %v3682 = vpack.c.bf16 %v2400, %v2397
        %v3683 = vpack.c.bf16 %v2401, %v2398
        %s3684 = scalar_lea.vmem [#allocation3], 912
        %v3685 = vld [vmem:[%s3684] sm:$0xff]
        %v3686 = vld [vmem:[%s3684 + $0x8] sm:$0xff]
        %v3687 = vld [vmem:[%s3684 + $0x10] sm:$0xff]
        %v3688 = vld [vmem:[%s3684 + $0x18] sm:$0xff]
        %v3689 = vld [vmem:[%s3684 + $0x20] sm:$0xff]
        %v3690 = vld [vmem:[%s3684 + $0x28] sm:$0xff]
        %v3691 = vld [vmem:[%s3684 + $0x30] sm:$0xff]
        %v3692 = vld [vmem:[%s3684 + $0x38] sm:$0xff]
        %v3693 = vld [vmem:[%s3684 + $0x40] sm:$0xff]
        %v3694 = vld [vmem:[%s3684 + $0x48] sm:$0xff]
        %v3695 = vld [vmem:[%s3684 + $0x50] sm:$0xff]
        %v3696 = vld [vmem:[%s3684 + $0x58] sm:$0xff]
        %v3697 = vld [vmem:[%s3684 + $0x60] sm:$0xff]
        %v3698 = vld [vmem:[%s3684 + $0x68] sm:$0xff]
        %v3699 = vld [vmem:[%s3684 + $0x70] sm:$0xff]
        %v3700 = vld [vmem:[%s3684 + $0x78] sm:$0xff]
        %v3701 = vld [vmem:[%s3684 + $0x80] sm:$0xff]
        %v3702 = vld [vmem:[%s3684 + $0x88] sm:$0xff]
        %v3703 = vld [vmem:[%s3684 + $0x90] sm:$0xff]
        %v3704 = vld [vmem:[%s3684 + $0x98] sm:$0xff]
        %v3705 = vld [vmem:[%s3684 + $0xa0] sm:$0xff]
        %v3706 = vld [vmem:[%s3684 + $0xa8] sm:$0xff]
        %v3707 = vld [vmem:[%s3684 + $0xb0] sm:$0xff]
        %v3708 = vld [vmem:[%s3684 + $0xb8] sm:$0xff]
        %v3709 = vld [vmem:[%s3684 + $0xc0] sm:$0xff]
        %v3710 = vld [vmem:[%s3684 + $0xc8] sm:$0xff]
        %v3711 = vld [vmem:[%s3684 + $0xd0] sm:$0xff]
        %v3712 = vld [vmem:[%s3684 + $0xd8] sm:$0xff]
        %v3713 = vld [vmem:[%s3684 + $0xe0] sm:$0xff]
        %v3714 = vld [vmem:[%s3684 + $0xe8] sm:$0xff]
        %v3715 = vld [vmem:[%s3684 + $0xf0] sm:$0xff]
        %v3716 = vld [vmem:[%s3684 + $0xf8] sm:$0xff]
        %v3717 = vld [vmem:[%s3684 + $0x100] sm:$0xff]
        %v3718 = vld [vmem:[%s3684 + $0x108] sm:$0xff]
        %v3719 = vld [vmem:[%s3684 + $0x110] sm:$0xff]
        %v3720 = vld [vmem:[%s3684 + $0x118] sm:$0xff]
        %v3721 = vld [vmem:[%s3684 + $0x120] sm:$0xff]
        %v3722 = vld [vmem:[%s3684 + $0x128] sm:$0xff]
        %v3761 = vunpack.c.l.b16 %v3685
        %v3762 = vunpack.c.h.b16 %v3685
        %v3763 = vunpack.c.l.b16 %v3686
        %v3764 = vunpack.c.h.b16 %v3686
        %v3765 = vunpack.c.l.b16 %v3687
        %v3766 = vunpack.c.h.b16 %v3687
        %v3767 = vunpack.c.l.b16 %v3688
        %v3768 = vunpack.c.h.b16 %v3688
        %v3769 = vunpack.c.l.b16 %v3689
        %v3770 = vunpack.c.h.b16 %v3689
        %v3771 = vunpack.c.l.b16 %v3690
        %v3772 = vunpack.c.h.b16 %v3690
        %v3773 = vunpack.c.l.b16 %v3691
        %v3774 = vunpack.c.h.b16 %v3691
        %v3775 = vunpack.c.l.b16 %v3692
        %v3776 = vunpack.c.h.b16 %v3692
        %v3777 = vunpack.c.l.b16 %v3693
        %v3778 = vunpack.c.h.b16 %v3693
        %v3779 = vunpack.c.l.b16 %v3694
        %v3780 = vunpack.c.h.b16 %v3694
        %v3781 = vunpack.c.l.b16 %v3695
        %v3782 = vunpack.c.h.b16 %v3695
        %v3783 = vunpack.c.l.b16 %v3696
        %v3784 = vunpack.c.h.b16 %v3696
        %v3785 = vunpack.c.l.b16 %v3697
        %v3786 = vunpack.c.h.b16 %v3697
        %v3787 = vunpack.c.l.b16 %v3698
        %v3788 = vunpack.c.h.b16 %v3698
        %v3789 = vunpack.c.l.b16 %v3699
        %v3790 = vunpack.c.h.b16 %v3699
        %v3791 = vunpack.c.l.b16 %v3700
        %v3792 = vunpack.c.h.b16 %v3700
        %v3793 = vunpack.c.l.b16 %v3701
        %v3794 = vunpack.c.h.b16 %v3701
        %v3795 = vunpack.c.l.b16 %v3702
        %v3796 = vunpack.c.h.b16 %v3702
        %v3797 = vunpack.c.l.b16 %v3703
        %v3798 = vunpack.c.h.b16 %v3703
        %v3799 = vunpack.c.l.b16 %v3704
        %v3800 = vunpack.c.h.b16 %v3704
        %v3801 = vunpack.c.l.b16 %v3705
        %v3802 = vunpack.c.h.b16 %v3705
        %v3803 = vunpack.c.l.b16 %v3706
        %v3804 = vunpack.c.h.b16 %v3706
        %v3805 = vunpack.c.l.b16 %v3707
        %v3806 = vunpack.c.h.b16 %v3707
        %v3807 = vunpack.c.l.b16 %v3708
        %v3808 = vunpack.c.h.b16 %v3708
        %v3809 = vunpack.c.l.b16 %v3709
        %v3810 = vunpack.c.h.b16 %v3709
        %v3811 = vunpack.c.l.b16 %v3710
        %v3812 = vunpack.c.h.b16 %v3710
        %v3813 = vunpack.c.l.b16 %v3711
        %v3814 = vunpack.c.h.b16 %v3711
        %v3815 = vunpack.c.l.b16 %v3712
        %v3816 = vunpack.c.h.b16 %v3712
        %v3817 = vunpack.c.l.b16 %v3713
        %v3818 = vunpack.c.h.b16 %v3713
        %v3819 = vunpack.c.l.b16 %v3714
        %v3820 = vunpack.c.h.b16 %v3714
        %v3821 = vunpack.c.l.b16 %v3715
        %v3822 = vunpack.c.h.b16 %v3715
        %v3823 = vunpack.c.l.b16 %v3716
        %v3824 = vunpack.c.h.b16 %v3716
        %v3825 = vunpack.c.l.b16 %v3717
        %v3826 = vunpack.c.h.b16 %v3717
        %v3827 = vunpack.c.l.b16 %v3718
        %v3828 = vunpack.c.h.b16 %v3718
        %v3829 = vunpack.c.l.b16 %v3719
        %v3830 = vunpack.c.h.b16 %v3719
        %v3831 = vunpack.c.l.b16 %v3720
        %v3832 = vunpack.c.h.b16 %v3720
        %v3833 = vunpack.c.l.b16 %v3721
        %v3834 = vunpack.c.h.b16 %v3721
        %v3835 = vunpack.c.l.b16 %v3722
        %v3836 = vunpack.c.h.b16 %v3722
        %v3837 = vpack.c.b16 %v3763, %v3761
        %v3838 = vpack.c.b16 %v3764, %v3762
        %v3839 = vpack.c.b16 %v3767, %v3765
        %v3840 = vpack.c.b16 %v3768, %v3766
        %v3841 = vpack.c.b16 %v3771, %v3769
        %v3842 = vpack.c.b16 %v3772, %v3770
        %v3843 = vpack.c.b16 %v3775, %v3773
        %v3844 = vpack.c.b16 %v3776, %v3774
        %v3845 = vpack.c.b16 %v3779, %v3777
        %v3846 = vpack.c.b16 %v3780, %v3778
        %v3847 = vpack.c.b16 %v3783, %v3781
        %v3848 = vpack.c.b16 %v3784, %v3782
        %v3849 = vpack.c.b16 %v3787, %v3785
        %v3850 = vpack.c.b16 %v3788, %v3786
        %v3851 = vpack.c.b16 %v3791, %v3789
        %v3852 = vpack.c.b16 %v3792, %v3790
        %v3853 = vpack.c.b16 %v3795, %v3793
        %v3854 = vpack.c.b16 %v3796, %v3794
        %v3855 = vpack.c.b16 %v3799, %v3797
        %v3856 = vpack.c.b16 %v3800, %v3798
        %v3857 = vpack.c.b16 %v3803, %v3801
        %v3858 = vpack.c.b16 %v3804, %v3802
        %v3859 = vpack.c.b16 %v3807, %v3805
        %v3860 = vpack.c.b16 %v3808, %v3806
        %v3861 = vpack.c.b16 %v3811, %v3809
        %v3862 = vpack.c.b16 %v3812, %v3810
        %v3863 = vpack.c.b16 %v3815, %v3813
        %v3864 = vpack.c.b16 %v3816, %v3814
        %v3865 = vpack.c.b16 %v3819, %v3817
        %v3866 = vpack.c.b16 %v3820, %v3818
        %v3867 = vpack.c.b16 %v3823, %v3821
        %v3868 = vpack.c.b16 %v3824, %v3822
        %v3869 = vpack.c.b16 %v3827, %v3825
        %v3870 = vpack.c.b16 %v3828, %v3826
        %v3871 = vpack.c.b16 %v3831, %v3829
        %v3872 = vpack.c.b16 %v3832, %v3830
        %v3873 = vpack.c.b16 %v3835, %v3833
        %v3874 = vpack.c.b16 %v3836, %v3834
        %v3914 = vsel %vm2693, %v3683, 0
        %3916 = vmatpush.bf16.msra.mxu0 %v3851
        %3917 = vmatpush.bf16.msra.mxu0 %v3849
        %3918 = vmatpush.bf16.msra.mxu0 %v3847
        %3919 = vmatpush.bf16.msra.mxu0 %v3845
        %3920 = vmatpush.bf16.msra.mxu0 %v3843
        %3921 = vmatpush.bf16.msra.mxu0 %v3841
        %3922 = vmatpush.bf16.msra.mxu0 %v3839
        %3923 = vmatpush.bf16.msra.mxu0 %v3837
        %3924 = vmatmul.bf16.gmra.mxu0 %v2455
        %v3925 = vpop.f32.mrf.mxu0
        %v3926 = vadd.f32 0.0, %v3925
        %v3927 = vpop.f32.mrf.mxu0
        %v3928 = vadd.f32 0.0, %v3927
        %3929 = vmatmul.bf16.gmra.mxu0 %v2458
        %v3930 = vpop.f32.mrf.mxu0
        %v3931 = vadd.f32 0.0, %v3930
        %v3932 = vpop.f32.mrf.mxu0
        %v3933 = vadd.f32 0.0, %v3932
        %3934 = vmatmul.bf16.gmra.mxu0 %v2461
        %v3935 = vpop.f32.mrf.mxu0
        %v3936 = vadd.f32 0.0, %v3935
        %v3937 = vpop.f32.mrf.mxu0
        %v3938 = vadd.f32 0.0, %v3937
        %3939 = vmatmul.bf16.gmra.mxu0 %v3681
        %v3940 = vpop.f32.mrf.mxu0
        %v3941 = vadd.f32 0.0, %v3940
        %v3942 = vpop.f32.mrf.mxu0
        %v3943 = vadd.f32 0.0, %v3942
        %3944 = vdwg.mxu0
        %3945 = vmatpush.bf16.msra.mxu0 %v3867
        %3946 = vmatpush.bf16.msra.mxu0 %v3865
        %3947 = vmatpush.bf16.msra.mxu0 %v3863
        %3948 = vmatpush.bf16.msra.mxu0 %v3861
        %3949 = vmatpush.bf16.msra.mxu0 %v3859
        %3950 = vmatpush.bf16.msra.mxu0 %v3857
        %3951 = vmatpush.bf16.msra.mxu0 %v3855
        %3952 = vmatpush.bf16.msra.mxu0 %v3853
        %3953 = vmatmul.bf16.gmra.mxu0 %v2456
        %v3954 = vpop.f32.mrf.mxu0
        %v3955 = vadd.f32 %v3926, %v3954
        %v3956 = vpop.f32.mrf.mxu0
        %v3957 = vadd.f32 %v3928, %v3956
        %3958 = vmatmul.bf16.gmra.mxu0 %v2459
        %v3959 = vpop.f32.mrf.mxu0
        %v3960 = vadd.f32 %v3931, %v3959
        %v3961 = vpop.f32.mrf.mxu0
        %v3962 = vadd.f32 %v3933, %v3961
        %3963 = vmatmul.bf16.gmra.mxu0 %v2462
        %v3964 = vpop.f32.mrf.mxu0
        %v3965 = vadd.f32 %v3936, %v3964
        %v3966 = vpop.f32.mrf.mxu0
        %v3967 = vadd.f32 %v3938, %v3966
        %3968 = vmatmul.bf16.gmra.mxu0 %v3682
        %v3969 = vpop.f32.mrf.mxu0
        %v3970 = vadd.f32 %v3941, %v3969
        %v3971 = vpop.f32.mrf.mxu0
        %v3972 = vadd.f32 %v3943, %v3971
        %3973 = vdwg.mxu0
        %3974 = vmatpush.bf16.msra.mxu0 0
        %3975 = vmatpush.bf16.msra.mxu0 0
        %3976 = vmatpush.bf16.msra.mxu0 0
        %3977 = vmatpush.bf16.msra.mxu0 0
        %3978 = vmatpush.bf16.msra.mxu0 0
        %3979 = vmatpush.bf16.msra.mxu0 %v3873
        %3980 = vmatpush.bf16.msra.mxu0 %v3871
        %3981 = vmatpush.bf16.msra.mxu0 %v3869
        %3982 = vmatmul.bf16.gmra.mxu0 %v2698
        %v3983 = vpop.f32.mrf.mxu0
        %v3984 = vadd.f32 %v3955, %v3983
        %v3985 = vpop.f32.mrf.mxu0
        %v3986 = vadd.f32 %v3957, %v3985
        %3987 = vmatmul.bf16.gmra.mxu0 %v2701
        %v3988 = vpop.f32.mrf.mxu0
        %v3989 = vadd.f32 %v3960, %v3988
        %v3990 = vpop.f32.mrf.mxu0
        %v3991 = vadd.f32 %v3962, %v3990
        %3992 = vmatmul.bf16.gmra.mxu0 %v2704
        %v3993 = vpop.f32.mrf.mxu0
        %v3994 = vadd.f32 %v3965, %v3993
        %v3995 = vpop.f32.mrf.mxu0
        %v3996 = vadd.f32 %v3967, %v3995
        %3997 = vmatmul.bf16.gmra.mxu0 %v3914
        %v3998 = vpop.f32.mrf.mxu0
        %v3999 = vadd.f32 %v3970, %v3998
        %v4000 = vpop.f32.mrf.mxu0
        %v4001 = vadd.f32 %v3972, %v4000
        %4002 = vdwg.mxu0
        %4003 = vmatpush.bf16.msra.mxu0 %v3852
        %4004 = vmatpush.bf16.msra.mxu0 %v3850
        %4005 = vmatpush.bf16.msra.mxu0 %v3848
        %4006 = vmatpush.bf16.msra.mxu0 %v3846
        %4007 = vmatpush.bf16.msra.mxu0 %v3844
        %4008 = vmatpush.bf16.msra.mxu0 %v3842
        %4009 = vmatpush.bf16.msra.mxu0 %v3840
        %4010 = vmatpush.bf16.msra.mxu0 %v3838
        %4011 = vmatmul.bf16.gmra.mxu0 %v2455
        %v4012 = vpop.f32.mrf.mxu0
        %v4013 = vadd.f32 0.0, %v4012
        %v4014 = vpop.f32.mrf.mxu0
        %v4015 = vadd.f32 0.0, %v4014
        %4016 = vmatmul.bf16.gmra.mxu0 %v2458
        %v4017 = vpop.f32.mrf.mxu0
        %v4018 = vadd.f32 0.0, %v4017
        %v4019 = vpop.f32.mrf.mxu0
        %v4020 = vadd.f32 0.0, %v4019
        %4021 = vmatmul.bf16.gmra.mxu0 %v2461
        %v4022 = vpop.f32.mrf.mxu0
        %v4023 = vadd.f32 0.0, %v4022
        %v4024 = vpop.f32.mrf.mxu0
        %v4025 = vadd.f32 0.0, %v4024
        %4026 = vmatmul.bf16.gmra.mxu0 %v3681
        %v4027 = vpop.f32.mrf.mxu0
        %v4028 = vadd.f32 0.0, %v4027
        %v4029 = vpop.f32.mrf.mxu0
        %v4030 = vadd.f32 0.0, %v4029
        %4031 = vdwg.mxu0
        %4032 = vmatpush.bf16.msra.mxu0 %v3868
        %4033 = vmatpush.bf16.msra.mxu0 %v3866
        %4034 = vmatpush.bf16.msra.mxu0 %v3864
        %4035 = vmatpush.bf16.msra.mxu0 %v3862
        %4036 = vmatpush.bf16.msra.mxu0 %v3860
        %4037 = vmatpush.bf16.msra.mxu0 %v3858
        %4038 = vmatpush.bf16.msra.mxu0 %v3856
        %4039 = vmatpush.bf16.msra.mxu0 %v3854
        %4040 = vmatmul.bf16.gmra.mxu0 %v2456
        %v4041 = vpop.f32.mrf.mxu0
        %v4042 = vadd.f32 %v4013, %v4041
        %v4043 = vpop.f32.mrf.mxu0
        %v4044 = vadd.f32 %v4015, %v4043
        %4045 = vmatmul.bf16.gmra.mxu0 %v2459
        %v4046 = vpop.f32.mrf.mxu0
        %v4047 = vadd.f32 %v4018, %v4046
        %v4048 = vpop.f32.mrf.mxu0
        %v4049 = vadd.f32 %v4020, %v4048
        %4050 = vmatmul.bf16.gmra.mxu0 %v2462
        %v4051 = vpop.f32.mrf.mxu0
        %v4052 = vadd.f32 %v4023, %v4051
        %v4053 = vpop.f32.mrf.mxu0
        %v4054 = vadd.f32 %v4025, %v4053
        %4055 = vmatmul.bf16.gmra.mxu0 %v3682
        %v4056 = vpop.f32.mrf.mxu0
        %v4057 = vadd.f32 %v4028, %v4056
        %v4058 = vpop.f32.mrf.mxu0
        %v4059 = vadd.f32 %v4030, %v4058
        %4060 = vdwg.mxu0
        %4061 = vmatpush.bf16.msra.mxu0 0
        %4062 = vmatpush.bf16.msra.mxu0 0
        %4063 = vmatpush.bf16.msra.mxu0 0
        %4064 = vmatpush.bf16.msra.mxu0 0
        %4065 = vmatpush.bf16.msra.mxu0 0
        %4066 = vmatpush.bf16.msra.mxu0 %v3874
        %4067 = vmatpush.bf16.msra.mxu0 %v3872
        %4068 = vmatpush.bf16.msra.mxu0 %v3870
        %4069 = vmatmul.bf16.gmra.mxu0 %v2698
        %v4070 = vpop.f32.mrf.mxu0
        %v4071 = vadd.f32 %v4042, %v4070
        %v4072 = vpop.f32.mrf.mxu0
        %v4073 = vadd.f32 %v4044, %v4072
        %4074 = vmatmul.bf16.gmra.mxu0 %v2701
        %v4075 = vpop.f32.mrf.mxu0
        %v4076 = vadd.f32 %v4047, %v4075
        %v4077 = vpop.f32.mrf.mxu0
        %v4078 = vadd.f32 %v4049, %v4077
        %4079 = vmatmul.bf16.gmra.mxu0 %v2704
        %v4080 = vpop.f32.mrf.mxu0
        %v4081 = vadd.f32 %v4052, %v4080
        %v4082 = vpop.f32.mrf.mxu0
        %v4083 = vadd.f32 %v4054, %v4082
        %4084 = vmatmul.bf16.gmra.mxu0 %v3914
        %v4085 = vpop.f32.mrf.mxu0
        %v4086 = vadd.f32 %v4057, %v4085
        %v4087 = vpop.f32.mrf.mxu0
        %v4088 = vadd.f32 %v4059, %v4087
        %4089 = vdwg.mxu0
        %v4090 = vadd.f32 %v3665, %v3984
        %v4091 = vadd.f32 %v3666, %v4071
        %v4092 = vadd.f32 %v3667, %v3986
        %v4093 = vadd.f32 %v3668, %v4073
        %v4094 = vadd.f32 %v3669, %v3989
        %v4095 = vadd.f32 %v3670, %v4076
        %v4096 = vadd.f32 %v3671, %v3991
        %v4097 = vadd.f32 %v3672, %v4078
        %v4098 = vadd.f32 %v3673, %v3994
        %v4099 = vadd.f32 %v3674, %v4081
        %v4100 = vadd.f32 %v3675, %v3996
        %v4101 = vadd.f32 %v3676, %v4083
        %v4102 = vadd.f32 %v3677, %v3999
        %v4103 = vadd.f32 %v3678, %v4086
        %v4104 = vadd.f32 %v3679, %v4001
        %v4105 = vadd.f32 %v3680, %v4088
        %v4106 = vpack.c.bf16 0.0, %v2399
        %v4107 = vpack.c.bf16 0.0, %v2400
        %v4108 = vpack.c.bf16 0.0, %v2401
        %s4109 = scalar_lea.vmem [#allocation3], 1216
        %v4110 = vld [vmem:[%s4109] sm:$0xff]
        %v4111 = vld [vmem:[%s4109 + $0x8] sm:$0xff]
        %v4112 = vld [vmem:[%s4109 + $0x10] sm:$0xff]
        %v4113 = vld [vmem:[%s4109 + $0x18] sm:$0xff]
        %v4114 = vld [vmem:[%s4109 + $0x20] sm:$0xff]
        %v4115 = vld [vmem:[%s4109 + $0x28] sm:$0xff]
        %v4116 = vld [vmem:[%s4109 + $0x30] sm:$0xff]
        %v4117 = vld [vmem:[%s4109 + $0x38] sm:$0xff]
        %v4118 = vld [vmem:[%s4109 + $0x40] sm:$0xff]
        %v4119 = vld [vmem:[%s4109 + $0x48] sm:$0xff]
        %v4120 = vld [vmem:[%s4109 + $0x50] sm:$0xff]
        %v4121 = vld [vmem:[%s4109 + $0x58] sm:$0xff]
        %v4122 = vld [vmem:[%s4109 + $0x60] sm:$0xff]
        %v4123 = vld [vmem:[%s4109 + $0x68] sm:$0xff]
        %v4124 = vld [vmem:[%s4109 + $0x70] sm:$0xff]
        %v4125 = vld [vmem:[%s4109 + $0x78] sm:$0xff]
        %v4126 = vld [vmem:[%s4109 + $0x80] sm:$0xff]
        %v4127 = vld [vmem:[%s4109 + $0x88] sm:$0xff]
        %v4128 = vld [vmem:[%s4109 + $0x90] sm:$0xff]
        %v4129 = vld [vmem:[%s4109 + $0x98] sm:$0xff]
        %v4130 = vld [vmem:[%s4109 + $0xa0] sm:$0xff]
        %v4131 = vld [vmem:[%s4109 + $0xa8] sm:$0xff]
        %v4132 = vld [vmem:[%s4109 + $0xb0] sm:$0xff]
        %v4133 = vld [vmem:[%s4109 + $0xb8] sm:$0xff]
        %v4134 = vld [vmem:[%s4109 + $0xc0] sm:$0xff]
        %v4135 = vld [vmem:[%s4109 + $0xc8] sm:$0xff]
        %v4136 = vld [vmem:[%s4109 + $0xd0] sm:$0xff]
        %v4137 = vld [vmem:[%s4109 + $0xd8] sm:$0xff]
        %v4138 = vld [vmem:[%s4109 + $0xe0] sm:$0xff]
        %v4139 = vld [vmem:[%s4109 + $0xe8] sm:$0xff]
        %v4140 = vld [vmem:[%s4109 + $0xf0] sm:$0xff]
        %v4141 = vld [vmem:[%s4109 + $0xf8] sm:$0xff]
        %v4142 = vld [vmem:[%s4109 + $0x100] sm:$0xff]
        %v4143 = vld [vmem:[%s4109 + $0x108] sm:$0xff]
        %v4144 = vld [vmem:[%s4109 + $0x110] sm:$0xff]
        %v4145 = vld [vmem:[%s4109 + $0x118] sm:$0xff]
        %v4146 = vld [vmem:[%s4109 + $0x120] sm:$0xff]
        %v4147 = vld [vmem:[%s4109 + $0x128] sm:$0xff]
        %v4186 = vunpack.c.l.b16 %v4110
        %v4187 = vunpack.c.h.b16 %v4110
        %v4188 = vunpack.c.l.b16 %v4111
        %v4189 = vunpack.c.h.b16 %v4111
        %v4190 = vunpack.c.l.b16 %v4112
        %v4191 = vunpack.c.h.b16 %v4112
        %v4192 = vunpack.c.l.b16 %v4113
        %v4193 = vunpack.c.h.b16 %v4113
        %v4194 = vunpack.c.l.b16 %v4114
        %v4195 = vunpack.c.h.b16 %v4114
        %v4196 = vunpack.c.l.b16 %v4115
        %v4197 = vunpack.c.h.b16 %v4115
        %v4198 = vunpack.c.l.b16 %v4116
        %v4199 = vunpack.c.h.b16 %v4116
        %v4200 = vunpack.c.l.b16 %v4117
        %v4201 = vunpack.c.h.b16 %v4117
        %v4202 = vunpack.c.l.b16 %v4118
        %v4203 = vunpack.c.h.b16 %v4118
        %v4204 = vunpack.c.l.b16 %v4119
        %v4205 = vunpack.c.h.b16 %v4119
        %v4206 = vunpack.c.l.b16 %v4120
        %v4207 = vunpack.c.h.b16 %v4120
        %v4208 = vunpack.c.l.b16 %v4121
        %v4209 = vunpack.c.h.b16 %v4121
        %v4210 = vunpack.c.l.b16 %v4122
        %v4211 = vunpack.c.h.b16 %v4122
        %v4212 = vunpack.c.l.b16 %v4123
        %v4213 = vunpack.c.h.b16 %v4123
        %v4214 = vunpack.c.l.b16 %v4124
        %v4215 = vunpack.c.h.b16 %v4124
        %v4216 = vunpack.c.l.b16 %v4125
        %v4217 = vunpack.c.h.b16 %v4125
        %v4218 = vunpack.c.l.b16 %v4126
        %v4219 = vunpack.c.h.b16 %v4126
        %v4220 = vunpack.c.l.b16 %v4127
        %v4221 = vunpack.c.h.b16 %v4127
        %v4222 = vunpack.c.l.b16 %v4128
        %v4223 = vunpack.c.h.b16 %v4128
        %v4224 = vunpack.c.l.b16 %v4129
        %v4225 = vunpack.c.h.b16 %v4129
        %v4226 = vunpack.c.l.b16 %v4130
        %v4227 = vunpack.c.h.b16 %v4130
        %v4228 = vunpack.c.l.b16 %v4131
        %v4229 = vunpack.c.h.b16 %v4131
        %v4230 = vunpack.c.l.b16 %v4132
        %v4231 = vunpack.c.h.b16 %v4132
        %v4232 = vunpack.c.l.b16 %v4133
        %v4233 = vunpack.c.h.b16 %v4133
        %v4234 = vunpack.c.l.b16 %v4134
        %v4235 = vunpack.c.h.b16 %v4134
        %v4236 = vunpack.c.l.b16 %v4135
        %v4237 = vunpack.c.h.b16 %v4135
        %v4238 = vunpack.c.l.b16 %v4136
        %v4239 = vunpack.c.h.b16 %v4136
        %v4240 = vunpack.c.l.b16 %v4137
        %v4241 = vunpack.c.h.b16 %v4137
        %v4242 = vunpack.c.l.b16 %v4138
        %v4243 = vunpack.c.h.b16 %v4138
        %v4244 = vunpack.c.l.b16 %v4139
        %v4245 = vunpack.c.h.b16 %v4139
        %v4246 = vunpack.c.l.b16 %v4140
        %v4247 = vunpack.c.h.b16 %v4140
        %v4248 = vunpack.c.l.b16 %v4141
        %v4249 = vunpack.c.h.b16 %v4141
        %v4250 = vunpack.c.l.b16 %v4142
        %v4251 = vunpack.c.h.b16 %v4142
        %v4252 = vunpack.c.l.b16 %v4143
        %v4253 = vunpack.c.h.b16 %v4143
        %v4254 = vunpack.c.l.b16 %v4144
        %v4255 = vunpack.c.h.b16 %v4144
        %v4256 = vunpack.c.l.b16 %v4145
        %v4257 = vunpack.c.h.b16 %v4145
        %v4258 = vunpack.c.l.b16 %v4146
        %v4259 = vunpack.c.h.b16 %v4146
        %v4260 = vunpack.c.l.b16 %v4147
        %v4261 = vunpack.c.h.b16 %v4147
        %v4262 = vpack.c.b16 %v4188, %v4186
        %v4263 = vpack.c.b16 %v4189, %v4187
        %v4264 = vpack.c.b16 %v4192, %v4190
        %v4265 = vpack.c.b16 %v4193, %v4191
        %v4266 = vpack.c.b16 %v4196, %v4194
        %v4267 = vpack.c.b16 %v4197, %v4195
        %v4268 = vpack.c.b16 %v4200, %v4198
        %v4269 = vpack.c.b16 %v4201, %v4199
        %v4270 = vpack.c.b16 %v4204, %v4202
        %v4271 = vpack.c.b16 %v4205, %v4203
        %v4272 = vpack.c.b16 %v4208, %v4206
        %v4273 = vpack.c.b16 %v4209, %v4207
        %v4274 = vpack.c.b16 %v4212, %v4210
        %v4275 = vpack.c.b16 %v4213, %v4211
        %v4276 = vpack.c.b16 %v4216, %v4214
        %v4277 = vpack.c.b16 %v4217, %v4215
        %v4278 = vpack.c.b16 %v4220, %v4218
        %v4279 = vpack.c.b16 %v4221, %v4219
        %v4280 = vpack.c.b16 %v4224, %v4222
        %v4281 = vpack.c.b16 %v4225, %v4223
        %v4282 = vpack.c.b16 %v4228, %v4226
        %v4283 = vpack.c.b16 %v4229, %v4227
        %v4284 = vpack.c.b16 %v4232, %v4230
        %v4285 = vpack.c.b16 %v4233, %v4231
        %v4286 = vpack.c.b16 %v4236, %v4234
        %v4287 = vpack.c.b16 %v4237, %v4235
        %v4288 = vpack.c.b16 %v4240, %v4238
        %v4289 = vpack.c.b16 %v4241, %v4239
        %v4290 = vpack.c.b16 %v4244, %v4242
        %v4291 = vpack.c.b16 %v4245, %v4243
        %v4292 = vpack.c.b16 %v4248, %v4246
        %v4293 = vpack.c.b16 %v4249, %v4247
        %v4294 = vpack.c.b16 %v4252, %v4250
        %v4295 = vpack.c.b16 %v4253, %v4251
        %v4296 = vpack.c.b16 %v4256, %v4254
        %v4297 = vpack.c.b16 %v4257, %v4255
        %v4298 = vpack.c.b16 %v4260, %v4258
        %v4299 = vpack.c.b16 %v4261, %v4259
        %v4339 = vsel %vm2693, %v4108, 0
        %4341 = vmatpush.bf16.msra.mxu0 %v4276
        %4342 = vmatpush.bf16.msra.mxu0 %v4274
        %4343 = vmatpush.bf16.msra.mxu0 %v4272
        %4344 = vmatpush.bf16.msra.mxu0 %v4270
        %4345 = vmatpush.bf16.msra.mxu0 %v4268
        %4346 = vmatpush.bf16.msra.mxu0 %v4266
        %4347 = vmatpush.bf16.msra.mxu0 %v4264
        %4348 = vmatpush.bf16.msra.mxu0 %v4262
        %4349 = vmatmul.bf16.gmra.mxu0 %v2408
        %v4350 = vpop.f32.mrf.mxu0
        %v4351 = vadd.f32 0.0, %v4350
        %v4352 = vpop.f32.mrf.mxu0
        %v4353 = vadd.f32 0.0, %v4352
        %4354 = vmatmul.bf16.gmra.mxu0 %v2411
        %v4355 = vpop.f32.mrf.mxu0
        %v4356 = vadd.f32 0.0, %v4355
        %v4357 = vpop.f32.mrf.mxu0
        %v4358 = vadd.f32 0.0, %v4357
        %4359 = vmatmul.bf16.gmra.mxu0 %v3256
        %v4360 = vpop.f32.mrf.mxu0
        %v4361 = vadd.f32 0.0, %v4360
        %v4362 = vpop.f32.mrf.mxu0
        %v4363 = vadd.f32 0.0, %v4362
        %4364 = vmatmul.bf16.gmra.mxu0 %v4106
        %v4365 = vpop.f32.mrf.mxu0
        %v4366 = vadd.f32 0.0, %v4365
        %v4367 = vpop.f32.mrf.mxu0
        %v4368 = vadd.f32 0.0, %v4367
        %4369 = vdwg.mxu0
        %4370 = vmatpush.bf16.msra.mxu0 %v4292
        %4371 = vmatpush.bf16.msra.mxu0 %v4290
        %4372 = vmatpush.bf16.msra.mxu0 %v4288
        %4373 = vmatpush.bf16.msra.mxu0 %v4286
        %4374 = vmatpush.bf16.msra.mxu0 %v4284
        %4375 = vmatpush.bf16.msra.mxu0 %v4282
        %4376 = vmatpush.bf16.msra.mxu0 %v4280
        %4377 = vmatpush.bf16.msra.mxu0 %v4278
        %4378 = vmatmul.bf16.gmra.mxu0 %v2409
        %v4379 = vpop.f32.mrf.mxu0
        %v4380 = vadd.f32 %v4351, %v4379
        %v4381 = vpop.f32.mrf.mxu0
        %v4382 = vadd.f32 %v4353, %v4381
        %4383 = vmatmul.bf16.gmra.mxu0 %v2412
        %v4384 = vpop.f32.mrf.mxu0
        %v4385 = vadd.f32 %v4356, %v4384
        %v4386 = vpop.f32.mrf.mxu0
        %v4387 = vadd.f32 %v4358, %v4386
        %4388 = vmatmul.bf16.gmra.mxu0 %v3257
        %v4389 = vpop.f32.mrf.mxu0
        %v4390 = vadd.f32 %v4361, %v4389
        %v4391 = vpop.f32.mrf.mxu0
        %v4392 = vadd.f32 %v4363, %v4391
        %4393 = vmatmul.bf16.gmra.mxu0 %v4107
        %v4394 = vpop.f32.mrf.mxu0
        %v4395 = vadd.f32 %v4366, %v4394
        %v4396 = vpop.f32.mrf.mxu0
        %v4397 = vadd.f32 %v4368, %v4396
        %4398 = vdwg.mxu0
        %4399 = vmatpush.bf16.msra.mxu0 0
        %4400 = vmatpush.bf16.msra.mxu0 0
        %4401 = vmatpush.bf16.msra.mxu0 0
        %4402 = vmatpush.bf16.msra.mxu0 0
        %4403 = vmatpush.bf16.msra.mxu0 0
        %4404 = vmatpush.bf16.msra.mxu0 %v4298
        %4405 = vmatpush.bf16.msra.mxu0 %v4296
        %4406 = vmatpush.bf16.msra.mxu0 %v4294
        %4407 = vmatmul.bf16.gmra.mxu0 %v3077
        %v4408 = vpop.f32.mrf.mxu0
        %v4409 = vadd.f32 %v4380, %v4408
        %v4410 = vpop.f32.mrf.mxu0
        %v4411 = vadd.f32 %v4382, %v4410
        %4412 = vmatmul.bf16.gmra.mxu0 %v3080
        %v4413 = vpop.f32.mrf.mxu0
        %v4414 = vadd.f32 %v4385, %v4413
        %v4415 = vpop.f32.mrf.mxu0
        %v4416 = vadd.f32 %v4387, %v4415
        %4417 = vmatmul.bf16.gmra.mxu0 %v3489
        %v4418 = vpop.f32.mrf.mxu0
        %v4419 = vadd.f32 %v4390, %v4418
        %v4420 = vpop.f32.mrf.mxu0
        %v4421 = vadd.f32 %v4392, %v4420
        %4422 = vmatmul.bf16.gmra.mxu0 %v4339
        %v4423 = vpop.f32.mrf.mxu0
        %v4424 = vadd.f32 %v4395, %v4423
        %v4425 = vpop.f32.mrf.mxu0
        %v4426 = vadd.f32 %v4397, %v4425
        %4427 = vdwg.mxu0
        %4428 = vmatpush.bf16.msra.mxu0 %v4277
        %4429 = vmatpush.bf16.msra.mxu0 %v4275
        %4430 = vmatpush.bf16.msra.mxu0 %v4273
        %4431 = vmatpush.bf16.msra.mxu0 %v4271
        %4432 = vmatpush.bf16.msra.mxu0 %v4269
        %4433 = vmatpush.bf16.msra.mxu0 %v4267
        %4434 = vmatpush.bf16.msra.mxu0 %v4265
        %4435 = vmatpush.bf16.msra.mxu0 %v4263
        %4436 = vmatmul.bf16.gmra.mxu0 %v2408
        %v4437 = vpop.f32.mrf.mxu0
        %v4438 = vadd.f32 0.0, %v4437
        %v4439 = vpop.f32.mrf.mxu0
        %v4440 = vadd.f32 0.0, %v4439
        %4441 = vmatmul.bf16.gmra.mxu0 %v2411
        %v4442 = vpop.f32.mrf.mxu0
        %v4443 = vadd.f32 0.0, %v4442
        %v4444 = vpop.f32.mrf.mxu0
        %v4445 = vadd.f32 0.0, %v4444
        %4446 = vmatmul.bf16.gmra.mxu0 %v3256
        %v4447 = vpop.f32.mrf.mxu0
        %v4448 = vadd.f32 0.0, %v4447
        %v4449 = vpop.f32.mrf.mxu0
        %v4450 = vadd.f32 0.0, %v4449
        %4451 = vmatmul.bf16.gmra.mxu0 %v4106
        %v4452 = vpop.f32.mrf.mxu0
        %v4453 = vadd.f32 0.0, %v4452
        %v4454 = vpop.f32.mrf.mxu0
        %v4455 = vadd.f32 0.0, %v4454
        %4456 = vdwg.mxu0
        %4457 = vmatpush.bf16.msra.mxu0 %v4293
        %4458 = vmatpush.bf16.msra.mxu0 %v4291
        %4459 = vmatpush.bf16.msra.mxu0 %v4289
        %4460 = vmatpush.bf16.msra.mxu0 %v4287
        %4461 = vmatpush.bf16.msra.mxu0 %v4285
        %4462 = vmatpush.bf16.msra.mxu0 %v4283
        %4463 = vmatpush.bf16.msra.mxu0 %v4281
        %4464 = vmatpush.bf16.msra.mxu0 %v4279
        %4465 = vmatmul.bf16.gmra.mxu0 %v2409
        %v4466 = vpop.f32.mrf.mxu0
        %v4467 = vadd.f32 %v4438, %v4466
        %v4468 = vpop.f32.mrf.mxu0
        %v4469 = vadd.f32 %v4440, %v4468
        %4470 = vmatmul.bf16.gmra.mxu0 %v2412
        %v4471 = vpop.f32.mrf.mxu0
        %v4472 = vadd.f32 %v4443, %v4471
        %v4473 = vpop.f32.mrf.mxu0
        %v4474 = vadd.f32 %v4445, %v4473
        %4475 = vmatmul.bf16.gmra.mxu0 %v3257
        %v4476 = vpop.f32.mrf.mxu0
        %v4477 = vadd.f32 %v4448, %v4476
        %v4478 = vpop.f32.mrf.mxu0
        %v4479 = vadd.f32 %v4450, %v4478
        %4480 = vmatmul.bf16.gmra.mxu0 %v4107
        %v4481 = vpop.f32.mrf.mxu0
        %v4482 = vadd.f32 %v4453, %v4481
        %v4483 = vpop.f32.mrf.mxu0
        %v4484 = vadd.f32 %v4455, %v4483
        %4485 = vdwg.mxu0
        %4486 = vmatpush.bf16.msra.mxu0 0
        %4487 = vmatpush.bf16.msra.mxu0 0
        %4488 = vmatpush.bf16.msra.mxu0 0
        %4489 = vmatpush.bf16.msra.mxu0 0
        %4490 = vmatpush.bf16.msra.mxu0 0
        %4491 = vmatpush.bf16.msra.mxu0 %v4299
        %4492 = vmatpush.bf16.msra.mxu0 %v4297
        %4493 = vmatpush.bf16.msra.mxu0 %v4295
        %4494 = vmatmul.bf16.gmra.mxu0 %v3077
        %v4495 = vpop.f32.mrf.mxu0
        %v4496 = vadd.f32 %v4467, %v4495
        %v4497 = vpop.f32.mrf.mxu0
        %v4498 = vadd.f32 %v4469, %v4497
        %4499 = vmatmul.bf16.gmra.mxu0 %v3080
        %v4500 = vpop.f32.mrf.mxu0
        %v4501 = vadd.f32 %v4472, %v4500
        %v4502 = vpop.f32.mrf.mxu0
        %v4503 = vadd.f32 %v4474, %v4502
        %4504 = vmatmul.bf16.gmra.mxu0 %v3489
        %v4505 = vpop.f32.mrf.mxu0
        %v4506 = vadd.f32 %v4477, %v4505
        %v4507 = vpop.f32.mrf.mxu0
        %v4508 = vadd.f32 %v4479, %v4507
        %4509 = vmatmul.bf16.gmra.mxu0 %v4339
        %v4510 = vpop.f32.mrf.mxu0
        %v4511 = vadd.f32 %v4482, %v4510
        %v4512 = vpop.f32.mrf.mxu0
        %v4513 = vadd.f32 %v4484, %v4512
        %4514 = vdwg.mxu0
        %v4515 = vadd.f32 %v4090, %v4409
        %v4516 = vadd.f32 %v4091, %v4496
        %v4517 = vadd.f32 %v4092, %v4411
        %v4518 = vadd.f32 %v4093, %v4498
        %v4519 = vadd.f32 %v4094, %v4414
        %v4520 = vadd.f32 %v4095, %v4501
        %v4521 = vadd.f32 %v4096, %v4416
        %v4522 = vadd.f32 %v4097, %v4503
        %v4523 = vadd.f32 %v4098, %v4419
        %v4524 = vadd.f32 %v4099, %v4506
        %v4525 = vadd.f32 %v4100, %v4421
        %v4526 = vadd.f32 %v4101, %v4508
        %v4527 = vadd.f32 %v4102, %v4424
        %v4528 = vadd.f32 %v4103, %v4511
        %v4529 = vadd.f32 %v4104, %v4426
        %v4530 = vadd.f32 %v4105, %v4513
        %v4531 = vld [vmem:[%s4] sm:$0x3]
        %v4533 = vperm.slane %v4531, 0
        %v4534 = vperm.slane %v4531, 1
        %v4537 = vadd.f32 %v4515, %v4533
        %v4538 = vadd.f32 %v4516, %v4534
        %v4539 = vadd.f32 %v4517, %v4533
        %v4540 = vadd.f32 %v4518, %v4534
        %v4541 = vadd.f32 %v4519, %v4533
        %v4542 = vadd.f32 %v4520, %v4534
        %v4543 = vadd.f32 %v4521, %v4533
        %v4544 = vadd.f32 %v4522, %v4534
        %v4545 = vadd.f32 %v4523, %v4533
        %v4546 = vadd.f32 %v4524, %v4534
        %v4547 = vadd.f32 %v4525, %v4533
        %v4548 = vadd.f32 %v4526, %v4534
        %v4549 = vadd.f32 %v4527, %v4533
        %v4550 = vadd.f32 %v4528, %v4534
        %v4551 = vadd.f32 %v4529, %v4533
        %v4552 = vadd.f32 %v4530, %v4534
        %v4553 = vmax.f32 %v4537, 0.0
        %v4554 = vmax.f32 %v4538, 0.0
        %v4555 = vmax.f32 %v4539, 0.0
        %v4556 = vmax.f32 %v4540, 0.0
        %v4557 = vmax.f32 %v4541, 0.0
        %v4558 = vmax.f32 %v4542, 0.0
        %v4559 = vmax.f32 %v4543, 0.0
        %v4560 = vmax.f32 %v4544, 0.0
        %v4561 = vmax.f32 %v4545, 0.0
        %v4562 = vmax.f32 %v4546, 0.0
        %v4563 = vmax.f32 %v4547, 0.0
        %v4564 = vmax.f32 %v4548, 0.0
        %v4565 = vmax.f32 %v4549, 0.0
        %v4566 = vmax.f32 %v4550, 0.0
        %v4567 = vmax.f32 %v4551, 0.0
        %v4568 = vmax.f32 %v4552, 0.0
        %4585 = vrot.lane.b32.xlu0 %v4553, 96
        %v4586 = vpop.permute.xlu0 %4585
        %4587 = vrot.lane.b32.xlu0 %v4554, 96
        %v4588 = vpop.permute.xlu0 %4587
        %4589 = vrot.lane.b32.xlu0 %v4555, 96
        %v4590 = vpop.permute.xlu0 %4589
        %4591 = vrot.lane.b32.xlu0 %v4556, 96
        %v4592 = vpop.permute.xlu0 %4591
        %4593 = vrot.lane.b32.xlu0 %v4557, 96
        %v4594 = vpop.permute.xlu0 %4593
        %4595 = vrot.lane.b32.xlu0 %v4558, 96
        %v4596 = vpop.permute.xlu0 %4595
        %4597 = vrot.lane.b32.xlu0 %v4559, 96
        %v4598 = vpop.permute.xlu0 %4597
        %4599 = vrot.lane.b32.xlu0 %v4560, 96
        %v4600 = vpop.permute.xlu0 %4599
        %4601 = vrot.lane.b32.xlu0 %v4561, 96
        %v4602 = vpop.permute.xlu0 %4601
        %4603 = vrot.lane.b32.xlu0 %v4562, 96
        %v4604 = vpop.permute.xlu0 %4603
        %4605 = vrot.lane.b32.xlu0 %v4563, 96
        %v4606 = vpop.permute.xlu0 %4605
        %4607 = vrot.lane.b32.xlu0 %v4564, 96
        %v4608 = vpop.permute.xlu0 %4607
        %4609 = vrot.lane.b32.xlu0 %v4565, 96
        %v4610 = vpop.permute.xlu0 %4609
        %4611 = vrot.lane.b32.xlu0 %v4566, 96
        %v4612 = vpop.permute.xlu0 %4611
        %4613 = vrot.lane.b32.xlu0 %v4567, 96
        %v4614 = vpop.permute.xlu0 %4613
        %4615 = vrot.lane.b32.xlu0 %v4568, 96
        %v4616 = vpop.permute.xlu0 %4615
        %vm4617 = vcmask 785408
        %v4618 = vsel %vm4617, %v4586, %v4588
        %v4619 = vsel %vm4617, %v4590, %v4592
        %v4620 = vsel %vm4617, %v4594, %v4596
        %v4621 = vsel %vm4617, %v4598, %v4600
        %v4622 = vsel %vm4617, %v4602, %v4604
        %v4623 = vsel %vm4617, %v4606, %v4608
        %v4624 = vsel %vm4617, %v4610, %v4612
        %v4625 = vsel %vm4617, %v4614, %v4616
        %v4642 = vmax.f32 %v4553, %v4618
        %v4643 = vmax.f32 %v4554, %v4588
        %v4644 = vmax.f32 %v4555, %v4619
        %v4645 = vmax.f32 %v4556, %v4592
        %v4646 = vmax.f32 %v4557, %v4620
        %v4647 = vmax.f32 %v4558, %v4596
        %v4648 = vmax.f32 %v4559, %v4621
        %v4649 = vmax.f32 %v4560, %v4600
        %v4650 = vmax.f32 %v4561, %v4622
        %v4651 = vmax.f32 %v4562, %v4604
        %v4652 = vmax.f32 %v4563, %v4623
        %v4653 = vmax.f32 %v4564, %v4608
        %v4654 = vmax.f32 %v4565, %v4624
        %v4655 = vmax.f32 %v4566, %v4612
        %v4656 = vmax.f32 %v4567, %v4625
        %v4657 = vmax.f32 %v4568, %v4616
        %v4658 = vmax.f32 %v4642, %v4644
        %v4659 = vmax.f32 %v4643, %v4645
        %v4660 = vmax.f32 %v4646, %v4648
        %v4661 = vmax.f32 %v4647, %v4649
        %v4662 = vmax.f32 %v4650, %v4652
        %v4663 = vmax.f32 %v4651, %v4653
        %v4664 = vmax.f32 %v4654, %v4656
        %v4665 = vmax.f32 %v4655, %v4657
        %4668 = vrot.lane.b32.xlu0 %v4660, 96
        %v4669 = vpop.permute.xlu0 %4668
        %4670 = vrot.lane.b32.xlu0 %v4661, 96
        %v4671 = vpop.permute.xlu0 %4670
        %v4672 = vsel %vm4617, %v4669, %v4671
        %4678 = vrot.lane.b32.xlu0 %v4662, 64
        %v4679 = vpop.permute.xlu0 %4678
        %4680 = vrot.lane.b32.xlu0 %v4663, 64
        %v4681 = vpop.permute.xlu0 %4680
        %vm4682 = vcmask 523264
        %v4683 = vsel %vm4682, %v4679, %v4681
        %4689 = vrot.lane.b32.xlu0 %v4664, 32
        %v4690 = vpop.permute.xlu0 %4689
        %4691 = vrot.lane.b32.xlu0 %v4665, 32
        %v4692 = vpop.permute.xlu0 %4691
        %vm4693 = vcmask 261120
        %v4694 = vsel %vm4693, %v4690, %v4692
        %v4697 = vsel %vm4617, %v4659, %v4669
        %v4698 = vsel %vm4682, %v4671, %v4679
        %v4699 = vsel %vm4693, %v4681, %v4690
        %v4700 = vpack.c.bf16 %v4658, %v4658
        %v4701 = vpack.c.bf16 %v4697, %v4697
        %v4702 = vpack.c.bf16 %v4672, %v4672
        %v4703 = vpack.c.bf16 %v4698, %v4698
        %v4704 = vpack.c.bf16 %v4683, %v4683
        %v4705 = vpack.c.bf16 %v4699, %v4699
        %v4706 = vpack.c.bf16 %v4694, %v4694
        %v4707 = vld [vmem:[%s5] sm:$0xf]
        %v4708 = vld [vmem:[%s5 + $0x4] sm:$0xf]
        %v4709 = vld [vmem:[%s5 + $0x8] sm:$0xf]
        %v4710 = vld [vmem:[%s5 + $0xc] sm:$0xf]
        %v4711 = vld [vmem:[%s5 + $0x10] sm:$0xf]
        %v4712 = vld [vmem:[%s5 + $0x14] sm:$0xf]
        %v4713 = vld [vmem:[%s5 + $0x18] sm:$0xf]
        %v4714 = vld [vmem:[%s5 + $0x1c] sm:$0xf]
        %v4715 = vld [vmem:[%s5 + $0x20] sm:$0xf]
        %v4716 = vld [vmem:[%s5 + $0x24] sm:$0xf]
        %v4717 = vld [vmem:[%s5 + $0x28] sm:$0xf]
        %v4718 = vld [vmem:[%s5 + $0x2c] sm:$0xf]
        %v4719 = vld [vmem:[%s5 + $0x30] sm:$0xf]
        %v4720 = vld [vmem:[%s5 + $0x34] sm:$0xf]
        %v4721 = vld [vmem:[%s5 + $0x38] sm:$0xf]
        %v4722 = vld [vmem:[%s5 + $0x3c] sm:$0xf]
        %v4723 = vld [vmem:[%s5 + $0x40] sm:$0xf]
        %v4724 = vld [vmem:[%s5 + $0x44] sm:$0xf]
        %v4725 = vld [vmem:[%s5 + $0x48] sm:$0xf]
        %v4726 = vld [vmem:[%s5 + $0x4c] sm:$0xf]
        %v4727 = vld [vmem:[%s5 + $0x50] sm:$0xf]
        %v4728 = vld [vmem:[%s5 + $0x54] sm:$0xf]
        %v4729 = vld [vmem:[%s5 + $0x58] sm:$0xf]
        %v4730 = vld [vmem:[%s5 + $0x5c] sm:$0xf]
        %v4731 = vld [vmem:[%s5 + $0x60] sm:$0xf]
        %v4732 = vld [vmem:[%s5 + $0x64] sm:$0xf]
        %v4733 = vld [vmem:[%s5 + $0x68] sm:$0xf]
        %v4734 = vld [vmem:[%s5 + $0x6c] sm:$0xf]
        %v4735 = vld [vmem:[%s5 + $0x70] sm:$0xf]
        %v4736 = vld [vmem:[%s5 + $0x74] sm:$0xf]
        %v4737 = vld [vmem:[%s5 + $0x78] sm:$0xf]
        %v4738 = vld [vmem:[%s5 + $0x7c] sm:$0xf]
        %v4739 = vld [vmem:[%s5 + $0x80] sm:$0xf]
        %v4740 = vld [vmem:[%s5 + $0x84] sm:$0xf]
        %v4741 = vld [vmem:[%s5 + $0x88] sm:$0xf]
        %v4742 = vld [vmem:[%s5 + $0x8c] sm:$0xf]
        %v4743 = vld [vmem:[%s5 + $0x90] sm:$0xf]
        %v4744 = vld [vmem:[%s5 + $0x94] sm:$0xf]
        %v4745 = vld [vmem:[%s5 + $0x98] sm:$0xf]
        %v4746 = vld [vmem:[%s5 + $0x9c] sm:$0xf]
        %v4747 = vld [vmem:[%s5 + $0xa0] sm:$0xf]
        %v4748 = vld [vmem:[%s5 + $0xa4] sm:$0xf]
        %v4749 = vld [vmem:[%s5 + $0xa8] sm:$0xf]
        %v4750 = vld [vmem:[%s5 + $0xac] sm:$0xf]
        %v4751 = vld [vmem:[%s5 + $0xb0] sm:$0xf]
        %v4752 = vld [vmem:[%s5 + $0xb4] sm:$0xf]
        %v4753 = vld [vmem:[%s5 + $0xb8] sm:$0xf]
        %v4754 = vld [vmem:[%s5 + $0xbc] sm:$0xf]
        %v4755 = vld [vmem:[%s5 + $0xc0] sm:$0xf]
        %v4756 = vld [vmem:[%s5 + $0xc4] sm:$0xf]
        %v4757 = vld [vmem:[%s5 + $0xc8] sm:$0xf]
        %v4758 = vld [vmem:[%s5 + $0xcc] sm:$0xf]
        %v4759 = vld [vmem:[%s5 + $0xd0] sm:$0xf]
        %v4760 = vld [vmem:[%s5 + $0xd4] sm:$0xf]
        %v4761 = vld [vmem:[%s5 + $0xd8] sm:$0xf]
        %v4762 = vld [vmem:[%s5 + $0xdc] sm:$0xf]
        %v4763 = vld [vmem:[%s5 + $0xe0] sm:$0xf]
        %v4764 = vld [vmem:[%s5 + $0xe4] sm:$0xf]
        %v4765 = vld [vmem:[%s5 + $0xe8] sm:$0xf]
        %v4766 = vld [vmem:[%s5 + $0xec] sm:$0xf]
        %v4767 = vld [vmem:[%s5 + $0xf0] sm:$0xf]
        %v4768 = vld [vmem:[%s5 + $0xf4] sm:$0xf]
        %v4769 = vld [vmem:[%s5 + $0xf8] sm:$0xf]
        %v4770 = vld [vmem:[%s5 + $0xfc] sm:$0xf]
        %v4771 = vld [vmem:[%s5 + $0x100] sm:$0xf]
        %v4772 = vld [vmem:[%s5 + $0x104] sm:$0xf]
        %v4773 = vld [vmem:[%s5 + $0x108] sm:$0xf]
        %v4774 = vld [vmem:[%s5 + $0x10c] sm:$0xf]
        %v4775 = vld [vmem:[%s5 + $0x110] sm:$0xf]
        %v4776 = vld [vmem:[%s5 + $0x114] sm:$0xf]
        %v4777 = vld [vmem:[%s5 + $0x118] sm:$0xf]
        %v4778 = vld [vmem:[%s5 + $0x11c] sm:$0xf]
        %v4779 = vld [vmem:[%s5 + $0x120] sm:$0xf]
        %v4780 = vld [vmem:[%s5 + $0x124] sm:$0xf]
        %v4781 = vld [vmem:[%s5 + $0x128] sm:$0xf]
        %v4782 = vld [vmem:[%s5 + $0x12c] sm:$0xf]
        %v4783 = vld [vmem:[%s5 + $0x130] sm:$0xf]
        %v4784 = vld [vmem:[%s5 + $0x134] sm:$0xf]
        %v4785 = vld [vmem:[%s5 + $0x138] sm:$0xf]
        %v4786 = vld [vmem:[%s5 + $0x13c] sm:$0xf]
        %v4787 = vld [vmem:[%s5 + $0x140] sm:$0xf]
        %v4788 = vld [vmem:[%s5 + $0x144] sm:$0xf]
        %v4789 = vld [vmem:[%s5 + $0x148] sm:$0xf]
        %v4790 = vld [vmem:[%s5 + $0x14c] sm:$0xf]
        %v4791 = vld [vmem:[%s5 + $0x150] sm:$0xf]
        %v4792 = vld [vmem:[%s5 + $0x154] sm:$0xf]
        %v4793 = vld [vmem:[%s5 + $0x158] sm:$0xf]
        %v4794 = vld [vmem:[%s5 + $0x15c] sm:$0xf]
        %v4795 = vld [vmem:[%s5 + $0x160] sm:$0xf]
        %v4796 = vld [vmem:[%s5 + $0x164] sm:$0xf]
        %v4797 = vld [vmem:[%s5 + $0x168] sm:$0xf]
        %v4798 = vld [vmem:[%s5 + $0x16c] sm:$0xf]
        %v4799 = vld [vmem:[%s5 + $0x170] sm:$0xf]
        %v4800 = vld [vmem:[%s5 + $0x174] sm:$0xf]
        %v4801 = vld [vmem:[%s5 + $0x178] sm:$0xf]
        %v4802 = vld [vmem:[%s5 + $0x17c] sm:$0xf]
        %v4803 = vld [vmem:[%s5 + $0x180] sm:$0xf]
        %v4804 = vld [vmem:[%s5 + $0x184] sm:$0xf]
        %v4805 = vld [vmem:[%s5 + $0x188] sm:$0xf]
        %v4806 = vld [vmem:[%s5 + $0x18c] sm:$0xf]
        %v4807 = vld [vmem:[%s5 + $0x190] sm:$0xf]
        %v4808 = vld [vmem:[%s5 + $0x194] sm:$0xf]
        %v4809 = vld [vmem:[%s5 + $0x198] sm:$0xf]
        %v4810 = vld [vmem:[%s5 + $0x19c] sm:$0xf]
        %v4811 = vld [vmem:[%s5 + $0x1a0] sm:$0xf]
        %v4812 = vld [vmem:[%s5 + $0x1a4] sm:$0xf]
        %v4813 = vld [vmem:[%s5 + $0x1a8] sm:$0xf]
        %v4814 = vld [vmem:[%s5 + $0x1ac] sm:$0xf]
        %v4815 = vld [vmem:[%s5 + $0x1b0] sm:$0xf]
        %v4816 = vld [vmem:[%s5 + $0x1b4] sm:$0xf]
        %v4817 = vld [vmem:[%s5 + $0x1b8] sm:$0xf]
        %v4818 = vld [vmem:[%s5 + $0x1bc] sm:$0xf]
        %v4819 = vld [vmem:[%s6] sm:$0x1]
        %v4821 = vperm.slane %v4819, 0
        %v4935 = vunpack.c.l.b16 %v4707
        %v4936 = vunpack.c.l.b16 %v4708
        %v4937 = vunpack.c.l.b16 %v4709
        %v4938 = vunpack.c.l.b16 %v4710
        %v4939 = vunpack.c.l.b16 %v4711
        %v4940 = vunpack.c.l.b16 %v4712
        %v4941 = vunpack.c.l.b16 %v4713
        %v4942 = vunpack.c.l.b16 %v4714
        %v4943 = vunpack.c.l.b16 %v4715
        %v4944 = vunpack.c.l.b16 %v4716
        %v4945 = vunpack.c.l.b16 %v4717
        %v4946 = vunpack.c.l.b16 %v4718
        %v4947 = vunpack.c.l.b16 %v4719
        %v4948 = vunpack.c.l.b16 %v4720
        %v4949 = vunpack.c.l.b16 %v4721
        %v4950 = vunpack.c.l.b16 %v4722
        %v4951 = vunpack.c.l.b16 %v4723
        %v4952 = vunpack.c.l.b16 %v4724
        %v4953 = vunpack.c.l.b16 %v4725
        %v4954 = vunpack.c.l.b16 %v4726
        %v4955 = vunpack.c.l.b16 %v4727
        %v4956 = vunpack.c.l.b16 %v4728
        %v4957 = vunpack.c.l.b16 %v4729
        %v4958 = vunpack.c.l.b16 %v4730
        %v4959 = vunpack.c.l.b16 %v4731
        %v4960 = vunpack.c.l.b16 %v4732
        %v4961 = vunpack.c.l.b16 %v4733
        %v4962 = vunpack.c.l.b16 %v4734
        %v4963 = vunpack.c.l.b16 %v4735
        %v4964 = vunpack.c.l.b16 %v4736
        %v4965 = vunpack.c.l.b16 %v4737
        %v4966 = vunpack.c.l.b16 %v4738
        %v4967 = vunpack.c.l.b16 %v4739
        %v4968 = vunpack.c.l.b16 %v4740
        %v4969 = vunpack.c.l.b16 %v4741
        %v4970 = vunpack.c.l.b16 %v4742
        %v4971 = vunpack.c.l.b16 %v4743
        %v4972 = vunpack.c.l.b16 %v4744
        %v4973 = vunpack.c.l.b16 %v4745
        %v4974 = vunpack.c.l.b16 %v4746
        %v4975 = vunpack.c.l.b16 %v4747
        %v4976 = vunpack.c.l.b16 %v4748
        %v4977 = vunpack.c.l.b16 %v4749
        %v4978 = vunpack.c.l.b16 %v4750
        %v4979 = vunpack.c.l.b16 %v4751
        %v4980 = vunpack.c.l.b16 %v4752
        %v4981 = vunpack.c.l.b16 %v4753
        %v4982 = vunpack.c.l.b16 %v4754
        %v4983 = vunpack.c.l.b16 %v4755
        %v4984 = vunpack.c.l.b16 %v4756
        %v4985 = vunpack.c.l.b16 %v4757
        %v4986 = vunpack.c.l.b16 %v4758
        %v4987 = vunpack.c.l.b16 %v4759
        %v4988 = vunpack.c.l.b16 %v4760
        %v4989 = vunpack.c.l.b16 %v4761
        %v4990 = vunpack.c.l.b16 %v4762
        %v4991 = vunpack.c.l.b16 %v4763
        %v4992 = vunpack.c.l.b16 %v4764
        %v4993 = vunpack.c.l.b16 %v4765
        %v4994 = vunpack.c.l.b16 %v4766
        %v4995 = vunpack.c.l.b16 %v4767
        %v4996 = vunpack.c.l.b16 %v4768
        %v4997 = vunpack.c.l.b16 %v4769
        %v4998 = vunpack.c.l.b16 %v4770
        %v4999 = vunpack.c.l.b16 %v4771
        %v5000 = vunpack.c.l.b16 %v4772
        %v5001 = vunpack.c.l.b16 %v4773
        %v5002 = vunpack.c.l.b16 %v4774
        %v5003 = vunpack.c.l.b16 %v4775
        %v5004 = vunpack.c.l.b16 %v4776
        %v5005 = vunpack.c.l.b16 %v4777
        %v5006 = vunpack.c.l.b16 %v4778
        %v5007 = vunpack.c.l.b16 %v4779
        %v5008 = vunpack.c.l.b16 %v4780
        %v5009 = vunpack.c.l.b16 %v4781
        %v5010 = vunpack.c.l.b16 %v4782
        %v5011 = vunpack.c.l.b16 %v4783
        %v5012 = vunpack.c.l.b16 %v4784
        %v5013 = vunpack.c.l.b16 %v4785
        %v5014 = vunpack.c.l.b16 %v4786
        %v5015 = vunpack.c.l.b16 %v4787
        %v5016 = vunpack.c.l.b16 %v4788
        %v5017 = vunpack.c.l.b16 %v4789
        %v5018 = vunpack.c.l.b16 %v4790
        %v5019 = vunpack.c.l.b16 %v4791
        %v5020 = vunpack.c.l.b16 %v4792
        %v5021 = vunpack.c.l.b16 %v4793
        %v5022 = vunpack.c.l.b16 %v4794
        %v5023 = vunpack.c.l.b16 %v4795
        %v5024 = vunpack.c.l.b16 %v4796
        %v5025 = vunpack.c.l.b16 %v4797
        %v5026 = vunpack.c.l.b16 %v4798
        %v5027 = vunpack.c.l.b16 %v4799
        %v5028 = vunpack.c.l.b16 %v4800
        %v5029 = vunpack.c.l.b16 %v4801
        %v5030 = vunpack.c.l.b16 %v4802
        %v5031 = vunpack.c.l.b16 %v4803
        %v5032 = vunpack.c.l.b16 %v4804
        %v5033 = vunpack.c.l.b16 %v4805
        %v5034 = vunpack.c.l.b16 %v4806
        %v5035 = vunpack.c.l.b16 %v4807
        %v5036 = vunpack.c.l.b16 %v4808
        %v5037 = vunpack.c.l.b16 %v4809
        %v5038 = vunpack.c.l.b16 %v4810
        %v5039 = vunpack.c.l.b16 %v4811
        %v5040 = vunpack.c.l.b16 %v4812
        %v5041 = vunpack.c.l.b16 %v4813
        %v5042 = vunpack.c.l.b16 %v4814
        %v5043 = vunpack.c.l.b16 %v4815
        %v5044 = vunpack.c.l.b16 %v4816
        %v5045 = vunpack.c.l.b16 %v4817
        %v5046 = vunpack.c.l.b16 %v4818
        %v5047 = vpack.c.b16 %v4936, %v4935
        %v5048 = vpack.c.b16 %v4938, %v4937
        %v5049 = vpack.c.b16 %v4940, %v4939
        %v5050 = vpack.c.b16 %v4942, %v4941
        %v5051 = vpack.c.b16 %v4944, %v4943
        %v5052 = vpack.c.b16 %v4946, %v4945
        %v5053 = vpack.c.b16 %v4948, %v4947
        %v5054 = vpack.c.b16 %v4950, %v4949
        %v5055 = vpack.c.b16 %v4952, %v4951
        %v5056 = vpack.c.b16 %v4954, %v4953
        %v5057 = vpack.c.b16 %v4956, %v4955
        %v5058 = vpack.c.b16 %v4958, %v4957
        %v5059 = vpack.c.b16 %v4960, %v4959
        %v5060 = vpack.c.b16 %v4962, %v4961
        %v5061 = vpack.c.b16 %v4964, %v4963
        %v5062 = vpack.c.b16 %v4966, %v4965
        %v5063 = vpack.c.b16 %v4968, %v4967
        %v5064 = vpack.c.b16 %v4970, %v4969
        %v5065 = vpack.c.b16 %v4972, %v4971
        %v5066 = vpack.c.b16 %v4974, %v4973
        %v5067 = vpack.c.b16 %v4976, %v4975
        %v5068 = vpack.c.b16 %v4978, %v4977
        %v5069 = vpack.c.b16 %v4980, %v4979
        %v5070 = vpack.c.b16 %v4982, %v4981
        %v5071 = vpack.c.b16 %v4984, %v4983
        %v5072 = vpack.c.b16 %v4986, %v4985
        %v5073 = vpack.c.b16 %v4988, %v4987
        %v5074 = vpack.c.b16 %v4990, %v4989
        %v5075 = vpack.c.b16 %v4992, %v4991
        %v5076 = vpack.c.b16 %v4994, %v4993
        %v5077 = vpack.c.b16 %v4996, %v4995
        %v5078 = vpack.c.b16 %v4998, %v4997
        %v5079 = vpack.c.b16 %v5000, %v4999
        %v5080 = vpack.c.b16 %v5002, %v5001
        %v5081 = vpack.c.b16 %v5004, %v5003
        %v5082 = vpack.c.b16 %v5006, %v5005
        %v5083 = vpack.c.b16 %v5008, %v5007
        %v5084 = vpack.c.b16 %v5010, %v5009
        %v5085 = vpack.c.b16 %v5012, %v5011
        %v5086 = vpack.c.b16 %v5014, %v5013
        %v5087 = vpack.c.b16 %v5016, %v5015
        %v5088 = vpack.c.b16 %v5018, %v5017
        %v5089 = vpack.c.b16 %v5020, %v5019
        %v5090 = vpack.c.b16 %v5022, %v5021
        %v5091 = vpack.c.b16 %v5024, %v5023
        %v5092 = vpack.c.b16 %v5026, %v5025
        %v5093 = vpack.c.b16 %v5028, %v5027
        %v5094 = vpack.c.b16 %v5030, %v5029
        %v5095 = vpack.c.b16 %v5032, %v5031
        %v5096 = vpack.c.b16 %v5034, %v5033
        %v5097 = vpack.c.b16 %v5036, %v5035
        %v5098 = vpack.c.b16 %v5038, %v5037
        %v5099 = vpack.c.b16 %v5040, %v5039
        %v5100 = vpack.c.b16 %v5042, %v5041
        %v5101 = vpack.c.b16 %v5044, %v5043
        %v5102 = vpack.c.b16 %v5046, %v5045
        %5159 = vmatpush.bf16.msra.mxu0 %v5054
        %5160 = vmatpush.bf16.msra.mxu0 %v5053
        %5161 = vmatpush.bf16.msra.mxu0 %v5052
        %5162 = vmatpush.bf16.msra.mxu0 %v5051
        %5163 = vmatpush.bf16.msra.mxu0 %v5050
        %5164 = vmatpush.bf16.msra.mxu0 %v5049
        %5165 = vmatpush.bf16.msra.mxu0 %v5048
        %5166 = vmatpush.bf16.msra.mxu0 %v5047
        %5167 = vmatmul.bf16.gmra.mxu0 %v4700
        %v5168 = vpop.f32.mrf.mxu0
        %v5169 = vadd.f32 %v4821, %v5168
        %v5170 = vpop.f32.mrf.mxu0
        %5171 = vdwg.mxu0
        %5172 = vmatpush.bf16.msra.mxu0 %v5062
        %5173 = vmatpush.bf16.msra.mxu0 %v5061
        %5174 = vmatpush.bf16.msra.mxu0 %v5060
        %5175 = vmatpush.bf16.msra.mxu0 %v5059
        %5176 = vmatpush.bf16.msra.mxu0 %v5058
        %5177 = vmatpush.bf16.msra.mxu0 %v5057
        %5178 = vmatpush.bf16.msra.mxu0 %v5056
        %5179 = vmatpush.bf16.msra.mxu0 %v5055
        %5180 = vmatmul.bf16.gmra.mxu0 %v4701
        %v5181 = vpop.f32.mrf.mxu0
        %v5182 = vadd.f32 %v5169, %v5181
        %v5183 = vpop.f32.mrf.mxu0
        %5184 = vdwg.mxu0
        %5185 = vmatpush.bf16.msra.mxu0 %v5070
        %5186 = vmatpush.bf16.msra.mxu0 %v5069
        %5187 = vmatpush.bf16.msra.mxu0 %v5068
        %5188 = vmatpush.bf16.msra.mxu0 %v5067
        %5189 = vmatpush.bf16.msra.mxu0 %v5066
        %5190 = vmatpush.bf16.msra.mxu0 %v5065
        %5191 = vmatpush.bf16.msra.mxu0 %v5064
        %5192 = vmatpush.bf16.msra.mxu0 %v5063
        %5193 = vmatmul.bf16.gmra.mxu0 %v4702
        %v5194 = vpop.f32.mrf.mxu0
        %v5195 = vadd.f32 %v5182, %v5194
        %v5196 = vpop.f32.mrf.mxu0
        %5197 = vdwg.mxu0
        %5198 = vmatpush.bf16.msra.mxu0 %v5078
        %5199 = vmatpush.bf16.msra.mxu0 %v5077
        %5200 = vmatpush.bf16.msra.mxu0 %v5076
        %5201 = vmatpush.bf16.msra.mxu0 %v5075
        %5202 = vmatpush.bf16.msra.mxu0 %v5074
        %5203 = vmatpush.bf16.msra.mxu0 %v5073
        %5204 = vmatpush.bf16.msra.mxu0 %v5072
        %5205 = vmatpush.bf16.msra.mxu0 %v5071
        %5206 = vmatmul.bf16.gmra.mxu0 %v4703
        %v5207 = vpop.f32.mrf.mxu0
        %v5208 = vadd.f32 %v5195, %v5207
        %v5209 = vpop.f32.mrf.mxu0
        %5210 = vdwg.mxu0
        %5211 = vmatpush.bf16.msra.mxu0 %v5086
        %5212 = vmatpush.bf16.msra.mxu0 %v5085
        %5213 = vmatpush.bf16.msra.mxu0 %v5084
        %5214 = vmatpush.bf16.msra.mxu0 %v5083
        %5215 = vmatpush.bf16.msra.mxu0 %v5082
        %5216 = vmatpush.bf16.msra.mxu0 %v5081
        %5217 = vmatpush.bf16.msra.mxu0 %v5080
        %5218 = vmatpush.bf16.msra.mxu0 %v5079
        %5219 = vmatmul.bf16.gmra.mxu0 %v4704
        %v5220 = vpop.f32.mrf.mxu0
        %v5221 = vadd.f32 %v5208, %v5220
        %v5222 = vpop.f32.mrf.mxu0
        %5223 = vdwg.mxu0
        %5224 = vmatpush.bf16.msra.mxu0 %v5094
        %5225 = vmatpush.bf16.msra.mxu0 %v5093
        %5226 = vmatpush.bf16.msra.mxu0 %v5092
        %5227 = vmatpush.bf16.msra.mxu0 %v5091
        %5228 = vmatpush.bf16.msra.mxu0 %v5090
        %5229 = vmatpush.bf16.msra.mxu0 %v5089
        %5230 = vmatpush.bf16.msra.mxu0 %v5088
        %5231 = vmatpush.bf16.msra.mxu0 %v5087
        %5232 = vmatmul.bf16.gmra.mxu0 %v4705
        %v5233 = vpop.f32.mrf.mxu0
        %v5234 = vadd.f32 %v5221, %v5233
        %v5235 = vpop.f32.mrf.mxu0
        %5236 = vdwg.mxu0
        %5237 = vmatpush.bf16.msra.mxu0 %v5102
        %5238 = vmatpush.bf16.msra.mxu0 %v5101
        %5239 = vmatpush.bf16.msra.mxu0 %v5100
        %5240 = vmatpush.bf16.msra.mxu0 %v5099
        %5241 = vmatpush.bf16.msra.mxu0 %v5098
        %5242 = vmatpush.bf16.msra.mxu0 %v5097
        %5243 = vmatpush.bf16.msra.mxu0 %v5096
        %5244 = vmatpush.bf16.msra.mxu0 %v5095
        %5245 = vmatmul.bf16.gmra.mxu0 %v4706
        %v5246 = vpop.f32.mrf.mxu0
        %v5247 = vadd.f32 %v5234, %v5246
        %v5248 = vpop.f32.mrf.mxu0
        %5249 = vdwg.mxu0
        %5250 = vst [vmem:[%s429] sm:$0xff] %v5247
        %s5251 = sand.u32 %s182, 1
        %s5252 = scalar_lea.sflag [#allocation5], %s5251
        %s5253 = sand.u32 %s182, 1
        %s5254 = smul.addr %s5253, 8
        %s5255 = scalar_lea.vmem [#allocation6], %s5254
        // Predicated region
        $region94: #{forward.1} parent=84 // pred_check
          %p5256 = pneg %p192
        $region95: #{forward.1} parent=84 // pred_check_branch
          %5258 = sbr.rel (%p5256) target = $region97
        $region96: #{forward.1} parent=84 // pred_region
          %5260 = vsyncadd %s5252, 0
          %s5261 = smul.addr %s22, 8
          %s5262 = scalar_lea.hbm %s7, %s5261
          %s5264 = sshll.u32 %s5255, 4
          %s5265 = int_to_ptr.vmem [resolvable:$true] %s5264
          %s5266 = sshll.u32 %s5262, 4
          %s5267 = int_to_ptr.hbm [resolvable:$true] %s5266
          %5269 = dma.vmem_to_hbm [thread:$0]  %s5265, 128, %s5267, %s5252
        $region97: #{forward.1} parent=84 // pred_fallthru
          _
      $region85: #{forward.1} parent=5 // pred_fallthru
        _
      %p5270 = scmp.le.s32.totalorder 2, %s17
      // Predicated region
      $region98: #{forward.1} parent=5 // pred_check
        %p5271 = pneg %p5270
      $region99: #{forward.1} parent=5 // pred_check_branch
        %5273 = sbr.rel (%p5271) target = $region101
      $region100: #{forward.1} parent=5 // pred_region
        %s5274 = ssub.s32 %s17, 2
        // Predicated region
        $region102: #{forward.1} parent=100 // pred_check
          %p5275 = pneg %p198
        $region103: #{forward.1} parent=100 // pred_check_branch
          %5277 = sbr.rel (%p5275) target = $region105
        $region104: #{forward.1} parent=100 // pred_region
          %s5278 = sand.u32 %s183, 1
          %s5279 = scalar_lea.sflag [#allocation5], %s5278
          %s5280 = sand.u32 %s183, 1
          %s5281 = smul.addr %s5280, 8
          %s5282 = scalar_lea.vmem [#allocation6], %s5281
          %5284 = dma.done %s5279, 128
        $region105: #{forward.1} parent=100 // pred_fallthru
          _
      $region101: #{forward.1} parent=5 // pred_fallthru
        _
    $region6: #{forward.1} parent=1 // loop_footer
      %s21 = sadd.s32 1, %s17
    $region7: #{forward.1} parent=1 // loop_footer_branch
      %16 = sbr.rel target = $region3
    $region8: #{forward.1} parent=1 // loop_exit
      _
    %5285 = vsyncpa [#allocation4], 1
    %s5286 = scalar_lea.sflag [#allocation4], 1
    %5287 = vsyncpa %s5286, 1
    %5288 = vsyncpa [#allocation5], 1
    %s5289 = scalar_lea.sflag [#allocation5], 1
    %5290 = vsyncpa %s5289, 1

</llo_original>
